<compile_context>
chip_gen: v5e
topology: v5e:2x2
jax: 0.10.0
libtpu: 0.0.40
codegen_flags: <defaults>
</compile_context>

<pallas_src>
import math
import string

import jax
import jax.numpy as jnp
import numpy as np
from jax import lax
from jax.experimental import pallas as pl
from jax.experimental.pallas import tpu as pltpu

# ---- module hyper-parameters (from the PyTorch script) ----
ALL_LETTERS = string.ascii_letters + " .,;'"
N_LETTERS = len(ALL_LETTERS)          # 57
N_HIDDEN = 128
# TODO(synk): n_categories is 0 in the original script (all_categories is empty); use 18.
N_CATEGORIES = 18
NUM_LAYERS = 1

_NEG_BIG = -1e30                      # pad-bias so padded logits vanish in log-softmax


def _lstm_kernel(tlen_ref,            # scalar-prefetch: true sequence length (int32, SMEM)
                 x_ref, wih_ref, whh_ref, bias_ref, h0c0_ref, wlin_ref,
                 y_ref, hn_ref, cn_ref,
                 pre_sc, hall_sc):
    B, H = hn_ref.shape
    T_pad = x_ref.shape[0] // B
    n_steps = tlen_ref[0]

    b_gates = bias_ref[:, : 4 * H]            # (1, 4H)  (g-columns pre-scaled by 2)
    b_lin = bias_ref[:, 4 * H:]               # (1, OPAD) (-1e30 in padded columns)

    # (1) Batched input projection for all (timestep, batch) rows: one MXU matmul.
    pre_sc[...] = (jnp.dot(x_ref[...], wih_ref[...],
                           preferred_element_type=jnp.float32) + b_gates)

    # (2) Serial recurrence; (h, c) are loop-carried values (vregs), not scratch.
    def step(t, carry):
        h, c = carry
        row = t * B
        gates = (jnp.dot(h, whh_ref[...], preferred_element_type=jnp.float32)
                 + pre_sc[pl.ds(row, B), :])                  # (B, 4H)
        # One EUP pass over the whole gates row; tanh(g) = 2*sigmoid(2g) - 1
        # because the g-gate columns of W/b were pre-scaled by 2.
        s = jax.nn.sigmoid(gates)
        i_g = s[:, 0 * H:1 * H]
        f_g = s[:, 1 * H:2 * H]
        g_g = 2.0 * s[:, 2 * H:3 * H] - 1.0
        o_g = s[:, 3 * H:4 * H]
        c_new = f_g * c + i_g * g_g
        h_new = o_g * jnp.tanh(c_new)
        # Mask padded (bucketed) timesteps out of the carry (exact: mask is 0.0 or 1.0).
        active = (t < n_steps).astype(jnp.float32)
        h_new = active * h_new + (1.0 - active) * h
        c_new = active * c_new + (1.0 - active) * c
        hall_sc[pl.ds(row, B), :] = h_new                     # stash h_t for the output head
        return h_new, c_new

    h0 = h0c0_ref[:, :H]
    c0 = h0c0_ref[:, H:]
    unroll = True if T_pad <= 32 else 8
    h_fin, c_fin = lax.fori_loop(0, T_pad, step, (h0, c0), unroll=unroll)
    hn_ref[...] = h_fin
    cn_ref[...] = c_fin

    # (3) Batched output head: one (T_pad*B, H) x (H, OPAD) matmul + log-softmax.
    logits = (jnp.dot(hall_sc[...], wlin_ref[...],
                      preferred_element_type=jnp.float32) + b_lin)
    m = jnp.max(logits, axis=-1, keepdims=True)
    lse = m + jnp.log(jnp.sum(jnp.exp(logits - m), axis=-1, keepdims=True))
    y_ref[...] = logits - lse


def lstm_pallas(x_seq, hidden, c, params):
    """x_seq: (T, B, input_size); hidden, c: (num_layers=1, B, H).
    Returns (log_probs (T, B, O), hn (1, B, H), cn (1, B, H))."""
    T, B, I = x_seq.shape
    H = hidden.shape[-1]
    O = params["out_size"]
    OPAD = params["wlin_t_pad"].shape[-1]

    # Bucket T to a multiple of 8 so distinct name lengths share a compiled kernel.
    T_pad = max(8, ((T + 7) // 8) * 8)
    x_pad = jnp.zeros((T_pad, B, I), jnp.float32).at[:T].set(x_seq)
    x2d = x_pad.reshape(T_pad * B, I)                       # time-major rows: t*B + b
    h0c0 = jnp.concatenate([hidden[0], c[0]], axis=-1)      # (B, 2H) -- one DMA instead of two
    tlen = jnp.array([T], dtype=jnp.int32)

    grid_spec = pltpu.PrefetchScalarGridSpec(
        num_scalar_prefetch=1,
        grid=(1,),
        in_specs=[
            pl.BlockSpec((T_pad * B, I), lambda i, tl: (0, 0)),       # x (all steps, all seqs)
            pl.BlockSpec((I, 4 * H), lambda i, tl: (0, 0)),           # W_ih^T (g-cols x2)
            pl.BlockSpec((H, 4 * H), lambda i, tl: (0, 0)),           # W_hh^T (g-cols x2)
            pl.BlockSpec((1, 4 * H + OPAD), lambda i, tl: (0, 0)),    # [b_gates | b_lin_pad]
            pl.BlockSpec((B, 2 * H), lambda i, tl: (0, 0)),           # [h0 | c0]
            pl.BlockSpec((H, OPAD), lambda i, tl: (0, 0)),            # W_lin^T (lane-padded)
        ],
        out_specs=[
            pl.BlockSpec((T_pad * B, OPAD), lambda i, tl: (0, 0)),    # log-softmax (lane-dense)
            pl.BlockSpec((B, H), lambda i, tl: (0, 0)),               # hn
            pl.BlockSpec((B, H), lambda i, tl: (0, 0)),               # cn
        ],
        scratch_shapes=[
            pltpu.VMEM((T_pad * B, 4 * H), jnp.float32),              # precomputed input proj
            pltpu.VMEM((T_pad * B, H), jnp.float32),                  # all hidden states
        ],
    )

    out_shape = (
        jax.ShapeDtypeStruct((T_pad * B, OPAD), jnp.float32),
        jax.ShapeDtypeStruct((B, H), jnp.float32),
        jax.ShapeDtypeStruct((B, H), jnp.float32),
    )

    y_pad, hn, cn = pl.pallas_call(
        _lstm_kernel,
        grid_spec=grid_spec,
        out_shape=out_shape,
        compiler_params=pltpu.CompilerParams(
            dimension_semantics=("arbitrary",),
        ),
    )(tlen, x2d, params["wih_t_k"], params["whh_t_k"], params["bias_cat"],
      h0c0, params["wlin_t_pad"])

    log_probs = y_pad.reshape(T_pad, B, OPAD)[:T, :, :O]
    return log_probs, hn[None], cn[None]


def lstm_forward(x, hidden, c, params):
    """Mirrors LSTM.forward: x (1, n_letters) -> unsqueeze(0) -> (1, 1, n_letters)."""
    x_seq = x[None]  # (seq_len=1, batch=1, input_size)
    return lstm_pallas(x_seq, hidden, c, params)


def lstm_ref(x_seq, hidden, c, params):
    """Pure-JAX reference with the module's exact (unscaled) math."""
    T, B, _ = x_seq.shape
    H = hidden.shape[-1]
    h = hidden[0]                                    # (B, H)
    cc = c[0]
    outs = []
    for t in range(T):
        gates = x_seq[t] @ params["wih_t"] + h @ params["whh_t"] + params["b"]
        i_g = jax.nn.sigmoid(gates[:, 0 * H:1 * H])
        f_g = jax.nn.sigmoid(gates[:, 1 * H:2 * H])
        g_g = jnp.tanh(gates[:, 2 * H:3 * H])
        o_g = jax.nn.sigmoid(gates[:, 3 * H:4 * H])
        cc = f_g * cc + i_g * g_g
        h = o_g * jnp.tanh(cc)
        logits = h @ params["wlin_t"] + params["blin"]
        outs.append(jax.nn.log_softmax(logits, axis=-1))
    return jnp.stack(outs), h[None], cc[None]


def init_params(key, input_size, hidden_size, output_size):
    """Deterministic init matching PyTorch's default U(-1/sqrt(H), 1/sqrt(H))."""
    H = hidden_size
    k = 1.0 / math.sqrt(H)
    ks = jax.random.split(key, 6)
    u = lambda kk, shape: jax.random.uniform(kk, shape, jnp.float32, -k, k)
    w_ih = u(ks[0], (4 * H, input_size))
    w_hh = u(ks[1], (4 * H, H))
    b_ih = u(ks[2], (4 * H,))
    b_hh = u(ks[3], (4 * H,))
    w_lin = u(ks[4], (output_size, H))
    b_lin = u(ks[5], (output_size,))

    wih_t = w_ih.T                                             # (I, 4H)
    whh_t = w_hh.T                                             # (H, 4H)
    b = (b_ih + b_hh)[None, :]                                 # (1, 4H)

    # Pre-scale the g-gate (cell candidate) columns by 2 so the kernel can use one
    # sigmoid pass: tanh(g) = 2*sigmoid(2g) - 1. Scaling by 2 is exact in fp32.
    gscale = jnp.ones((1, 4 * H), jnp.float32).at[:, 2 * H:3 * H].set(2.0)
    wih_t_k = wih_t * gscale
    whh_t_k = whh_t * gscale
    b_k = b * gscale

    # Lane-dense padding for the output head (-1e30 pad-bias kills padded categories
    # in the log-softmax normalization); linear bias concatenated with the gate bias.
    opad = max(128, ((output_size + 127) // 128) * 128)
    wlin_t = w_lin.T                                           # (H, O)
    blin = b_lin[None, :]                                      # (1, O)
    wlin_t_pad = jnp.zeros((H, opad), jnp.float32).at[:, :output_size].set(wlin_t)
    blin_pad = jnp.full((1, opad), _NEG_BIG, jnp.float32).at[:, :output_size].set(blin)
    bias_cat = jnp.concatenate([b_k, blin_pad], axis=-1)       # (1, 4H + OPAD)

    return {
        # kernel-prepped operands
        "wih_t_k": wih_t_k, "whh_t_k": whh_t_k,
        "bias_cat": bias_cat, "wlin_t_pad": wlin_t_pad,
        # reference (module-exact) operands
        "wih_t": wih_t, "whh_t": whh_t, "b": b,
        "wlin_t": wlin_t, "blin": blin,
        "out_size": output_size,
    }


def line_to_tensor(line):
    t = np.zeros((len(line), 1, N_LETTERS), dtype=np.float32)
    for li, letter in enumerate(line):
        t[li, 0, ALL_LETTERS.find(letter)] = 1.0
    return jnp.asarray(t)


if __name__ == "__main__":
    key = jax.random.PRNGKey(0)
    params = init_params(key, N_LETTERS, N_HIDDEN, N_CATEGORIES)

    hidden = jnp.zeros((NUM_LAYERS, 1, N_HIDDEN), jnp.float32)
    c = jnp.zeros((NUM_LAYERS, 1, N_HIDDEN), jnp.float32)

    # 1) module-style single-step call: x = lineToTensor('B').squeeze(0) -> (1, n_letters)
    x = line_to_tensor('B')[0]
    out, hn, cn = lstm_forward(x, hidden, c, params)
    jax.block_until_ready((out, hn, cn))

    out_r, hn_r, cn_r = lstm_ref(x[None], hidden, c, params)
    np.testing.assert_allclose(np.asarray(out), np.asarray(out_r), atol=1e-4, rtol=1e-4)
    np.testing.assert_allclose(np.asarray(hn), np.asarray(hn_r), atol=1e-4, rtol=1e-4)
    np.testing.assert_allclose(np.asarray(cn), np.asarray(cn_r), atol=1e-4, rtol=1e-4)

    # 2) whole-name sequence ('Bai', T=3, batch=1) in ONE pallas_call (bucketed to T_pad=8)
    x_seq = line_to_tensor('Bai')
    out2, hn2, cn2 = lstm_pallas(x_seq, hidden, c, params)
    jax.block_until_ready((out2, hn2, cn2))

    out2_r, hn2_r, cn2_r = lstm_ref(x_seq, hidden, c, params)
    np.testing.assert_allclose(np.asarray(out2), np.asarray(out2_r), atol=1e-4, rtol=1e-4)
    np.testing.assert_allclose(np.asarray(hn2), np.asarray(hn2_r), atol=1e-4, rtol=1e-4)
    np.testing.assert_allclose(np.asarray(cn2), np.asarray(cn2_r), atol=1e-4, rtol=1e-4)

    # 3) batched path (B=8 independent sequences, T=6) -- fills all 8 sublanes per vreg
    B, T = 8, 6
    idx = jax.random.randint(jax.random.PRNGKey(1), (T, B), 0, N_LETTERS)
    x_b = jax.nn.one_hot(idx, N_LETTERS, dtype=jnp.float32)          # (T, B, I)
    h_b = jnp.zeros((NUM_LAYERS, B, N_HIDDEN), jnp.float32)
    c_b = jnp.zeros((NUM_LAYERS, B, N_HIDDEN), jnp.float32)
    out3, hn3, cn3 = lstm_pallas(x_b, h_b, c_b, params)
    jax.block_until_ready((out3, hn3, cn3))

    out3_r, hn3_r, cn3_r = lstm_ref(x_b, h_b, c_b, params)
    np.testing.assert_allclose(np.asarray(out3), np.asarray(out3_r), atol=1e-4, rtol=1e-4)
    np.testing.assert_allclose(np.asarray(hn3), np.asarray(hn3_r), atol=1e-4, rtol=1e-4)
    np.testing.assert_allclose(np.asarray(cn3), np.asarray(cn3_r), atol=1e-4, rtol=1e-4)

    print("KERNEL_OK")
</pallas_src>

<mosaic_0001>
module attributes {stable_mosaic.version = 11 : i64} {
  func.func @_lstm_kernel(%arg0: i32, %arg1: memref<1xi32, #tpu.memory_space<smem>>, %arg2: memref<8x57xf32, #tpu.memory_space<vmem>>, %arg3: memref<57x512xf32, #tpu.memory_space<vmem>>, %arg4: memref<128x512xf32, #tpu.memory_space<vmem>>, %arg5: memref<1x640xf32, #tpu.memory_space<vmem>>, %arg6: memref<1x256xf32, #tpu.memory_space<vmem>>, %arg7: memref<128x128xf32, #tpu.memory_space<vmem>>, %arg8: memref<8x128xf32, #tpu.memory_space<vmem>>, %arg9: memref<1x128xf32, #tpu.memory_space<vmem>>, %arg10: memref<1x128xf32, #tpu.memory_space<vmem>>, %arg11: memref<8x512xf32, #tpu.memory_space<vmem>>, %arg12: memref<8x128xf32, #tpu.memory_space<vmem>>) attributes {dimension_semantics = [#tpu.dimension_semantics<arbitrary>], iteration_bounds = array<i64: 1>, scalar_prefetch = 1 : i64, scratch_operands = 2 : i64, tpu.core_type = #tpu.core_type<tc>, window_params = [{pipeline_mode = #tpu.pipeline_mode<synchronous>, transform_indices = @transform_0, window_bounds = array<i64: 8, 57>}, {pipeline_mode = #tpu.pipeline_mode<synchronous>, transform_indices = @transform_1, window_bounds = array<i64: 57, 512>}, {pipeline_mode = #tpu.pipeline_mode<synchronous>, transform_indices = @transform_2, window_bounds = array<i64: 128, 512>}, {pipeline_mode = #tpu.pipeline_mode<synchronous>, transform_indices = @transform_3, window_bounds = array<i64: 1, 640>}, {pipeline_mode = #tpu.pipeline_mode<synchronous>, transform_indices = @transform_4, window_bounds = array<i64: 1, 256>}, {pipeline_mode = #tpu.pipeline_mode<synchronous>, transform_indices = @transform_5, window_bounds = array<i64: 128, 128>}, {pipeline_mode = #tpu.pipeline_mode<synchronous>, transform_indices = @transform_6, window_bounds = array<i64: 8, 128>}, {pipeline_mode = #tpu.pipeline_mode<synchronous>, transform_indices = @transform_7, window_bounds = array<i64: 1, 128>}, {pipeline_mode = #tpu.pipeline_mode<synchronous>, transform_indices = @transform_8, window_bounds = array<i64: 1, 128>}]} {
    %c0 = arith.constant 0 : index
    %0 = memref.load %arg1[%c0] : memref<1xi32, #tpu.memory_space<smem>>
    %c0_0 = arith.constant 0 : index
    %c0_1 = arith.constant 0 : index
    %1 = vector.load %arg5[%c0_0, %c0_1] : memref<1x640xf32, #tpu.memory_space<vmem>>, vector<1x512xf32>
    %c0_2 = arith.constant 0 : index
    %c512 = arith.constant 512 : index
    %2 = vector.load %arg5[%c0_2, %c512] : memref<1x640xf32, #tpu.memory_space<vmem>>, vector<1x128xf32>
    %c0_3 = arith.constant 0 : index
    %c0_4 = arith.constant 0 : index
    %3 = vector.load %arg2[%c0_3, %c0_4] : memref<8x57xf32, #tpu.memory_space<vmem>>, vector<8x57xf32>
    %c0_5 = arith.constant 0 : index
    %c0_6 = arith.constant 0 : index
    %4 = vector.load %arg3[%c0_5, %c0_6] : memref<57x512xf32, #tpu.memory_space<vmem>>, vector<57x512xf32>
    %cst = arith.constant dense<0.000000e+00> : vector<8x512xf32>
    %5 = tpu.matmul %3, %4, %cst {dimension_numbers = #tpu.dot_dimension_numbers<[1], [0], [0], [1], [0, 0, 1, 1], [], []>} : vector<8x57xf32>, vector<57x512xf32>, vector<8x512xf32> -> vector<8x512xf32>
    %6 = vector.broadcast %1 : vector<1x512xf32> to vector<8x512xf32>
    %7 = arith.addf %5, %6 : vector<8x512xf32>
    %c0_7 = arith.constant 0 : index
    %c0_8 = arith.constant 0 : index
    %8 = vector.load %arg11[%c0_7, %c0_8] : memref<8x512xf32, #tpu.memory_space<vmem>>, vector<8x512xf32>
    tpu.vector_store %arg11[%c0_7, %c0_8], %7 {strides = array<i32>} : memref<8x512xf32, #tpu.memory_space<vmem>>, vector<8x512xf32>,
    %c0_9 = arith.constant 0 : index
    %c0_10 = arith.constant 0 : index
    %9 = vector.load %arg6[%c0_9, %c0_10] : memref<1x256xf32, #tpu.memory_space<vmem>>, vector<1x128xf32>
    %c0_11 = arith.constant 0 : index
    %c128 = arith.constant 128 : index
    %10 = vector.load %arg6[%c0_11, %c128] : memref<1x256xf32, #tpu.memory_space<vmem>>, vector<1x128xf32>
    %c0_i32 = arith.constant 0 : i32
    %c1_i32 = arith.constant 1 : i32
    %11 = arith.muli %c0_i32, %c1_i32 : i32
    %c0_12 = arith.constant 0 : index
    %c0_13 = arith.constant 0 : index
    %12 = vector.load %arg4[%c0_12, %c0_13] : memref<128x512xf32, #tpu.memory_space<vmem>>, vector<128x512xf32>
    %cst_14 = arith.constant dense<0.000000e+00> : vector<1x512xf32>
    %13 = tpu.matmul %9, %12, %cst_14 {dimension_numbers = #tpu.dot_dimension_numbers<[1], [0], [0], [1], [0, 0, 1, 1], [], []>} : vector<1x128xf32>, vector<128x512xf32>, vector<1x512xf32> -> vector<1x512xf32>
    %14 = arith.index_cast %11 : i32 to index
    %c0_15 = arith.constant 0 : index
    %15 = vector.load %arg11[%14, %c0_15] : memref<8x512xf32, #tpu.memory_space<vmem>>, vector<1x512xf32>
    %16 = arith.addf %13, %15 : vector<1x512xf32>
    %17 = arith.negf %16 : vector<1x512xf32>
    %18 = math.exp %17 : vector<1x512xf32>
    %cst_16 = arith.constant 1.000000e+00 : f32
    %19 = vector.broadcast %cst_16 : f32 to vector<1x512xf32>
    %20 = arith.addf %19, %18 : vector<1x512xf32>
    %21 = arith.divf %19, %20 : vector<1x512xf32>
    %22 = vector.extract_strided_slice %21 {offsets = [0, 0], sizes = [1, 128], strides = [1, 1]} : vector<1x512xf32> to vector<1x128xf32>
    %23 = vector.extract_strided_slice %21 {offsets = [0, 128], sizes = [1, 128], strides = [1, 1]} : vector<1x512xf32> to vector<1x128xf32>
    %24 = vector.extract_strided_slice %21 {offsets = [0, 256], sizes = [1, 128], strides = [1, 1]} : vector<1x512xf32> to vector<1x128xf32>
    %cst_17 = arith.constant 2.000000e+00 : f32
    %25 = vector.broadcast %cst_17 : f32 to vector<1x128xf32>
    %26 = arith.mulf %25, %24 : vector<1x128xf32>
    %cst_18 = arith.constant 1.000000e+00 : f32
    %27 = vector.broadcast %cst_18 : f32 to vector<1x128xf32>
    %28 = arith.subf %26, %27 : vector<1x128xf32>
    %29 = vector.extract_strided_slice %21 {offsets = [0, 384], sizes = [1, 128], strides = [1, 1]} : vector<1x512xf32> to vector<1x128xf32>
    %30 = arith.mulf %23, %10 : vector<1x128xf32>
    %31 = arith.mulf %22, %28 : vector<1x128xf32>
    %32 = arith.addf %30, %31 : vector<1x128xf32>
    %33 = math.tanh %32 : vector<1x128xf32>
    %34 = arith.mulf %29, %33 : vector<1x128xf32>
    %35 = arith.cmpi slt, %c0_i32, %0 : i32
    %36 = arith.extui %35 : i1 to i32
    %37 = arith.sitofp %36 : i32 to f32
    %38 = vector.broadcast %37 : f32 to vector<1x128xf32>
    %39 = arith.mulf %38, %34 : vector<1x128xf32>
    %cst_19 = arith.constant 1.000000e+00 : f32
    %40 = arith.subf %cst_19, %37 : f32
    %41 = vector.broadcast %40 : f32 to vector<1x128xf32>
    %42 = arith.mulf %41, %9 : vector<1x128xf32>
    %43 = arith.addf %39, %42 : vector<1x128xf32>
    %44 = vector.broadcast %37 : f32 to vector<1x128xf32>
    %45 = arith.mulf %44, %32 : vector<1x128xf32>
    %cst_20 = arith.constant 1.000000e+00 : f32
    %46 = arith.subf %cst_20, %37 : f32
    %47 = vector.broadcast %46 : f32 to vector<1x128xf32>
    %48 = arith.mulf %47, %10 : vector<1x128xf32>
    %49 = arith.addf %45, %48 : vector<1x128xf32>
    %50 = arith.index_cast %11 : i32 to index
    %c0_21 = arith.constant 0 : index
    %51 = vector.load %arg12[%50, %c0_21] : memref<8x128xf32, #tpu.memory_space<vmem>>, vector<1x128xf32>
    tpu.vector_store %arg12[%50, %c0_21], %43 {strides = array<i32>} : memref<8x128xf32, #tpu.memory_space<vmem>>, vector<1x128xf32>,
    %c1_i32_22 = arith.constant 1 : i32
    %c1_i32_23 = arith.constant 1 : i32
    %52 = arith.muli %c1_i32_22, %c1_i32_23 : i32
    %c0_24 = arith.constant 0 : index
    %c0_25 = arith.constant 0 : index
    %53 = vector.load %arg4[%c0_24, %c0_25] : memref<128x512xf32, #tpu.memory_space<vmem>>, vector<128x512xf32>
    %cst_26 = arith.constant dense<0.000000e+00> : vector<1x512xf32>
    %54 = tpu.matmul %43, %53, %cst_26 {dimension_numbers = #tpu.dot_dimension_numbers<[1], [0], [0], [1], [0, 0, 1, 1], [], []>} : vector<1x128xf32>, vector<128x512xf32>, vector<1x512xf32> -> vector<1x512xf32>
    %55 = arith.index_cast %52 : i32 to index
    %c0_27 = arith.constant 0 : index
    %56 = vector.load %arg11[%55, %c0_27] : memref<8x512xf32, #tpu.memory_space<vmem>>, vector<1x512xf32>
    %57 = arith.addf %54, %56 : vector<1x512xf32>
    %58 = arith.negf %57 : vector<1x512xf32>
    %59 = math.exp %58 : vector<1x512xf32>
    %cst_28 = arith.constant 1.000000e+00 : f32
    %60 = vector.broadcast %cst_28 : f32 to vector<1x512xf32>
    %61 = arith.addf %60, %59 : vector<1x512xf32>
    %62 = arith.divf %60, %61 : vector<1x512xf32>
    %63 = vector.extract_strided_slice %62 {offsets = [0, 0], sizes = [1, 128], strides = [1, 1]} : vector<1x512xf32> to vector<1x128xf32>
    %64 = vector.extract_strided_slice %62 {offsets = [0, 128], sizes = [1, 128], strides = [1, 1]} : vector<1x512xf32> to vector<1x128xf32>
    %65 = vector.extract_strided_slice %62 {offsets = [0, 256], sizes = [1, 128], strides = [1, 1]} : vector<1x512xf32> to vector<1x128xf32>
    %cst_29 = arith.constant 2.000000e+00 : f32
    %66 = vector.broadcast %cst_29 : f32 to vector<1x128xf32>
    %67 = arith.mulf %66, %65 : vector<1x128xf32>
    %cst_30 = arith.constant 1.000000e+00 : f32
    %68 = vector.broadcast %cst_30 : f32 to vector<1x128xf32>
    %69 = arith.subf %67, %68 : vector<1x128xf32>
    %70 = vector.extract_strided_slice %62 {offsets = [0, 384], sizes = [1, 128], strides = [1, 1]} : vector<1x512xf32> to vector<1x128xf32>
    %71 = arith.mulf %64, %49 : vector<1x128xf32>
    %72 = arith.mulf %63, %69 : vector<1x128xf32>
    %73 = arith.addf %71, %72 : vector<1x128xf32>
    %74 = math.tanh %73 : vector<1x128xf32>
    %75 = arith.mulf %70, %74 : vector<1x128xf32>
    %76 = arith.cmpi slt, %c1_i32_22, %0 : i32
    %77 = arith.extui %76 : i1 to i32
    %78 = arith.sitofp %77 : i32 to f32
    %79 = vector.broadcast %78 : f32 to vector<1x128xf32>
    %80 = arith.mulf %79, %75 : vector<1x128xf32>
    %cst_31 = arith.constant 1.000000e+00 : f32
    %81 = arith.subf %cst_31, %78 : f32
    %82 = vector.broadcast %81 : f32 to vector<1x128xf32>
    %83 = arith.mulf %82, %43 : vector<1x128xf32>
    %84 = arith.addf %80, %83 : vector<1x128xf32>
    %85 = vector.broadcast %78 : f32 to vector<1x128xf32>
    %86 = arith.mulf %85, %73 : vector<1x128xf32>
    %cst_32 = arith.constant 1.000000e+00 : f32
    %87 = arith.subf %cst_32, %78 : f32
    %88 = vector.broadcast %87 : f32 to vector<1x128xf32>
    %89 = arith.mulf %88, %49 : vector<1x128xf32>
    %90 = arith.addf %86, %89 : vector<1x128xf32>
    %91 = arith.index_cast %52 : i32 to index
    %c0_33 = arith.constant 0 : index
    %92 = vector.load %arg12[%91, %c0_33] : memref<8x128xf32, #tpu.memory_space<vmem>>, vector<1x128xf32>
    tpu.vector_store %arg12[%91, %c0_33], %84 {strides = array<i32>} : memref<8x128xf32, #tpu.memory_space<vmem>>, vector<1x128xf32>,
    %c2_i32 = arith.constant 2 : i32
    %c1_i32_34 = arith.constant 1 : i32
    %93 = arith.muli %c2_i32, %c1_i32_34 : i32
    %c0_35 = arith.constant 0 : index
    %c0_36 = arith.constant 0 : index
    %94 = vector.load %arg4[%c0_35, %c0_36] : memref<128x512xf32, #tpu.memory_space<vmem>>, vector<128x512xf32>
    %cst_37 = arith.constant dense<0.000000e+00> : vector<1x512xf32>
    %95 = tpu.matmul %84, %94, %cst_37 {dimension_numbers = #tpu.dot_dimension_numbers<[1], [0], [0], [1], [0, 0, 1, 1], [], []>} : vector<1x128xf32>, vector<128x512xf32>, vector<1x512xf32> -> vector<1x512xf32>
    %96 = arith.index_cast %93 : i32 to index
    %c0_38 = arith.constant 0 : index
    %97 = vector.load %arg11[%96, %c0_38] : memref<8x512xf32, #tpu.memory_space<vmem>>, vector<1x512xf32>
    %98 = arith.addf %95, %97 : vector<1x512xf32>
    %99 = arith.negf %98 : vector<1x512xf32>
    %100 = math.exp %99 : vector<1x512xf32>
    %cst_39 = arith.constant 1.000000e+00 : f32
    %101 = vector.broadcast %cst_39 : f32 to vector<1x512xf32>
    %102 = arith.addf %101, %100 : vector<1x512xf32>
    %103 = arith.divf %101, %102 : vector<1x512xf32>
    %104 = vector.extract_strided_slice %103 {offsets = [0, 0], sizes = [1, 128], strides = [1, 1]} : vector<1x512xf32> to vector<1x128xf32>
    %105 = vector.extract_strided_slice %103 {offsets = [0, 128], sizes = [1, 128], strides = [1, 1]} : vector<1x512xf32> to vector<1x128xf32>
    %106 = vector.extract_strided_slice %103 {offsets = [0, 256], sizes = [1, 128], strides = [1, 1]} : vector<1x512xf32> to vector<1x128xf32>
    %cst_40 = arith.constant 2.000000e+00 : f32
    %107 = vector.broadcast %cst_40 : f32 to vector<1x128xf32>
    %108 = arith.mulf %107, %106 : vector<1x128xf32>
    %cst_41 = arith.constant 1.000000e+00 : f32
    %109 = vector.broadcast %cst_41 : f32 to vector<1x128xf32>
    %110 = arith.subf %108, %109 : vector<1x128xf32>
    %111 = vector.extract_strided_slice %103 {offsets = [0, 384], sizes = [1, 128], strides = [1, 1]} : vector<1x512xf32> to vector<1x128xf32>
    %112 = arith.mulf %105, %90 : vector<1x128xf32>
    %113 = arith.mulf %104, %110 : vector<1x128xf32>
    %114 = arith.addf %112, %113 : vector<1x128xf32>
    %115 = math.tanh %114 : vector<1x128xf32>
    %116 = arith.mulf %111, %115 : vector<1x128xf32>
    %117 = arith.cmpi slt, %c2_i32, %0 : i32
    %118 = arith.extui %117 : i1 to i32
    %119 = arith.sitofp %118 : i32 to f32
    %120 = vector.broadcast %119 : f32 to vector<1x128xf32>
    %121 = arith.mulf %120, %116 : vector<1x128xf32>
    %cst_42 = arith.constant 1.000000e+00 : f32
    %122 = arith.subf %cst_42, %119 : f32
    %123 = vector.broadcast %122 : f32 to vector<1x128xf32>
    %124 = arith.mulf %123, %84 : vector<1x128xf32>
    %125 = arith.addf %121, %124 : vector<1x128xf32>
    %126 = vector.broadcast %119 : f32 to vector<1x128xf32>
    %127 = arith.mulf %126, %114 : vector<1x128xf32>
    %cst_43 = arith.constant 1.000000e+00 : f32
    %128 = arith.subf %cst_43, %119 : f32
    %129 = vector.broadcast %128 : f32 to vector<1x128xf32>
    %130 = arith.mulf %129, %90 : vector<1x128xf32>
    %131 = arith.addf %127, %130 : vector<1x128xf32>
    %132 = arith.index_cast %93 : i32 to index
    %c0_44 = arith.constant 0 : index
    %133 = vector.load %arg12[%132, %c0_44] : memref<8x128xf32, #tpu.memory_space<vmem>>, vector<1x128xf32>
    tpu.vector_store %arg12[%132, %c0_44], %125 {strides = array<i32>} : memref<8x128xf32, #tpu.memory_space<vmem>>, vector<1x128xf32>,
    %c3_i32 = arith.constant 3 : i32
    %c1_i32_45 = arith.constant 1 : i32
    %134 = arith.muli %c3_i32, %c1_i32_45 : i32
    %c0_46 = arith.constant 0 : index
    %c0_47 = arith.constant 0 : index
    %135 = vector.load %arg4[%c0_46, %c0_47] : memref<128x512xf32, #tpu.memory_space<vmem>>, vector<128x512xf32>
    %cst_48 = arith.constant dense<0.000000e+00> : vector<1x512xf32>
    %136 = tpu.matmul %125, %135, %cst_48 {dimension_numbers = #tpu.dot_dimension_numbers<[1], [0], [0], [1], [0, 0, 1, 1], [], []>} : vector<1x128xf32>, vector<128x512xf32>, vector<1x512xf32> -> vector<1x512xf32>
    %137 = arith.index_cast %134 : i32 to index
    %c0_49 = arith.constant 0 : index
    %138 = vector.load %arg11[%137, %c0_49] : memref<8x512xf32, #tpu.memory_space<vmem>>, vector<1x512xf32>
    %139 = arith.addf %136, %138 : vector<1x512xf32>
    %140 = arith.negf %139 : vector<1x512xf32>
    %141 = math.exp %140 : vector<1x512xf32>
    %cst_50 = arith.constant 1.000000e+00 : f32
    %142 = vector.broadcast %cst_50 : f32 to vector<1x512xf32>
    %143 = arith.addf %142, %141 : vector<1x512xf32>
    %144 = arith.divf %142, %143 : vector<1x512xf32>
    %145 = vector.extract_strided_slice %144 {offsets = [0, 0], sizes = [1, 128], strides = [1, 1]} : vector<1x512xf32> to vector<1x128xf32>
    %146 = vector.extract_strided_slice %144 {offsets = [0, 128], sizes = [1, 128], strides = [1, 1]} : vector<1x512xf32> to vector<1x128xf32>
    %147 = vector.extract_strided_slice %144 {offsets = [0, 256], sizes = [1, 128], strides = [1, 1]} : vector<1x512xf32> to vector<1x128xf32>
    %cst_51 = arith.constant 2.000000e+00 : f32
    %148 = vector.broadcast %cst_51 : f32 to vector<1x128xf32>
    %149 = arith.mulf %148, %147 : vector<1x128xf32>
    %cst_52 = arith.constant 1.000000e+00 : f32
    %150 = vector.broadcast %cst_52 : f32 to vector<1x128xf32>
    %151 = arith.subf %149, %150 : vector<1x128xf32>
    %152 = vector.extract_strided_slice %144 {offsets = [0, 384], sizes = [1, 128], strides = [1, 1]} : vector<1x512xf32> to vector<1x128xf32>
    %153 = arith.mulf %146, %131 : vector<1x128xf32>
    %154 = arith.mulf %145, %151 : vector<1x128xf32>
    %155 = arith.addf %153, %154 : vector<1x128xf32>
    %156 = math.tanh %155 : vector<1x128xf32>
    %157 = arith.mulf %152, %156 : vector<1x128xf32>
    %158 = arith.cmpi slt, %c3_i32, %0 : i32
    %159 = arith.extui %158 : i1 to i32
    %160 = arith.sitofp %159 : i32 to f32
    %161 = vector.broadcast %160 : f32 to vector<1x128xf32>
    %162 = arith.mulf %161, %157 : vector<1x128xf32>
    %cst_53 = arith.constant 1.000000e+00 : f32
    %163 = arith.subf %cst_53, %160 : f32
    %164 = vector.broadcast %163 : f32 to vector<1x128xf32>
    %165 = arith.mulf %164, %125 : vector<1x128xf32>
    %166 = arith.addf %162, %165 : vector<1x128xf32>
    %167 = vector.broadcast %160 : f32 to vector<1x128xf32>
    %168 = arith.mulf %167, %155 : vector<1x128xf32>
    %cst_54 = arith.constant 1.000000e+00 : f32
    %169 = arith.subf %cst_54, %160 : f32
    %170 = vector.broadcast %169 : f32 to vector<1x128xf32>
    %171 = arith.mulf %170, %131 : vector<1x128xf32>
    %172 = arith.addf %168, %171 : vector<1x128xf32>
    %173 = arith.index_cast %134 : i32 to index
    %c0_55 = arith.constant 0 : index
    %174 = vector.load %arg12[%173, %c0_55] : memref<8x128xf32, #tpu.memory_space<vmem>>, vector<1x128xf32>
    tpu.vector_store %arg12[%173, %c0_55], %166 {strides = array<i32>} : memref<8x128xf32, #tpu.memory_space<vmem>>, vector<1x128xf32>,
    %c4_i32 = arith.constant 4 : i32
    %c1_i32_56 = arith.constant 1 : i32
    %175 = arith.muli %c4_i32, %c1_i32_56 : i32
    %c0_57 = arith.constant 0 : index
    %c0_58 = arith.constant 0 : index
    %176 = vector.load %arg4[%c0_57, %c0_58] : memref<128x512xf32, #tpu.memory_space<vmem>>, vector<128x512xf32>
    %cst_59 = arith.constant dense<0.000000e+00> : vector<1x512xf32>
    %177 = tpu.matmul %166, %176, %cst_59 {dimension_numbers = #tpu.dot_dimension_numbers<[1], [0], [0], [1], [0, 0, 1, 1], [], []>} : vector<1x128xf32>, vector<128x512xf32>, vector<1x512xf32> -> vector<1x512xf32>
    %178 = arith.index_cast %175 : i32 to index
    %c0_60 = arith.constant 0 : index
    %179 = vector.load %arg11[%178, %c0_60] : memref<8x512xf32, #tpu.memory_space<vmem>>, vector<1x512xf32>
    %180 = arith.addf %177, %179 : vector<1x512xf32>
    %181 = arith.negf %180 : vector<1x512xf32>
    %182 = math.exp %181 : vector<1x512xf32>
    %cst_61 = arith.constant 1.000000e+00 : f32
    %183 = vector.broadcast %cst_61 : f32 to vector<1x512xf32>
    %184 = arith.addf %183, %182 : vector<1x512xf32>
    %185 = arith.divf %183, %184 : vector<1x512xf32>
    %186 = vector.extract_strided_slice %185 {offsets = [0, 0], sizes = [1, 128], strides = [1, 1]} : vector<1x512xf32> to vector<1x128xf32>
    %187 = vector.extract_strided_slice %185 {offsets = [0, 128], sizes = [1, 128], strides = [1, 1]} : vector<1x512xf32> to vector<1x128xf32>
    %188 = vector.extract_strided_slice %185 {offsets = [0, 256], sizes = [1, 128], strides = [1, 1]} : vector<1x512xf32> to vector<1x128xf32>
    %cst_62 = arith.constant 2.000000e+00 : f32
    %189 = vector.broadcast %cst_62 : f32 to vector<1x128xf32>
    %190 = arith.mulf %189, %188 : vector<1x128xf32>
    %cst_63 = arith.constant 1.000000e+00 : f32
    %191 = vector.broadcast %cst_63 : f32 to vector<1x128xf32>
    %192 = arith.subf %190, %191 : vector<1x128xf32>
    %193 = vector.extract_strided_slice %185 {offsets = [0, 384], sizes = [1, 128], strides = [1, 1]} : vector<1x512xf32> to vector<1x128xf32>
    %194 = arith.mulf %187, %172 : vector<1x128xf32>
    %195 = arith.mulf %186, %192 : vector<1x128xf32>
    %196 = arith.addf %194, %195 : vector<1x128xf32>
    %197 = math.tanh %196 : vector<1x128xf32>
    %198 = arith.mulf %193, %197 : vector<1x128xf32>
    %199 = arith.cmpi slt, %c4_i32, %0 : i32
    %200 = arith.extui %199 : i1 to i32
    %201 = arith.sitofp %200 : i32 to f32
    %202 = vector.broadcast %201 : f32 to vector<1x128xf32>
    %203 = arith.mulf %202, %198 : vector<1x128xf32>
    %cst_64 = arith.constant 1.000000e+00 : f32
    %204 = arith.subf %cst_64, %201 : f32
    %205 = vector.broadcast %204 : f32 to vector<1x128xf32>
    %206 = arith.mulf %205, %166 : vector<1x128xf32>
    %207 = arith.addf %203, %206 : vector<1x128xf32>
    %208 = vector.broadcast %201 : f32 to vector<1x128xf32>
    %209 = arith.mulf %208, %196 : vector<1x128xf32>
    %cst_65 = arith.constant 1.000000e+00 : f32
    %210 = arith.subf %cst_65, %201 : f32
    %211 = vector.broadcast %210 : f32 to vector<1x128xf32>
    %212 = arith.mulf %211, %172 : vector<1x128xf32>
    %213 = arith.addf %209, %212 : vector<1x128xf32>
    %214 = arith.index_cast %175 : i32 to index
    %c0_66 = arith.constant 0 : index
    %215 = vector.load %arg12[%214, %c0_66] : memref<8x128xf32, #tpu.memory_space<vmem>>, vector<1x128xf32>
    tpu.vector_store %arg12[%214, %c0_66], %207 {strides = array<i32>} : memref<8x128xf32, #tpu.memory_space<vmem>>, vector<1x128xf32>,
    %c5_i32 = arith.constant 5 : i32
    %c1_i32_67 = arith.constant 1 : i32
    %216 = arith.muli %c5_i32, %c1_i32_67 : i32
    %c0_68 = arith.constant 0 : index
    %c0_69 = arith.constant 0 : index
    %217 = vector.load %arg4[%c0_68, %c0_69] : memref<128x512xf32, #tpu.memory_space<vmem>>, vector<128x512xf32>
    %cst_70 = arith.constant dense<0.000000e+00> : vector<1x512xf32>
    %218 = tpu.matmul %207, %217, %cst_70 {dimension_numbers = #tpu.dot_dimension_numbers<[1], [0], [0], [1], [0, 0, 1, 1], [], []>} : vector<1x128xf32>, vector<128x512xf32>, vector<1x512xf32> -> vector<1x512xf32>
    %219 = arith.index_cast %216 : i32 to index
    %c0_71 = arith.constant 0 : index
    %220 = vector.load %arg11[%219, %c0_71] : memref<8x512xf32, #tpu.memory_space<vmem>>, vector<1x512xf32>
    %221 = arith.addf %218, %220 : vector<1x512xf32>
    %222 = arith.negf %221 : vector<1x512xf32>
    %223 = math.exp %222 : vector<1x512xf32>
    %cst_72 = arith.constant 1.000000e+00 : f32
    %224 = vector.broadcast %cst_72 : f32 to vector<1x512xf32>
    %225 = arith.addf %224, %223 : vector<1x512xf32>
    %226 = arith.divf %224, %225 : vector<1x512xf32>
    %227 = vector.extract_strided_slice %226 {offsets = [0, 0], sizes = [1, 128], strides = [1, 1]} : vector<1x512xf32> to vector<1x128xf32>
    %228 = vector.extract_strided_slice %226 {offsets = [0, 128], sizes = [1, 128], strides = [1, 1]} : vector<1x512xf32> to vector<1x128xf32>
    %229 = vector.extract_strided_slice %226 {offsets = [0, 256], sizes = [1, 128], strides = [1, 1]} : vector<1x512xf32> to vector<1x128xf32>
    %cst_73 = arith.constant 2.000000e+00 : f32
    %230 = vector.broadcast %cst_73 : f32 to vector<1x128xf32>
    %231 = arith.mulf %230, %229 : vector<1x128xf32>
    %cst_74 = arith.constant 1.000000e+00 : f32
    %232 = vector.broadcast %cst_74 : f32 to vector<1x128xf32>
    %233 = arith.subf %231, %232 : vector<1x128xf32>
    %234 = vector.extract_strided_slice %226 {offsets = [0, 384], sizes = [1, 128], strides = [1, 1]} : vector<1x512xf32> to vector<1x128xf32>
    %235 = arith.mulf %228, %213 : vector<1x128xf32>
    %236 = arith.mulf %227, %233 : vector<1x128xf32>
    %237 = arith.addf %235, %236 : vector<1x128xf32>
    %238 = math.tanh %237 : vector<1x128xf32>
    %239 = arith.mulf %234, %238 : vector<1x128xf32>
    %240 = arith.cmpi slt, %c5_i32, %0 : i32
    %241 = arith.extui %240 : i1 to i32
    %242 = arith.sitofp %241 : i32 to f32
    %243 = vector.broadcast %242 : f32 to vector<1x128xf32>
    %244 = arith.mulf %243, %239 : vector<1x128xf32>
    %cst_75 = arith.constant 1.000000e+00 : f32
    %245 = arith.subf %cst_75, %242 : f32
    %246 = vector.broadcast %245 : f32 to vector<1x128xf32>
    %247 = arith.mulf %246, %207 : vector<1x128xf32>
    %248 = arith.addf %244, %247 : vector<1x128xf32>
    %249 = vector.broadcast %242 : f32 to vector<1x128xf32>
    %250 = arith.mulf %249, %237 : vector<1x128xf32>
    %cst_76 = arith.constant 1.000000e+00 : f32
    %251 = arith.subf %cst_76, %242 : f32
    %252 = vector.broadcast %251 : f32 to vector<1x128xf32>
    %253 = arith.mulf %252, %213 : vector<1x128xf32>
    %254 = arith.addf %250, %253 : vector<1x128xf32>
    %255 = arith.index_cast %216 : i32 to index
    %c0_77 = arith.constant 0 : index
    %256 = vector.load %arg12[%255, %c0_77] : memref<8x128xf32, #tpu.memory_space<vmem>>, vector<1x128xf32>
    tpu.vector_store %arg12[%255, %c0_77], %248 {strides = array<i32>} : memref<8x128xf32, #tpu.memory_space<vmem>>, vector<1x128xf32>,
    %c6_i32 = arith.constant 6 : i32
    %c1_i32_78 = arith.constant 1 : i32
    %257 = arith.muli %c6_i32, %c1_i32_78 : i32
    %c0_79 = arith.constant 0 : index
    %c0_80 = arith.constant 0 : index
    %258 = vector.load %arg4[%c0_79, %c0_80] : memref<128x512xf32, #tpu.memory_space<vmem>>, vector<128x512xf32>
    %cst_81 = arith.constant dense<0.000000e+00> : vector<1x512xf32>
    %259 = tpu.matmul %248, %258, %cst_81 {dimension_numbers = #tpu.dot_dimension_numbers<[1], [0], [0], [1], [0, 0, 1, 1], [], []>} : vector<1x128xf32>, vector<128x512xf32>, vector<1x512xf32> -> vector<1x512xf32>
    %260 = arith.index_cast %257 : i32 to index
    %c0_82 = arith.constant 0 : index
    %261 = vector.load %arg11[%260, %c0_82] : memref<8x512xf32, #tpu.memory_space<vmem>>, vector<1x512xf32>
    %262 = arith.addf %259, %261 : vector<1x512xf32>
    %263 = arith.negf %262 : vector<1x512xf32>
    %264 = math.exp %263 : vector<1x512xf32>
    %cst_83 = arith.constant 1.000000e+00 : f32
    %265 = vector.broadcast %cst_83 : f32 to vector<1x512xf32>
    %266 = arith.addf %265, %264 : vector<1x512xf32>
    %267 = arith.divf %265, %266 : vector<1x512xf32>
    %268 = vector.extract_strided_slice %267 {offsets = [0, 0], sizes = [1, 128], strides = [1, 1]} : vector<1x512xf32> to vector<1x128xf32>
    %269 = vector.extract_strided_slice %267 {offsets = [0, 128], sizes = [1, 128], strides = [1, 1]} : vector<1x512xf32> to vector<1x128xf32>
    %270 = vector.extract_strided_slice %267 {offsets = [0, 256], sizes = [1, 128], strides = [1, 1]} : vector<1x512xf32> to vector<1x128xf32>
    %cst_84 = arith.constant 2.000000e+00 : f32
    %271 = vector.broadcast %cst_84 : f32 to vector<1x128xf32>
    %272 = arith.mulf %271, %270 : vector<1x128xf32>
    %cst_85 = arith.constant 1.000000e+00 : f32
    %273 = vector.broadcast %cst_85 : f32 to vector<1x128xf32>
    %274 = arith.subf %272, %273 : vector<1x128xf32>
    %275 = vector.extract_strided_slice %267 {offsets = [0, 384], sizes = [1, 128], strides = [1, 1]} : vector<1x512xf32> to vector<1x128xf32>
    %276 = arith.mulf %269, %254 : vector<1x128xf32>
    %277 = arith.mulf %268, %274 : vector<1x128xf32>
    %278 = arith.addf %276, %277 : vector<1x128xf32>
    %279 = math.tanh %278 : vector<1x128xf32>
    %280 = arith.mulf %275, %279 : vector<1x128xf32>
    %281 = arith.cmpi slt, %c6_i32, %0 : i32
    %282 = arith.extui %281 : i1 to i32
    %283 = arith.sitofp %282 : i32 to f32
    %284 = vector.broadcast %283 : f32 to vector<1x128xf32>
    %285 = arith.mulf %284, %280 : vector<1x128xf32>
    %cst_86 = arith.constant 1.000000e+00 : f32
    %286 = arith.subf %cst_86, %283 : f32
    %287 = vector.broadcast %286 : f32 to vector<1x128xf32>
    %288 = arith.mulf %287, %248 : vector<1x128xf32>
    %289 = arith.addf %285, %288 : vector<1x128xf32>
    %290 = vector.broadcast %283 : f32 to vector<1x128xf32>
    %291 = arith.mulf %290, %278 : vector<1x128xf32>
    %cst_87 = arith.constant 1.000000e+00 : f32
    %292 = arith.subf %cst_87, %283 : f32
    %293 = vector.broadcast %292 : f32 to vector<1x128xf32>
    %294 = arith.mulf %293, %254 : vector<1x128xf32>
    %295 = arith.addf %291, %294 : vector<1x128xf32>
    %296 = arith.index_cast %257 : i32 to index
    %c0_88 = arith.constant 0 : index
    %297 = vector.load %arg12[%296, %c0_88] : memref<8x128xf32, #tpu.memory_space<vmem>>, vector<1x128xf32>
    tpu.vector_store %arg12[%296, %c0_88], %289 {strides = array<i32>} : memref<8x128xf32, #tpu.memory_space<vmem>>, vector<1x128xf32>,
    %c7_i32 = arith.constant 7 : i32
    %c1_i32_89 = arith.constant 1 : i32
    %298 = arith.muli %c7_i32, %c1_i32_89 : i32
    %c0_90 = arith.constant 0 : index
    %c0_91 = arith.constant 0 : index
    %299 = vector.load %arg4[%c0_90, %c0_91] : memref<128x512xf32, #tpu.memory_space<vmem>>, vector<128x512xf32>
    %cst_92 = arith.constant dense<0.000000e+00> : vector<1x512xf32>
    %300 = tpu.matmul %289, %299, %cst_92 {dimension_numbers = #tpu.dot_dimension_numbers<[1], [0], [0], [1], [0, 0, 1, 1], [], []>} : vector<1x128xf32>, vector<128x512xf32>, vector<1x512xf32> -> vector<1x512xf32>
    %301 = arith.index_cast %298 : i32 to index
    %c0_93 = arith.constant 0 : index
    %302 = vector.load %arg11[%301, %c0_93] : memref<8x512xf32, #tpu.memory_space<vmem>>, vector<1x512xf32>
    %303 = arith.addf %300, %302 : vector<1x512xf32>
    %304 = arith.negf %303 : vector<1x512xf32>
    %305 = math.exp %304 : vector<1x512xf32>
    %cst_94 = arith.constant 1.000000e+00 : f32
    %306 = vector.broadcast %cst_94 : f32 to vector<1x512xf32>
    %307 = arith.addf %306, %305 : vector<1x512xf32>
    %308 = arith.divf %306, %307 : vector<1x512xf32>
    %309 = vector.extract_strided_slice %308 {offsets = [0, 0], sizes = [1, 128], strides = [1, 1]} : vector<1x512xf32> to vector<1x128xf32>
    %310 = vector.extract_strided_slice %308 {offsets = [0, 128], sizes = [1, 128], strides = [1, 1]} : vector<1x512xf32> to vector<1x128xf32>
    %311 = vector.extract_strided_slice %308 {offsets = [0, 256], sizes = [1, 128], strides = [1, 1]} : vector<1x512xf32> to vector<1x128xf32>
    %cst_95 = arith.constant 2.000000e+00 : f32
    %312 = vector.broadcast %cst_95 : f32 to vector<1x128xf32>
    %313 = arith.mulf %312, %311 : vector<1x128xf32>
    %cst_96 = arith.constant 1.000000e+00 : f32
    %314 = vector.broadcast %cst_96 : f32 to vector<1x128xf32>
    %315 = arith.subf %313, %314 : vector<1x128xf32>
    %316 = vector.extract_strided_slice %308 {offsets = [0, 384], sizes = [1, 128], strides = [1, 1]} : vector<1x512xf32> to vector<1x128xf32>
    %317 = arith.mulf %310, %295 : vector<1x128xf32>
    %318 = arith.mulf %309, %315 : vector<1x128xf32>
    %319 = arith.addf %317, %318 : vector<1x128xf32>
    %320 = math.tanh %319 : vector<1x128xf32>
    %321 = arith.mulf %316, %320 : vector<1x128xf32>
    %322 = arith.cmpi slt, %c7_i32, %0 : i32
    %323 = arith.extui %322 : i1 to i32
    %324 = arith.sitofp %323 : i32 to f32
    %325 = vector.broadcast %324 : f32 to vector<1x128xf32>
    %326 = arith.mulf %325, %321 : vector<1x128xf32>
    %cst_97 = arith.constant 1.000000e+00 : f32
    %327 = arith.subf %cst_97, %324 : f32
    %328 = vector.broadcast %327 : f32 to vector<1x128xf32>
    %329 = arith.mulf %328, %289 : vector<1x128xf32>
    %330 = arith.addf %326, %329 : vector<1x128xf32>
    %331 = vector.broadcast %324 : f32 to vector<1x128xf32>
    %332 = arith.mulf %331, %319 : vector<1x128xf32>
    %cst_98 = arith.constant 1.000000e+00 : f32
    %333 = arith.subf %cst_98, %324 : f32
    %334 = vector.broadcast %333 : f32 to vector<1x128xf32>
    %335 = arith.mulf %334, %295 : vector<1x128xf32>
    %336 = arith.addf %332, %335 : vector<1x128xf32>
    %337 = arith.index_cast %298 : i32 to index
    %c0_99 = arith.constant 0 : index
    %338 = vector.load %arg12[%337, %c0_99] : memref<8x128xf32, #tpu.memory_space<vmem>>, vector<1x128xf32>
    tpu.vector_store %arg12[%337, %c0_99], %330 {strides = array<i32>} : memref<8x128xf32, #tpu.memory_space<vmem>>, vector<1x128xf32>,
    %c8_i32 = arith.constant 8 : i32
    %c0_100 = arith.constant 0 : index
    %c0_101 = arith.constant 0 : index
    %339 = vector.load %arg9[%c0_100, %c0_101] : memref<1x128xf32, #tpu.memory_space<vmem>>, vector<1x128xf32>
    tpu.vector_store %arg9[%c0_100, %c0_101], %330 {strides = array<i32>} : memref<1x128xf32, #tpu.memory_space<vmem>>, vector<1x128xf32>,
    %c0_102 = arith.constant 0 : index
    %c0_103 = arith.constant 0 : index
    %340 = vector.load %arg10[%c0_102, %c0_103] : memref<1x128xf32, #tpu.memory_space<vmem>>, vector<1x128xf32>
    tpu.vector_store %arg10[%c0_102, %c0_103], %336 {strides = array<i32>} : memref<1x128xf32, #tpu.memory_space<vmem>>, vector<1x128xf32>,
    %c0_104 = arith.constant 0 : index
    %c0_105 = arith.constant 0 : index
    %341 = vector.load %arg12[%c0_104, %c0_105] : memref<8x128xf32, #tpu.memory_space<vmem>>, vector<8x128xf32>
    %c0_106 = arith.constant 0 : index
    %c0_107 = arith.constant 0 : index
    %342 = vector.load %arg7[%c0_106, %c0_107] : memref<128x128xf32, #tpu.memory_space<vmem>>, vector<128x128xf32>
    %cst_108 = arith.constant dense<0.000000e+00> : vector<8x128xf32>
    %343 = tpu.matmul %341, %342, %cst_108 {dimension_numbers = #tpu.dot_dimension_numbers<[1], [0], [0], [1], [0, 0, 1, 1], [], []>} : vector<8x128xf32>, vector<128x128xf32>, vector<8x128xf32> -> vector<8x128xf32>
    %344 = vector.broadcast %2 : vector<1x128xf32> to vector<8x128xf32>
    %345 = arith.addf %343, %344 : vector<8x128xf32>
    %cst_109 = arith.constant dense<0xFF800000> : vector<8xf32>
    %346 = vector.multi_reduction <maximumf>, %345, %cst_109 [1] : vector<8x128xf32> to vector<8xf32>
    %347 = vector.shape_cast %346 : vector<8xf32> to vector<8x1xf32>
    %348 = vector.broadcast %347 : vector<8x1xf32> to vector<8x128xf32>
    %349 = arith.subf %345, %348 : vector<8x128xf32>
    %350 = math.exp %349 : vector<8x128xf32>
    %cst_110 = arith.constant dense<0.000000e+00> : vector<8xf32>
    %351 = vector.multi_reduction <add>, %350, %cst_110 [1] : vector<8x128xf32> to vector<8xf32>
    %352 = vector.shape_cast %351 : vector<8xf32> to vector<8x1xf32>
    %353 = math.log %352 : vector<8x1xf32>
    %354 = arith.addf %347, %353 : vector<8x1xf32>
    %355 = vector.broadcast %354 : vector<8x1xf32> to vector<8x128xf32>
    %356 = arith.subf %345, %355 : vector<8x128xf32>
    %c0_111 = arith.constant 0 : index
    %c0_112 = arith.constant 0 : index
    %357 = vector.load %arg8[%c0_111, %c0_112] : memref<8x128xf32, #tpu.memory_space<vmem>>, vector<8x128xf32>
    tpu.vector_store %arg8[%c0_111, %c0_112], %356 {strides = array<i32>} : memref<8x128xf32, #tpu.memory_space<vmem>>, vector<8x128xf32>,
    return
  }
  func.func @transform_0(%arg0: i32, %arg1: memref<1xi32, #tpu.memory_space<smem>>) -> (i32, i32) {
    %c0_i32 = arith.constant 0 : i32
    %c0_i32_0 = arith.constant 0 : i32
    %c0_i32_1 = arith.constant 0 : i32
    return %c0_i32, %c0_i32_0 : i32, i32
  }
  func.func @transform_1(%arg0: i32, %arg1: memref<1xi32, #tpu.memory_space<smem>>) -> (i32, i32) {
    %c0_i32 = arith.constant 0 : i32
    %c0_i32_0 = arith.constant 0 : i32
    %c0_i32_1 = arith.constant 0 : i32
    return %c0_i32, %c0_i32_0 : i32, i32
  }
  func.func @transform_2(%arg0: i32, %arg1: memref<1xi32, #tpu.memory_space<smem>>) -> (i32, i32) {
    %c0_i32 = arith.constant 0 : i32
    %c0_i32_0 = arith.constant 0 : i32
    %c0_i32_1 = arith.constant 0 : i32
    return %c0_i32, %c0_i32_0 : i32, i32
  }
  func.func @transform_3(%arg0: i32, %arg1: memref<1xi32, #tpu.memory_space<smem>>) -> (i32, i32) {
    %c0_i32 = arith.constant 0 : i32
    %c0_i32_0 = arith.constant 0 : i32
    %c0_i32_1 = arith.constant 0 : i32
    return %c0_i32, %c0_i32_0 : i32, i32
  }
  func.func @transform_4(%arg0: i32, %arg1: memref<1xi32, #tpu.memory_space<smem>>) -> (i32, i32) {
    %c0_i32 = arith.constant 0 : i32
    %c0_i32_0 = arith.constant 0 : i32
    %c0_i32_1 = arith.constant 0 : i32
    return %c0_i32, %c0_i32_0 : i32, i32
  }
  func.func @transform_5(%arg0: i32, %arg1: memref<1xi32, #tpu.memory_space<smem>>) -> (i32, i32) {
    %c0_i32 = arith.constant 0 : i32
    %c0_i32_0 = arith.constant 0 : i32
    %c0_i32_1 = arith.constant 0 : i32
    return %c0_i32, %c0_i32_0 : i32, i32
  }
  func.func @transform_6(%arg0: i32, %arg1: memref<1xi32, #tpu.memory_space<smem>>) -> (i32, i32) {
    %c0_i32 = arith.constant 0 : i32
    %c0_i32_0 = arith.constant 0 : i32
    %c0_i32_1 = arith.constant 0 : i32
    return %c0_i32, %c0_i32_0 : i32, i32
  }
  func.func @transform_7(%arg0: i32, %arg1: memref<1xi32, #tpu.memory_space<smem>>) -> (i32, i32) {
    %c0_i32 = arith.constant 0 : i32
    %c0_i32_0 = arith.constant 0 : i32
    %c0_i32_1 = arith.constant 0 : i32
    return %c0_i32, %c0_i32_0 : i32, i32
  }
  func.func @transform_8(%arg0: i32, %arg1: memref<1xi32, #tpu.memory_space<smem>>) -> (i32, i32) {
    %c0_i32 = arith.constant 0 : i32
    %c0_i32_0 = arith.constant 0 : i32
    %c0_i32_1 = arith.constant 0 : i32
    return %c0_i32, %c0_i32_0 : i32, i32
  }
}

</mosaic_0001>

<llo_original>
// kernel: tpu_custom_call.1
$region0: #{tpu_custom_call.1}
  #allocation0 [shape = 'u32[]', space=smem, size = 0x4, offset = 0x4, fixed_abs, tag = 'smem constant byte address 0x4 - core index']
  #allocation1 [shape = 'u32[72,128]{1,0:T(1,128)}', space=vmem, size = 0x9000, scoped, tag = 'internal scratch']
  #allocation2 [shape = 'f32[8,512]{1,0:T(8,128)}', space=vmem, size = 0x4000, scoped, tag = 'scratch operand']
  #allocation3 [shape = 'f32[8,128]{1,0:T(8,128)}', space=vmem, size = 0x1000, scoped, tag = 'scratch operand']
  #allocation4 [shape = 's32[1]{0}', space=sflag, size = 0x4, scoped, tag = 'scoped memory for tpu_custom_call.1']
  #allocation5 [shape = 's32[1]{0:T(128)S(6)}', space=smem, size = 0x200, scoped, tag = 'prefetched SMEM operand 0']
  %s0 = inlined_call_operand.<no memory space> [shape: s32[1], index: 0, kind: input, shape index: {}]
  %s1 = inlined_call_operand.hbm [shape: f32[8,57], index: 1, kind: input, shape index: {}]
  %s2 = inlined_call_operand.hbm [shape: f32[57,512], index: 2, kind: input, shape index: {}]
  %s3 = inlined_call_operand.hbm [shape: f32[128,512], index: 3, kind: input, shape index: {}]
  %s4 = inlined_call_operand.hbm [shape: f32[1,640], index: 4, kind: input, shape index: {}]
  %s5 = inlined_call_operand.vmem [shape: f32[1,256], index: 5, kind: input, shape index: {}]
  %s6 = inlined_call_operand.hbm [shape: f32[128,128], index: 6, kind: input, shape index: {}]
  %s7 = inlined_call_operand.hbm [shape: f32[8,128], index: 7, kind: output, shape index: {0}]
  %s8 = inlined_call_operand.hbm [shape: f32[1,128], index: 8, kind: output, shape index: {1}]
  %s9 = inlined_call_operand.hbm [shape: f32[1,128], index: 9, kind: output, shape index: {2}]
  %10 = xla_tuple %s7, %s8, %s9
  %s11 = sld [smem:[#allocation0]]
  $region70: #{tpu_custom_call.1} parent=0
    _
  %s13 = ssub.s32 1, %s11
  %s14 = scalar_select 0, %s13, %s11
  %15 = sst [smem:[#allocation5]] %s0
  $region1: #{tpu_custom_call.1} parent=0
    #allocation6 [shape = 'u8[4096]{0}', space=vmem, size = 0x1000, scoped, tag = 'input window, operand 1, single buffered']
    #allocation7 [shape = 's32[1]{0}', space=sflag, size = 0x4, scoped, tag = 'scoped memory for tpu_custom_call.1']
    #allocation8 [shape = 's32[1]{0}', space=sflag, size = 0x4, scoped, tag = 'scoped memory for tpu_custom_call.1']
    #allocation9 [shape = 'u8[131072]{0}', space=vmem, size = 0x20000, scoped, tag = 'input window, operand 2, single buffered']
    #allocation10 [shape = 's32[1]{0}', space=sflag, size = 0x4, scoped, tag = 'scoped memory for tpu_custom_call.1']
    #allocation11 [shape = 'u8[262144]{0}', space=vmem, size = 0x40000, scoped, tag = 'input window, operand 3, single buffered']
    #allocation12 [shape = 'u8[2560]{0}', space=vmem, size = 0xc00, scoped, tag = 'input window, operand 4, single buffered']
    #allocation13 [shape = 's32[1]{0}', space=sflag, size = 0x4, scoped, tag = 'scoped memory for tpu_custom_call.1']
    #allocation14 [shape = 'u8[65536]{0}', space=vmem, size = 0x10000, scoped, tag = 'input window, operand 6, single buffered']
    #allocation15 [shape = 'u8[4096]{0}', space=vmem, size = 0x1000, scoped, tag = 'output window, operand 0, single buffered']
    #allocation16 [shape = 'u8[512]{0}', space=vmem, size = 0x400, scoped, tag = 'output window, operand 1, single buffered']
    #allocation17 [shape = 's32[1]{0}', space=sflag, size = 0x4, scoped, tag = 'scoped memory for tpu_custom_call.1']
    #allocation18 [shape = 'u8[512]{0}', space=vmem, size = 0x400, scoped, tag = 'output window, operand 2, single buffered']
    %16 = vsyncpa [#allocation7], 0
    %17 = vsyncpa [#allocation10], 0
    %18 = vsyncpa [#allocation13], 0
    %19 = vsyncpa [#allocation8], 0
    %20 = vsyncpa [#allocation17], 0
    // Predicated region
    $region2: #{tpu_custom_call.1} parent=1 // pred_check
      _
    $region3: #{tpu_custom_call.1} parent=1 // pred_check_branch
      %22 = sbr.rel (0) target = $region5
    $region4: #{tpu_custom_call.1} parent=1 // pred_region
      %24 = vsyncadd [#allocation7], 0
      %s26 = sshll.u32 %s1, 4
      %s27 = int_to_ptr.hbm [resolvable:$true] %s26
      %s28 = sshll.u32 [#allocation6], 4
      %s29 = int_to_ptr.vmem [resolvable:$true] %s28
      %31 = dma.hbm_to_vmem [thread:$0]  %s27, 128, %s29, [#allocation7]
    $region5: #{tpu_custom_call.1} parent=1 // pred_fallthru
      _
    // Predicated region
    $region6: #{tpu_custom_call.1} parent=1 // pred_check
      _
    $region7: #{tpu_custom_call.1} parent=1 // pred_check_branch
      %33 = sbr.rel (0) target = $region9
    $region8: #{tpu_custom_call.1} parent=1 // pred_region
      %35 = vsyncadd [#allocation10], 0
      %s36 = sshll.u32 %s2, 4
      %s37 = int_to_ptr.hbm [resolvable:$true] %s36
      %s38 = sshll.u32 [#allocation9], 4
      %s39 = int_to_ptr.vmem [resolvable:$true] %s38
      %44 = dma.hbm_to_vmem [thread:$0]  %s37, 4096, %s39, [#allocation10], 512, 512, 32
    $region9: #{tpu_custom_call.1} parent=1 // pred_fallthru
      _
    // Predicated region
    $region10: #{tpu_custom_call.1} parent=1 // pred_check
      _
    $region11: #{tpu_custom_call.1} parent=1 // pred_check_branch
      %46 = sbr.rel (0) target = $region13
    $region12: #{tpu_custom_call.1} parent=1 // pred_region
      %48 = vsyncadd [#allocation10], 0
      %s49 = sshll.u32 %s3, 4
      %s50 = int_to_ptr.hbm [resolvable:$true] %s49
      %s51 = sshll.u32 [#allocation11], 4
      %s52 = int_to_ptr.vmem [resolvable:$true] %s51
      %57 = dma.hbm_to_vmem [thread:$0]  %s50, 8192, %s52, [#allocation10], 512, 512, 32
    $region13: #{tpu_custom_call.1} parent=1 // pred_fallthru
      _
    // Predicated region
    $region14: #{tpu_custom_call.1} parent=1 // pred_check
      _
    $region15: #{tpu_custom_call.1} parent=1 // pred_check_branch
      %59 = sbr.rel (0) target = $region17
    $region16: #{tpu_custom_call.1} parent=1 // pred_region
      %61 = vsyncadd [#allocation13], 0
      %s63 = sshll.u32 %s4, 4
      %s64 = int_to_ptr.hbm [resolvable:$true] %s63
      %s65 = sshll.u32 [#allocation12], 4
      %s66 = int_to_ptr.vmem [resolvable:$true] %s65
      %68 = dma.hbm_to_vmem [thread:$0]  %s64, 80, %s66, [#allocation13]
    $region17: #{tpu_custom_call.1} parent=1 // pred_fallthru
      _
    // Predicated region
    $region18: #{tpu_custom_call.1} parent=1 // pred_check
      _
    $region19: #{tpu_custom_call.1} parent=1 // pred_check_branch
      %70 = sbr.rel (0) target = $region21
    $region20: #{tpu_custom_call.1} parent=1 // pred_region
      _
    $region21: #{tpu_custom_call.1} parent=1 // pred_fallthru
      _
    // Predicated region
    $region22: #{tpu_custom_call.1} parent=1 // pred_check
      _
    $region23: #{tpu_custom_call.1} parent=1 // pred_check_branch
      %72 = sbr.rel (0) target = $region25
    $region24: #{tpu_custom_call.1} parent=1 // pred_region
      %74 = vsyncadd [#allocation13], 0
      %s75 = sshll.u32 %s6, 4
      %s76 = int_to_ptr.hbm [resolvable:$true] %s75
      %s77 = sshll.u32 [#allocation14], 4
      %s78 = int_to_ptr.vmem [resolvable:$true] %s77
      %83 = dma.hbm_to_vmem [thread:$0]  %s76, 2048, %s78, [#allocation13], 128, 128, 8
    $region25: #{tpu_custom_call.1} parent=1 // pred_fallthru
      _
    // Predicated region
    $region26: #{tpu_custom_call.1} parent=1 // pred_check
      _
    $region27: #{tpu_custom_call.1} parent=1 // pred_check_branch
      %85 = sbr.rel (0) target = $region29
    $region28: #{tpu_custom_call.1} parent=1 // pred_region
      %87 = dma.done [#allocation7], 128
    $region29: #{tpu_custom_call.1} parent=1 // pred_fallthru
      _
    // Predicated region
    $region30: #{tpu_custom_call.1} parent=1 // pred_check
      _
    $region31: #{tpu_custom_call.1} parent=1 // pred_check_branch
      %89 = sbr.rel (0) target = $region33
    $region32: #{tpu_custom_call.1} parent=1 // pred_region
      %91 = dma.done [#allocation10], 4096
    $region33: #{tpu_custom_call.1} parent=1 // pred_fallthru
      _
    // Predicated region
    $region34: #{tpu_custom_call.1} parent=1 // pred_check
      _
    $region35: #{tpu_custom_call.1} parent=1 // pred_check_branch
      %93 = sbr.rel (0) target = $region37
    $region36: #{tpu_custom_call.1} parent=1 // pred_region
      %95 = dma.done [#allocation10], 8192
    $region37: #{tpu_custom_call.1} parent=1 // pred_fallthru
      _
    // Predicated region
    $region38: #{tpu_custom_call.1} parent=1 // pred_check
      _
    $region39: #{tpu_custom_call.1} parent=1 // pred_check_branch
      %97 = sbr.rel (0) target = $region41
    $region40: #{tpu_custom_call.1} parent=1 // pred_region
      %99 = dma.done [#allocation13], 80
    $region41: #{tpu_custom_call.1} parent=1 // pred_fallthru
      _
    // Predicated region
    $region42: #{tpu_custom_call.1} parent=1 // pred_check
      _
    $region43: #{tpu_custom_call.1} parent=1 // pred_check_branch
      %101 = sbr.rel (0) target = $region45
    $region44: #{tpu_custom_call.1} parent=1 // pred_region
      %103 = dma.done [#allocation13], 2048
    $region45: #{tpu_custom_call.1} parent=1 // pred_fallthru
      _
    %s104 = sld [smem:[#allocation5]]
    %v105 = vld [vmem:[#allocation12] sm:$0xf]
    %v106 = vld [vmem:[#allocation12 + $0x4] sm:$0x1]
    %v107 = vld [vmem:[#allocation6] sm:$0xff]
    %v108 = vld [vmem:[#allocation9] sm:$0xff]
    %v109 = vld [vmem:[#allocation9 + $0x8] sm:$0xff]
    %v110 = vld [vmem:[#allocation9 + $0x10] sm:$0xff]
    %v111 = vld [vmem:[#allocation9 + $0x18] sm:$0xff]
    %v112 = vld [vmem:[#allocation9 + $0x20] sm:$0xff]
    %v113 = vld [vmem:[#allocation9 + $0x28] sm:$0xff]
    %v114 = vld [vmem:[#allocation9 + $0x30] sm:$0xff]
    %v115 = vld [vmem:[#allocation9 + $0x38] sm:$0xff]
    %v116 = vld [vmem:[#allocation9 + $0x40] sm:$0xff]
    %v117 = vld [vmem:[#allocation9 + $0x48] sm:$0xff]
    %v118 = vld [vmem:[#allocation9 + $0x50] sm:$0xff]
    %v119 = vld [vmem:[#allocation9 + $0x58] sm:$0xff]
    %v120 = vld [vmem:[#allocation9 + $0x60] sm:$0xff]
    %v121 = vld [vmem:[#allocation9 + $0x68] sm:$0xff]
    %v122 = vld [vmem:[#allocation9 + $0x70] sm:$0xff]
    %v123 = vld [vmem:[#allocation9 + $0x78] sm:$0xff]
    %v124 = vld [vmem:[#allocation9 + $0x80] sm:$0xff]
    %v125 = vld [vmem:[#allocation9 + $0x88] sm:$0xff]
    %v126 = vld [vmem:[#allocation9 + $0x90] sm:$0xff]
    %v127 = vld [vmem:[#allocation9 + $0x98] sm:$0xff]
    %v128 = vld [vmem:[#allocation9 + $0xa0] sm:$0xff]
    %v129 = vld [vmem:[#allocation9 + $0xa8] sm:$0xff]
    %v130 = vld [vmem:[#allocation9 + $0xb0] sm:$0xff]
    %v131 = vld [vmem:[#allocation9 + $0xb8] sm:$0xff]
    %v132 = vld [vmem:[#allocation9 + $0xc0] sm:$0xff]
    %v133 = vld [vmem:[#allocation9 + $0xc8] sm:$0xff]
    %v134 = vld [vmem:[#allocation9 + $0xd0] sm:$0xff]
    %v135 = vld [vmem:[#allocation9 + $0xd8] sm:$0xff]
    %v136 = vld [vmem:[#allocation9 + $0xe0] sm:$0x1]
    %v137 = vld [vmem:[#allocation9 + $0xe8] sm:$0x1]
    %v138 = vld [vmem:[#allocation9 + $0xf0] sm:$0x1]
    %v139 = vld [vmem:[#allocation9 + $0xf8] sm:$0x1]
    %v141 = vperm.slane %v105, 0
    %v142 = vperm.slane %v105, 1
    %v143 = vperm.slane %v105, 2
    %v144 = vperm.slane %v105, 3
    %vm149 = vcmask 465920
    %v151 = vsel %vm149, %v107, 0
    %vm153 = vcmask 1040384
    %v155 = vsel %vm153, %v136, 0
    %v158 = vsel %vm153, %v137, 0
    %v161 = vsel %vm153, %v138, 0
    %v164 = vsel %vm153, %v139, 0
    %166 = vmatpush.msra.mxu0 0.0
    %167 = vmatpush.msra.mxu0 0.0
    %168 = vmatpush.msra.mxu0 0.0
    %169 = vmatpush.msra.mxu0 0.0
    %170 = vmatpush.msra.mxu0 0.0
    %171 = vmatpush.msra.mxu0 0.0
    %172 = vmatpush.msra.mxu0 0.0
    %173 = vmatpush.msra.mxu0 0.0
    %174 = vmatpush.msra.mxu0 %v155
    %175 = vmatpush.msra.mxu0 %v132
    %176 = vmatpush.msra.mxu0 %v128
    %177 = vmatpush.msra.mxu0 %v124
    %178 = vmatpush.msra.mxu0 %v120
    %179 = vmatpush.msra.mxu0 %v116
    %180 = vmatpush.msra.mxu0 %v112
    %181 = vmatpush.msra.mxu0 %v108
    %182 = vmatmul.f32.gmra.mxu0 %v151
    %v183 = vpop.f32.mrf.mxu0
    %v184 = vadd.f32 %v141, %v183
    %185 = vdwg.mxu0
    %186 = vmatpush.msra.mxu0 0.0
    %187 = vmatpush.msra.mxu0 0.0
    %188 = vmatpush.msra.mxu0 0.0
    %189 = vmatpush.msra.mxu0 0.0
    %190 = vmatpush.msra.mxu0 0.0
    %191 = vmatpush.msra.mxu0 0.0
    %192 = vmatpush.msra.mxu0 0.0
    %193 = vmatpush.msra.mxu0 0.0
    %194 = vmatpush.msra.mxu0 %v158
    %195 = vmatpush.msra.mxu0 %v133
    %196 = vmatpush.msra.mxu0 %v129
    %197 = vmatpush.msra.mxu0 %v125
    %198 = vmatpush.msra.mxu0 %v121
    %199 = vmatpush.msra.mxu0 %v117
    %200 = vmatpush.msra.mxu0 %v113
    %201 = vmatpush.msra.mxu0 %v109
    %202 = vmatmul.f32.gmra.mxu0 %v151
    %v203 = vpop.f32.mrf.mxu0
    %v204 = vadd.f32 %v142, %v203
    %205 = vdwg.mxu0
    %206 = vmatpush.msra.mxu0 0.0
    %207 = vmatpush.msra.mxu0 0.0
    %208 = vmatpush.msra.mxu0 0.0
    %209 = vmatpush.msra.mxu0 0.0
    %210 = vmatpush.msra.mxu0 0.0
    %211 = vmatpush.msra.mxu0 0.0
    %212 = vmatpush.msra.mxu0 0.0
    %213 = vmatpush.msra.mxu0 0.0
    %214 = vmatpush.msra.mxu0 %v161
    %215 = vmatpush.msra.mxu0 %v134
    %216 = vmatpush.msra.mxu0 %v130
    %217 = vmatpush.msra.mxu0 %v126
    %218 = vmatpush.msra.mxu0 %v122
    %219 = vmatpush.msra.mxu0 %v118
    %220 = vmatpush.msra.mxu0 %v114
    %221 = vmatpush.msra.mxu0 %v110
    %222 = vmatmul.f32.gmra.mxu0 %v151
    %v223 = vpop.f32.mrf.mxu0
    %v224 = vadd.f32 %v143, %v223
    %225 = vdwg.mxu0
    %226 = vmatpush.msra.mxu0 0.0
    %227 = vmatpush.msra.mxu0 0.0
    %228 = vmatpush.msra.mxu0 0.0
    %229 = vmatpush.msra.mxu0 0.0
    %230 = vmatpush.msra.mxu0 0.0
    %231 = vmatpush.msra.mxu0 0.0
    %232 = vmatpush.msra.mxu0 0.0
    %233 = vmatpush.msra.mxu0 0.0
    %234 = vmatpush.msra.mxu0 %v164
    %235 = vmatpush.msra.mxu0 %v135
    %236 = vmatpush.msra.mxu0 %v131
    %237 = vmatpush.msra.mxu0 %v127
    %238 = vmatpush.msra.mxu0 %v123
    %239 = vmatpush.msra.mxu0 %v119
    %240 = vmatpush.msra.mxu0 %v115
    %241 = vmatpush.msra.mxu0 %v111
    %242 = vmatmul.f32.gmra.mxu0 %v151
    %v243 = vpop.f32.mrf.mxu0
    %v244 = vadd.f32 %v144, %v243
    %245 = vdwg.mxu0
    %246 = vst [vmem:[#allocation2] sm:$0xff] %v184
    %247 = vst [vmem:[#allocation2 + $0x8] sm:$0xff] %v204
    %248 = vst [vmem:[#allocation2 + $0x10] sm:$0xff] %v224
    %249 = vst [vmem:[#allocation2 + $0x18] sm:$0xff] %v244
    %v250 = vld [vmem:[%s5] sm:$0x1]
    %v251 = vld [vmem:[%s5 + $0x1] sm:$0x1]
    %v252 = vld [vmem:[#allocation11] sm:$0xff]
    %v253 = vld [vmem:[#allocation11 + $0x8] sm:$0xff]
    %v254 = vld [vmem:[#allocation11 + $0x10] sm:$0xff]
    %v255 = vld [vmem:[#allocation11 + $0x18] sm:$0xff]
    %v256 = vld [vmem:[#allocation11 + $0x20] sm:$0xff]
    %v257 = vld [vmem:[#allocation11 + $0x28] sm:$0xff]
    %v258 = vld [vmem:[#allocation11 + $0x30] sm:$0xff]
    %v259 = vld [vmem:[#allocation11 + $0x38] sm:$0xff]
    %v260 = vld [vmem:[#allocation11 + $0x40] sm:$0xff]
    %v261 = vld [vmem:[#allocation11 + $0x48] sm:$0xff]
    %v262 = vld [vmem:[#allocation11 + $0x50] sm:$0xff]
    %v263 = vld [vmem:[#allocation11 + $0x58] sm:$0xff]
    %v264 = vld [vmem:[#allocation11 + $0x60] sm:$0xff]
    %v265 = vld [vmem:[#allocation11 + $0x68] sm:$0xff]
    %v266 = vld [vmem:[#allocation11 + $0x70] sm:$0xff]
    %v267 = vld [vmem:[#allocation11 + $0x78] sm:$0xff]
    %v268 = vld [vmem:[#allocation11 + $0x80] sm:$0xff]
    %v269 = vld [vmem:[#allocation11 + $0x88] sm:$0xff]
    %v270 = vld [vmem:[#allocation11 + $0x90] sm:$0xff]
    %v271 = vld [vmem:[#allocation11 + $0x98] sm:$0xff]
    %v272 = vld [vmem:[#allocation11 + $0xa0] sm:$0xff]
    %v273 = vld [vmem:[#allocation11 + $0xa8] sm:$0xff]
    %v274 = vld [vmem:[#allocation11 + $0xb0] sm:$0xff]
    %v275 = vld [vmem:[#allocation11 + $0xb8] sm:$0xff]
    %v276 = vld [vmem:[#allocation11 + $0xc0] sm:$0xff]
    %v277 = vld [vmem:[#allocation11 + $0xc8] sm:$0xff]
    %v278 = vld [vmem:[#allocation11 + $0xd0] sm:$0xff]
    %v279 = vld [vmem:[#allocation11 + $0xd8] sm:$0xff]
    %v280 = vld [vmem:[#allocation11 + $0xe0] sm:$0xff]
    %v281 = vld [vmem:[#allocation11 + $0xe8] sm:$0xff]
    %v282 = vld [vmem:[#allocation11 + $0xf0] sm:$0xff]
    %v283 = vld [vmem:[#allocation11 + $0xf8] sm:$0xff]
    %v284 = vld [vmem:[#allocation11 + $0x100] sm:$0xff]
    %v285 = vld [vmem:[#allocation11 + $0x108] sm:$0xff]
    %v286 = vld [vmem:[#allocation11 + $0x110] sm:$0xff]
    %v287 = vld [vmem:[#allocation11 + $0x118] sm:$0xff]
    %v288 = vld [vmem:[#allocation11 + $0x120] sm:$0xff]
    %v289 = vld [vmem:[#allocation11 + $0x128] sm:$0xff]
    %v290 = vld [vmem:[#allocation11 + $0x130] sm:$0xff]
    %v291 = vld [vmem:[#allocation11 + $0x138] sm:$0xff]
    %v292 = vld [vmem:[#allocation11 + $0x140] sm:$0xff]
    %v293 = vld [vmem:[#allocation11 + $0x148] sm:$0xff]
    %v294 = vld [vmem:[#allocation11 + $0x150] sm:$0xff]
    %v295 = vld [vmem:[#allocation11 + $0x158] sm:$0xff]
    %v296 = vld [vmem:[#allocation11 + $0x160] sm:$0xff]
    %v297 = vld [vmem:[#allocation11 + $0x168] sm:$0xff]
    %v298 = vld [vmem:[#allocation11 + $0x170] sm:$0xff]
    %v299 = vld [vmem:[#allocation11 + $0x178] sm:$0xff]
    %v300 = vld [vmem:[#allocation11 + $0x180] sm:$0xff]
    %v301 = vld [vmem:[#allocation11 + $0x188] sm:$0xff]
    %v302 = vld [vmem:[#allocation11 + $0x190] sm:$0xff]
    %v303 = vld [vmem:[#allocation11 + $0x198] sm:$0xff]
    %v304 = vld [vmem:[#allocation11 + $0x1a0] sm:$0xff]
    %v305 = vld [vmem:[#allocation11 + $0x1a8] sm:$0xff]
    %v306 = vld [vmem:[#allocation11 + $0x1b0] sm:$0xff]
    %v307 = vld [vmem:[#allocation11 + $0x1b8] sm:$0xff]
    %v308 = vld [vmem:[#allocation11 + $0x1c0] sm:$0xff]
    %v309 = vld [vmem:[#allocation11 + $0x1c8] sm:$0xff]
    %v310 = vld [vmem:[#allocation11 + $0x1d0] sm:$0xff]
    %v311 = vld [vmem:[#allocation11 + $0x1d8] sm:$0xff]
    %v312 = vld [vmem:[#allocation11 + $0x1e0] sm:$0xff]
    %v313 = vld [vmem:[#allocation11 + $0x1e8] sm:$0xff]
    %v314 = vld [vmem:[#allocation11 + $0x1f0] sm:$0xff]
    %v315 = vld [vmem:[#allocation11 + $0x1f8] sm:$0xff]
    %v316 = vld [vmem:[#allocation2] ss:$8 sm:$0xf]
    %v318 = vperm.slane %v316, 0
    %v319 = vperm.slane %v316, 1
    %v320 = vperm.slane %v316, 2
    %v321 = vperm.slane %v316, 3
    %326 = vmatpush.msra.mxu0 %v312
    %327 = vmatpush.msra.mxu0 %v308
    %328 = vmatpush.msra.mxu0 %v304
    %329 = vmatpush.msra.mxu0 %v300
    %330 = vmatpush.msra.mxu0 %v296
    %331 = vmatpush.msra.mxu0 %v292
    %332 = vmatpush.msra.mxu0 %v288
    %333 = vmatpush.msra.mxu0 %v284
    %334 = vmatpush.msra.mxu0 %v280
    %335 = vmatpush.msra.mxu0 %v276
    %336 = vmatpush.msra.mxu0 %v272
    %337 = vmatpush.msra.mxu0 %v268
    %338 = vmatpush.msra.mxu0 %v264
    %339 = vmatpush.msra.mxu0 %v260
    %340 = vmatpush.msra.mxu0 %v256
    %341 = vmatpush.msra.mxu0 %v252
    %342 = vmatmul.f32.gmra.mxu0 %v250
    %v343 = vpop.f32.mrf.mxu0
    %v344 = vadd.f32 %v318, %v343
    %345 = vdwg.mxu0
    %346 = vmatpush.msra.mxu0 %v313
    %347 = vmatpush.msra.mxu0 %v309
    %348 = vmatpush.msra.mxu0 %v305
    %349 = vmatpush.msra.mxu0 %v301
    %350 = vmatpush.msra.mxu0 %v297
    %351 = vmatpush.msra.mxu0 %v293
    %352 = vmatpush.msra.mxu0 %v289
    %353 = vmatpush.msra.mxu0 %v285
    %354 = vmatpush.msra.mxu0 %v281
    %355 = vmatpush.msra.mxu0 %v277
    %356 = vmatpush.msra.mxu0 %v273
    %357 = vmatpush.msra.mxu0 %v269
    %358 = vmatpush.msra.mxu0 %v265
    %359 = vmatpush.msra.mxu0 %v261
    %360 = vmatpush.msra.mxu0 %v257
    %361 = vmatpush.msra.mxu0 %v253
    %362 = vmatmul.f32.gmra.mxu0 %v250
    %v363 = vpop.f32.mrf.mxu0
    %v364 = vadd.f32 %v319, %v363
    %365 = vdwg.mxu0
    %366 = vmatpush.msra.mxu0 %v314
    %367 = vmatpush.msra.mxu0 %v310
    %368 = vmatpush.msra.mxu0 %v306
    %369 = vmatpush.msra.mxu0 %v302
    %370 = vmatpush.msra.mxu0 %v298
    %371 = vmatpush.msra.mxu0 %v294
    %372 = vmatpush.msra.mxu0 %v290
    %373 = vmatpush.msra.mxu0 %v286
    %374 = vmatpush.msra.mxu0 %v282
    %375 = vmatpush.msra.mxu0 %v278
    %376 = vmatpush.msra.mxu0 %v274
    %377 = vmatpush.msra.mxu0 %v270
    %378 = vmatpush.msra.mxu0 %v266
    %379 = vmatpush.msra.mxu0 %v262
    %380 = vmatpush.msra.mxu0 %v258
    %381 = vmatpush.msra.mxu0 %v254
    %382 = vmatmul.f32.gmra.mxu0 %v250
    %v383 = vpop.f32.mrf.mxu0
    %v384 = vadd.f32 %v320, %v383
    %385 = vdwg.mxu0
    %386 = vmatpush.msra.mxu0 %v315
    %387 = vmatpush.msra.mxu0 %v311
    %388 = vmatpush.msra.mxu0 %v307
    %389 = vmatpush.msra.mxu0 %v303
    %390 = vmatpush.msra.mxu0 %v299
    %391 = vmatpush.msra.mxu0 %v295
    %392 = vmatpush.msra.mxu0 %v291
    %393 = vmatpush.msra.mxu0 %v287
    %394 = vmatpush.msra.mxu0 %v283
    %395 = vmatpush.msra.mxu0 %v279
    %396 = vmatpush.msra.mxu0 %v275
    %397 = vmatpush.msra.mxu0 %v271
    %398 = vmatpush.msra.mxu0 %v267
    %399 = vmatpush.msra.mxu0 %v263
    %400 = vmatpush.msra.mxu0 %v259
    %401 = vmatpush.msra.mxu0 %v255
    %402 = vmatmul.f32.gmra.mxu0 %v250
    %v403 = vpop.f32.mrf.mxu0
    %v404 = vadd.f32 %v321, %v403
    %405 = vdwg.mxu0
    %v406 = vxor.u32 %v344, 2147483648
    %v407 = vxor.u32 %v364, 2147483648
    %v408 = vxor.u32 %v384, 2147483648
    %v409 = vxor.u32 %v404, 2147483648
    %v410 = vmul.f32 %v406, 1.442695
    %v411 = vpow.pop %v410
    %v412 = vmul.f32 %v407, 1.442695
    %v413 = vpow.pop %v412
    %v414 = vmul.f32 %v408, 1.442695
    %v415 = vpow.pop %v414
    %v416 = vmul.f32 %v409, 1.442695
    %v417 = vpow.pop %v416
    %v418 = vadd.f32 %v411, 1.0
    %v419 = vadd.f32 %v413, 1.0
    %v420 = vadd.f32 %v415, 1.0
    %v421 = vadd.f32 %v417, 1.0
    %v422 = vrcp.pop %v418
    %v423 = vmul.f32 %v418, %v422
    %v424 = vsub.f32 1.0, %v423
    %v425 = vmul.f32 %v422, %v424
    %v426 = vadd.f32 %v422, %v425
    %vm427 = vweird.f32 %v418
    %vm428 = vweird.f32 %v422
    %vm429 = vmor %vm427, %vm428
    %v430 = vsel %vm429, %v422, %v426
    %v431 = vand.u32 2147483647, %v418
    %vm432 = vcmp.eq.f32.partialorder %v431, 8.507059e+37
    %v433 = vand.u32 %v418, 2147483648
    %v434 = vor.u32 1.1754944e-38, %v433
    %v435 = vsel %vm432, %v434, %v430
    %v436 = vmul.f32 1.0, %v435
    %v437 = vrcp.pop %v419
    %v438 = vmul.f32 %v419, %v437
    %v439 = vsub.f32 1.0, %v438
    %v440 = vmul.f32 %v437, %v439
    %v441 = vadd.f32 %v437, %v440
    %vm442 = vweird.f32 %v419
    %vm443 = vweird.f32 %v437
    %vm444 = vmor %vm442, %vm443
    %v445 = vsel %vm444, %v437, %v441
    %v446 = vand.u32 2147483647, %v419
    %vm447 = vcmp.eq.f32.partialorder %v446, 8.507059e+37
    %v448 = vand.u32 %v419, 2147483648
    %v449 = vor.u32 1.1754944e-38, %v448
    %v450 = vsel %vm447, %v449, %v445
    %v451 = vmul.f32 1.0, %v450
    %v452 = vrcp.pop %v420
    %v453 = vmul.f32 %v420, %v452
    %v454 = vsub.f32 1.0, %v453
    %v455 = vmul.f32 %v452, %v454
    %v456 = vadd.f32 %v452, %v455
    %vm457 = vweird.f32 %v420
    %vm458 = vweird.f32 %v452
    %vm459 = vmor %vm457, %vm458
    %v460 = vsel %vm459, %v452, %v456
    %v461 = vand.u32 2147483647, %v420
    %vm462 = vcmp.eq.f32.partialorder %v461, 8.507059e+37
    %v463 = vand.u32 %v420, 2147483648
    %v464 = vor.u32 1.1754944e-38, %v463
    %v465 = vsel %vm462, %v464, %v460
    %v466 = vmul.f32 1.0, %v465
    %v467 = vrcp.pop %v421
    %v468 = vmul.f32 %v421, %v467
    %v469 = vsub.f32 1.0, %v468
    %v470 = vmul.f32 %v467, %v469
    %v471 = vadd.f32 %v467, %v470
    %vm472 = vweird.f32 %v421
    %vm473 = vweird.f32 %v467
    %vm474 = vmor %vm472, %vm473
    %v475 = vsel %vm474, %v467, %v471
    %v476 = vand.u32 2147483647, %v421
    %vm477 = vcmp.eq.f32.partialorder %v476, 8.507059e+37
    %v478 = vand.u32 %v421, 2147483648
    %v479 = vor.u32 1.1754944e-38, %v478
    %v480 = vsel %vm477, %v479, %v475
    %v481 = vmul.f32 1.0, %v480
    %v482 = vmul.f32 %v466, 2.0
    %v483 = vsub.f32 %v482, 1.0
    %v484 = vmul.f32 %v451, %v251
    %v485 = vmul.f32 %v436, %v483
    %v486 = vadd.f32 %v484, %v485
    %v487 = vtanh.pop %v486
    %v488 = vmul.f32 %v481, %v487
    %p489 = scmp.gt.s32.totalorder %s104, 0
    %s490 = scalar_select %p489, 1, 0
    %s491 = scvt.s32.f32 %s490
    %v492 = vstv %s491
    %v493 = vmul.f32 %v492, %v488
    %s494 = ssub.f32 1.0, %s491
    %v495 = vstv %s494
    %v496 = vmul.f32 %v495, %v250
    %v497 = vadd.f32 %v493, %v496
    %v498 = vmul.f32 %v492, %v486
    %v499 = vmul.f32 %v495, %v251
    %v500 = vadd.f32 %v498, %v499
    %501 = vst [vmem:[#allocation3] sm:$0x1] %v497
    %v502 = vld [vmem:[#allocation11] sm:$0xff]
    %v503 = vld [vmem:[#allocation11 + $0x8] sm:$0xff]
    %v504 = vld [vmem:[#allocation11 + $0x10] sm:$0xff]
    %v505 = vld [vmem:[#allocation11 + $0x18] sm:$0xff]
    %v506 = vld [vmem:[#allocation11 + $0x20] sm:$0xff]
    %v507 = vld [vmem:[#allocation11 + $0x28] sm:$0xff]
    %v508 = vld [vmem:[#allocation11 + $0x30] sm:$0xff]
    %v509 = vld [vmem:[#allocation11 + $0x38] sm:$0xff]
    %v510 = vld [vmem:[#allocation11 + $0x40] sm:$0xff]
    %v511 = vld [vmem:[#allocation11 + $0x48] sm:$0xff]
    %v512 = vld [vmem:[#allocation11 + $0x50] sm:$0xff]
    %v513 = vld [vmem:[#allocation11 + $0x58] sm:$0xff]
    %v514 = vld [vmem:[#allocation11 + $0x60] sm:$0xff]
    %v515 = vld [vmem:[#allocation11 + $0x68] sm:$0xff]
    %v516 = vld [vmem:[#allocation11 + $0x70] sm:$0xff]
    %v517 = vld [vmem:[#allocation11 + $0x78] sm:$0xff]
    %v518 = vld [vmem:[#allocation11 + $0x80] sm:$0xff]
    %v519 = vld [vmem:[#allocation11 + $0x88] sm:$0xff]
    %v520 = vld [vmem:[#allocation11 + $0x90] sm:$0xff]
    %v521 = vld [vmem:[#allocation11 + $0x98] sm:$0xff]
    %v522 = vld [vmem:[#allocation11 + $0xa0] sm:$0xff]
    %v523 = vld [vmem:[#allocation11 + $0xa8] sm:$0xff]
    %v524 = vld [vmem:[#allocation11 + $0xb0] sm:$0xff]
    %v525 = vld [vmem:[#allocation11 + $0xb8] sm:$0xff]
    %v526 = vld [vmem:[#allocation11 + $0xc0] sm:$0xff]
    %v527 = vld [vmem:[#allocation11 + $0xc8] sm:$0xff]
    %v528 = vld [vmem:[#allocation11 + $0xd0] sm:$0xff]
    %v529 = vld [vmem:[#allocation11 + $0xd8] sm:$0xff]
    %v530 = vld [vmem:[#allocation11 + $0xe0] sm:$0xff]
    %v531 = vld [vmem:[#allocation11 + $0xe8] sm:$0xff]
    %v532 = vld [vmem:[#allocation11 + $0xf0] sm:$0xff]
    %v533 = vld [vmem:[#allocation11 + $0xf8] sm:$0xff]
    %v534 = vld [vmem:[#allocation11 + $0x100] sm:$0xff]
    %v535 = vld [vmem:[#allocation11 + $0x108] sm:$0xff]
    %v536 = vld [vmem:[#allocation11 + $0x110] sm:$0xff]
    %v537 = vld [vmem:[#allocation11 + $0x118] sm:$0xff]
    %v538 = vld [vmem:[#allocation11 + $0x120] sm:$0xff]
    %v539 = vld [vmem:[#allocation11 + $0x128] sm:$0xff]
    %v540 = vld [vmem:[#allocation11 + $0x130] sm:$0xff]
    %v541 = vld [vmem:[#allocation11 + $0x138] sm:$0xff]
    %v542 = vld [vmem:[#allocation11 + $0x140] sm:$0xff]
    %v543 = vld [vmem:[#allocation11 + $0x148] sm:$0xff]
    %v544 = vld [vmem:[#allocation11 + $0x150] sm:$0xff]
    %v545 = vld [vmem:[#allocation11 + $0x158] sm:$0xff]
    %v546 = vld [vmem:[#allocation11 + $0x160] sm:$0xff]
    %v547 = vld [vmem:[#allocation11 + $0x168] sm:$0xff]
    %v548 = vld [vmem:[#allocation11 + $0x170] sm:$0xff]
    %v549 = vld [vmem:[#allocation11 + $0x178] sm:$0xff]
    %v550 = vld [vmem:[#allocation11 + $0x180] sm:$0xff]
    %v551 = vld [vmem:[#allocation11 + $0x188] sm:$0xff]
    %v552 = vld [vmem:[#allocation11 + $0x190] sm:$0xff]
    %v553 = vld [vmem:[#allocation11 + $0x198] sm:$0xff]
    %v554 = vld [vmem:[#allocation11 + $0x1a0] sm:$0xff]
    %v555 = vld [vmem:[#allocation11 + $0x1a8] sm:$0xff]
    %v556 = vld [vmem:[#allocation11 + $0x1b0] sm:$0xff]
    %v557 = vld [vmem:[#allocation11 + $0x1b8] sm:$0xff]
    %v558 = vld [vmem:[#allocation11 + $0x1c0] sm:$0xff]
    %v559 = vld [vmem:[#allocation11 + $0x1c8] sm:$0xff]
    %v560 = vld [vmem:[#allocation11 + $0x1d0] sm:$0xff]
    %v561 = vld [vmem:[#allocation11 + $0x1d8] sm:$0xff]
    %v562 = vld [vmem:[#allocation11 + $0x1e0] sm:$0xff]
    %v563 = vld [vmem:[#allocation11 + $0x1e8] sm:$0xff]
    %v564 = vld [vmem:[#allocation11 + $0x1f0] sm:$0xff]
    %v565 = vld [vmem:[#allocation11 + $0x1f8] sm:$0xff]
    %s566 = scalar_lea.vmem [#allocation2], 1
    %v567 = vld [vmem:[%s566] ss:$8 sm:$0xf]
    %v569 = vperm.slane %v567, 0
    %v570 = vperm.slane %v567, 1
    %v571 = vperm.slane %v567, 2
    %v572 = vperm.slane %v567, 3
    %577 = vmatpush.msra.mxu0 %v562
    %578 = vmatpush.msra.mxu0 %v558
    %579 = vmatpush.msra.mxu0 %v554
    %580 = vmatpush.msra.mxu0 %v550
    %581 = vmatpush.msra.mxu0 %v546
    %582 = vmatpush.msra.mxu0 %v542
    %583 = vmatpush.msra.mxu0 %v538
    %584 = vmatpush.msra.mxu0 %v534
    %585 = vmatpush.msra.mxu0 %v530
    %586 = vmatpush.msra.mxu0 %v526
    %587 = vmatpush.msra.mxu0 %v522
    %588 = vmatpush.msra.mxu0 %v518
    %589 = vmatpush.msra.mxu0 %v514
    %590 = vmatpush.msra.mxu0 %v510
    %591 = vmatpush.msra.mxu0 %v506
    %592 = vmatpush.msra.mxu0 %v502
    %593 = vmatmul.f32.gmra.mxu0 %v497
    %v594 = vpop.f32.mrf.mxu0
    %v595 = vadd.f32 %v569, %v594
    %596 = vdwg.mxu0
    %597 = vmatpush.msra.mxu0 %v563
    %598 = vmatpush.msra.mxu0 %v559
    %599 = vmatpush.msra.mxu0 %v555
    %600 = vmatpush.msra.mxu0 %v551
    %601 = vmatpush.msra.mxu0 %v547
    %602 = vmatpush.msra.mxu0 %v543
    %603 = vmatpush.msra.mxu0 %v539
    %604 = vmatpush.msra.mxu0 %v535
    %605 = vmatpush.msra.mxu0 %v531
    %606 = vmatpush.msra.mxu0 %v527
    %607 = vmatpush.msra.mxu0 %v523
    %608 = vmatpush.msra.mxu0 %v519
    %609 = vmatpush.msra.mxu0 %v515
    %610 = vmatpush.msra.mxu0 %v511
    %611 = vmatpush.msra.mxu0 %v507
    %612 = vmatpush.msra.mxu0 %v503
    %613 = vmatmul.f32.gmra.mxu0 %v497
    %v614 = vpop.f32.mrf.mxu0
    %v615 = vadd.f32 %v570, %v614
    %616 = vdwg.mxu0
    %617 = vmatpush.msra.mxu0 %v564
    %618 = vmatpush.msra.mxu0 %v560
    %619 = vmatpush.msra.mxu0 %v556
    %620 = vmatpush.msra.mxu0 %v552
    %621 = vmatpush.msra.mxu0 %v548
    %622 = vmatpush.msra.mxu0 %v544
    %623 = vmatpush.msra.mxu0 %v540
    %624 = vmatpush.msra.mxu0 %v536
    %625 = vmatpush.msra.mxu0 %v532
    %626 = vmatpush.msra.mxu0 %v528
    %627 = vmatpush.msra.mxu0 %v524
    %628 = vmatpush.msra.mxu0 %v520
    %629 = vmatpush.msra.mxu0 %v516
    %630 = vmatpush.msra.mxu0 %v512
    %631 = vmatpush.msra.mxu0 %v508
    %632 = vmatpush.msra.mxu0 %v504
    %633 = vmatmul.f32.gmra.mxu0 %v497
    %v634 = vpop.f32.mrf.mxu0
    %v635 = vadd.f32 %v571, %v634
    %636 = vdwg.mxu0
    %637 = vmatpush.msra.mxu0 %v565
    %638 = vmatpush.msra.mxu0 %v561
    %639 = vmatpush.msra.mxu0 %v557
    %640 = vmatpush.msra.mxu0 %v553
    %641 = vmatpush.msra.mxu0 %v549
    %642 = vmatpush.msra.mxu0 %v545
    %643 = vmatpush.msra.mxu0 %v541
    %644 = vmatpush.msra.mxu0 %v537
    %645 = vmatpush.msra.mxu0 %v533
    %646 = vmatpush.msra.mxu0 %v529
    %647 = vmatpush.msra.mxu0 %v525
    %648 = vmatpush.msra.mxu0 %v521
    %649 = vmatpush.msra.mxu0 %v517
    %650 = vmatpush.msra.mxu0 %v513
    %651 = vmatpush.msra.mxu0 %v509
    %652 = vmatpush.msra.mxu0 %v505
    %653 = vmatmul.f32.gmra.mxu0 %v497
    %v654 = vpop.f32.mrf.mxu0
    %v655 = vadd.f32 %v572, %v654
    %656 = vdwg.mxu0
    %v657 = vxor.u32 %v595, 2147483648
    %v658 = vxor.u32 %v615, 2147483648
    %v659 = vxor.u32 %v635, 2147483648
    %v660 = vxor.u32 %v655, 2147483648
    %v661 = vmul.f32 %v657, 1.442695
    %v662 = vpow.pop %v661
    %v663 = vmul.f32 %v658, 1.442695
    %v664 = vpow.pop %v663
    %v665 = vmul.f32 %v659, 1.442695
    %v666 = vpow.pop %v665
    %v667 = vmul.f32 %v660, 1.442695
    %v668 = vpow.pop %v667
    %v669 = vadd.f32 %v662, 1.0
    %v670 = vadd.f32 %v664, 1.0
    %v671 = vadd.f32 %v666, 1.0
    %v672 = vadd.f32 %v668, 1.0
    %v673 = vrcp.pop %v669
    %v674 = vmul.f32 %v669, %v673
    %v675 = vsub.f32 1.0, %v674
    %v676 = vmul.f32 %v673, %v675
    %v677 = vadd.f32 %v673, %v676
    %vm678 = vweird.f32 %v669
    %vm679 = vweird.f32 %v673
    %vm680 = vmor %vm678, %vm679
    %v681 = vsel %vm680, %v673, %v677
    %v682 = vand.u32 2147483647, %v669
    %vm683 = vcmp.eq.f32.partialorder %v682, 8.507059e+37
    %v684 = vand.u32 %v669, 2147483648
    %v685 = vor.u32 1.1754944e-38, %v684
    %v686 = vsel %vm683, %v685, %v681
    %v687 = vmul.f32 1.0, %v686
    %v688 = vrcp.pop %v670
    %v689 = vmul.f32 %v670, %v688
    %v690 = vsub.f32 1.0, %v689
    %v691 = vmul.f32 %v688, %v690
    %v692 = vadd.f32 %v688, %v691
    %vm693 = vweird.f32 %v670
    %vm694 = vweird.f32 %v688
    %vm695 = vmor %vm693, %vm694
    %v696 = vsel %vm695, %v688, %v692
    %v697 = vand.u32 2147483647, %v670
    %vm698 = vcmp.eq.f32.partialorder %v697, 8.507059e+37
    %v699 = vand.u32 %v670, 2147483648
    %v700 = vor.u32 1.1754944e-38, %v699
    %v701 = vsel %vm698, %v700, %v696
    %v702 = vmul.f32 1.0, %v701
    %v703 = vrcp.pop %v671
    %v704 = vmul.f32 %v671, %v703
    %v705 = vsub.f32 1.0, %v704
    %v706 = vmul.f32 %v703, %v705
    %v707 = vadd.f32 %v703, %v706
    %vm708 = vweird.f32 %v671
    %vm709 = vweird.f32 %v703
    %vm710 = vmor %vm708, %vm709
    %v711 = vsel %vm710, %v703, %v707
    %v712 = vand.u32 2147483647, %v671
    %vm713 = vcmp.eq.f32.partialorder %v712, 8.507059e+37
    %v714 = vand.u32 %v671, 2147483648
    %v715 = vor.u32 1.1754944e-38, %v714
    %v716 = vsel %vm713, %v715, %v711
    %v717 = vmul.f32 1.0, %v716
    %v718 = vrcp.pop %v672
    %v719 = vmul.f32 %v672, %v718
    %v720 = vsub.f32 1.0, %v719
    %v721 = vmul.f32 %v718, %v720
    %v722 = vadd.f32 %v718, %v721
    %vm723 = vweird.f32 %v672
    %vm724 = vweird.f32 %v718
    %vm725 = vmor %vm723, %vm724
    %v726 = vsel %vm725, %v718, %v722
    %v727 = vand.u32 2147483647, %v672
    %vm728 = vcmp.eq.f32.partialorder %v727, 8.507059e+37
    %v729 = vand.u32 %v672, 2147483648
    %v730 = vor.u32 1.1754944e-38, %v729
    %v731 = vsel %vm728, %v730, %v726
    %v732 = vmul.f32 1.0, %v731
    %v733 = vmul.f32 %v717, 2.0
    %v734 = vsub.f32 %v733, 1.0
    %v735 = vmul.f32 %v702, %v500
    %v736 = vmul.f32 %v687, %v734
    %v737 = vadd.f32 %v735, %v736
    %v738 = vtanh.pop %v737
    %v739 = vmul.f32 %v732, %v738
    %p740 = scmp.gt.s32.totalorder %s104, 1
    %s741 = scalar_select %p740, 1, 0
    %s742 = scvt.s32.f32 %s741
    %v743 = vstv %s742
    %v744 = vmul.f32 %v743, %v739
    %s745 = ssub.f32 1.0, %s742
    %v746 = vstv %s745
    %v747 = vmul.f32 %v746, %v497
    %v748 = vadd.f32 %v744, %v747
    %v749 = vmul.f32 %v743, %v737
    %v750 = vmul.f32 %v746, %v500
    %v751 = vadd.f32 %v749, %v750
    %752 = vst [vmem:[#allocation3 + $0x1] sm:$0x1] %v748
    %v753 = vld [vmem:[#allocation11] sm:$0xff]
    %v754 = vld [vmem:[#allocation11 + $0x8] sm:$0xff]
    %v755 = vld [vmem:[#allocation11 + $0x10] sm:$0xff]
    %v756 = vld [vmem:[#allocation11 + $0x18] sm:$0xff]
    %v757 = vld [vmem:[#allocation11 + $0x20] sm:$0xff]
    %v758 = vld [vmem:[#allocation11 + $0x28] sm:$0xff]
    %v759 = vld [vmem:[#allocation11 + $0x30] sm:$0xff]
    %v760 = vld [vmem:[#allocation11 + $0x38] sm:$0xff]
    %v761 = vld [vmem:[#allocation11 + $0x40] sm:$0xff]
    %v762 = vld [vmem:[#allocation11 + $0x48] sm:$0xff]
    %v763 = vld [vmem:[#allocation11 + $0x50] sm:$0xff]
    %v764 = vld [vmem:[#allocation11 + $0x58] sm:$0xff]
    %v765 = vld [vmem:[#allocation11 + $0x60] sm:$0xff]
    %v766 = vld [vmem:[#allocation11 + $0x68] sm:$0xff]
    %v767 = vld [vmem:[#allocation11 + $0x70] sm:$0xff]
    %v768 = vld [vmem:[#allocation11 + $0x78] sm:$0xff]
    %v769 = vld [vmem:[#allocation11 + $0x80] sm:$0xff]
    %v770 = vld [vmem:[#allocation11 + $0x88] sm:$0xff]
    %v771 = vld [vmem:[#allocation11 + $0x90] sm:$0xff]
    %v772 = vld [vmem:[#allocation11 + $0x98] sm:$0xff]
    %v773 = vld [vmem:[#allocation11 + $0xa0] sm:$0xff]
    %v774 = vld [vmem:[#allocation11 + $0xa8] sm:$0xff]
    %v775 = vld [vmem:[#allocation11 + $0xb0] sm:$0xff]
    %v776 = vld [vmem:[#allocation11 + $0xb8] sm:$0xff]
    %v777 = vld [vmem:[#allocation11 + $0xc0] sm:$0xff]
    %v778 = vld [vmem:[#allocation11 + $0xc8] sm:$0xff]
    %v779 = vld [vmem:[#allocation11 + $0xd0] sm:$0xff]
    %v780 = vld [vmem:[#allocation11 + $0xd8] sm:$0xff]
    %v781 = vld [vmem:[#allocation11 + $0xe0] sm:$0xff]
    %v782 = vld [vmem:[#allocation11 + $0xe8] sm:$0xff]
    %v783 = vld [vmem:[#allocation11 + $0xf0] sm:$0xff]
    %v784 = vld [vmem:[#allocation11 + $0xf8] sm:$0xff]
    %v785 = vld [vmem:[#allocation11 + $0x100] sm:$0xff]
    %v786 = vld [vmem:[#allocation11 + $0x108] sm:$0xff]
    %v787 = vld [vmem:[#allocation11 + $0x110] sm:$0xff]
    %v788 = vld [vmem:[#allocation11 + $0x118] sm:$0xff]
    %v789 = vld [vmem:[#allocation11 + $0x120] sm:$0xff]
    %v790 = vld [vmem:[#allocation11 + $0x128] sm:$0xff]
    %v791 = vld [vmem:[#allocation11 + $0x130] sm:$0xff]
    %v792 = vld [vmem:[#allocation11 + $0x138] sm:$0xff]
    %v793 = vld [vmem:[#allocation11 + $0x140] sm:$0xff]
    %v794 = vld [vmem:[#allocation11 + $0x148] sm:$0xff]
    %v795 = vld [vmem:[#allocation11 + $0x150] sm:$0xff]
    %v796 = vld [vmem:[#allocation11 + $0x158] sm:$0xff]
    %v797 = vld [vmem:[#allocation11 + $0x160] sm:$0xff]
    %v798 = vld [vmem:[#allocation11 + $0x168] sm:$0xff]
    %v799 = vld [vmem:[#allocation11 + $0x170] sm:$0xff]
    %v800 = vld [vmem:[#allocation11 + $0x178] sm:$0xff]
    %v801 = vld [vmem:[#allocation11 + $0x180] sm:$0xff]
    %v802 = vld [vmem:[#allocation11 + $0x188] sm:$0xff]
    %v803 = vld [vmem:[#allocation11 + $0x190] sm:$0xff]
    %v804 = vld [vmem:[#allocation11 + $0x198] sm:$0xff]
    %v805 = vld [vmem:[#allocation11 + $0x1a0] sm:$0xff]
    %v806 = vld [vmem:[#allocation11 + $0x1a8] sm:$0xff]
    %v807 = vld [vmem:[#allocation11 + $0x1b0] sm:$0xff]
    %v808 = vld [vmem:[#allocation11 + $0x1b8] sm:$0xff]
    %v809 = vld [vmem:[#allocation11 + $0x1c0] sm:$0xff]
    %v810 = vld [vmem:[#allocation11 + $0x1c8] sm:$0xff]
    %v811 = vld [vmem:[#allocation11 + $0x1d0] sm:$0xff]
    %v812 = vld [vmem:[#allocation11 + $0x1d8] sm:$0xff]
    %v813 = vld [vmem:[#allocation11 + $0x1e0] sm:$0xff]
    %v814 = vld [vmem:[#allocation11 + $0x1e8] sm:$0xff]
    %v815 = vld [vmem:[#allocation11 + $0x1f0] sm:$0xff]
    %v816 = vld [vmem:[#allocation11 + $0x1f8] sm:$0xff]
    %s817 = scalar_lea.vmem [#allocation2], 2
    %v818 = vld [vmem:[%s817] ss:$8 sm:$0xf]
    %v820 = vperm.slane %v818, 0
    %v821 = vperm.slane %v818, 1
    %v822 = vperm.slane %v818, 2
    %v823 = vperm.slane %v818, 3
    %828 = vmatpush.msra.mxu0 %v813
    %829 = vmatpush.msra.mxu0 %v809
    %830 = vmatpush.msra.mxu0 %v805
    %831 = vmatpush.msra.mxu0 %v801
    %832 = vmatpush.msra.mxu0 %v797
    %833 = vmatpush.msra.mxu0 %v793
    %834 = vmatpush.msra.mxu0 %v789
    %835 = vmatpush.msra.mxu0 %v785
    %836 = vmatpush.msra.mxu0 %v781
    %837 = vmatpush.msra.mxu0 %v777
    %838 = vmatpush.msra.mxu0 %v773
    %839 = vmatpush.msra.mxu0 %v769
    %840 = vmatpush.msra.mxu0 %v765
    %841 = vmatpush.msra.mxu0 %v761
    %842 = vmatpush.msra.mxu0 %v757
    %843 = vmatpush.msra.mxu0 %v753
    %844 = vmatmul.f32.gmra.mxu0 %v748
    %v845 = vpop.f32.mrf.mxu0
    %v846 = vadd.f32 %v820, %v845
    %847 = vdwg.mxu0
    %848 = vmatpush.msra.mxu0 %v814
    %849 = vmatpush.msra.mxu0 %v810
    %850 = vmatpush.msra.mxu0 %v806
    %851 = vmatpush.msra.mxu0 %v802
    %852 = vmatpush.msra.mxu0 %v798
    %853 = vmatpush.msra.mxu0 %v794
    %854 = vmatpush.msra.mxu0 %v790
    %855 = vmatpush.msra.mxu0 %v786
    %856 = vmatpush.msra.mxu0 %v782
    %857 = vmatpush.msra.mxu0 %v778
    %858 = vmatpush.msra.mxu0 %v774
    %859 = vmatpush.msra.mxu0 %v770
    %860 = vmatpush.msra.mxu0 %v766
    %861 = vmatpush.msra.mxu0 %v762
    %862 = vmatpush.msra.mxu0 %v758
    %863 = vmatpush.msra.mxu0 %v754
    %864 = vmatmul.f32.gmra.mxu0 %v748
    %v865 = vpop.f32.mrf.mxu0
    %v866 = vadd.f32 %v821, %v865
    %867 = vdwg.mxu0
    %868 = vmatpush.msra.mxu0 %v815
    %869 = vmatpush.msra.mxu0 %v811
    %870 = vmatpush.msra.mxu0 %v807
    %871 = vmatpush.msra.mxu0 %v803
    %872 = vmatpush.msra.mxu0 %v799
    %873 = vmatpush.msra.mxu0 %v795
    %874 = vmatpush.msra.mxu0 %v791
    %875 = vmatpush.msra.mxu0 %v787
    %876 = vmatpush.msra.mxu0 %v783
    %877 = vmatpush.msra.mxu0 %v779
    %878 = vmatpush.msra.mxu0 %v775
    %879 = vmatpush.msra.mxu0 %v771
    %880 = vmatpush.msra.mxu0 %v767
    %881 = vmatpush.msra.mxu0 %v763
    %882 = vmatpush.msra.mxu0 %v759
    %883 = vmatpush.msra.mxu0 %v755
    %884 = vmatmul.f32.gmra.mxu0 %v748
    %v885 = vpop.f32.mrf.mxu0
    %v886 = vadd.f32 %v822, %v885
    %887 = vdwg.mxu0
    %888 = vmatpush.msra.mxu0 %v816
    %889 = vmatpush.msra.mxu0 %v812
    %890 = vmatpush.msra.mxu0 %v808
    %891 = vmatpush.msra.mxu0 %v804
    %892 = vmatpush.msra.mxu0 %v800
    %893 = vmatpush.msra.mxu0 %v796
    %894 = vmatpush.msra.mxu0 %v792
    %895 = vmatpush.msra.mxu0 %v788
    %896 = vmatpush.msra.mxu0 %v784
    %897 = vmatpush.msra.mxu0 %v780
    %898 = vmatpush.msra.mxu0 %v776
    %899 = vmatpush.msra.mxu0 %v772
    %900 = vmatpush.msra.mxu0 %v768
    %901 = vmatpush.msra.mxu0 %v764
    %902 = vmatpush.msra.mxu0 %v760
    %903 = vmatpush.msra.mxu0 %v756
    %904 = vmatmul.f32.gmra.mxu0 %v748
    %v905 = vpop.f32.mrf.mxu0
    %v906 = vadd.f32 %v823, %v905
    %907 = vdwg.mxu0
    %v908 = vxor.u32 %v846, 2147483648
    %v909 = vxor.u32 %v866, 2147483648
    %v910 = vxor.u32 %v886, 2147483648
    %v911 = vxor.u32 %v906, 2147483648
    %v912 = vmul.f32 %v908, 1.442695
    %v913 = vpow.pop %v912
    %v914 = vmul.f32 %v909, 1.442695
    %v915 = vpow.pop %v914
    %v916 = vmul.f32 %v910, 1.442695
    %v917 = vpow.pop %v916
    %v918 = vmul.f32 %v911, 1.442695
    %v919 = vpow.pop %v918
    %v920 = vadd.f32 %v913, 1.0
    %v921 = vadd.f32 %v915, 1.0
    %v922 = vadd.f32 %v917, 1.0
    %v923 = vadd.f32 %v919, 1.0
    %v924 = vrcp.pop %v920
    %v925 = vmul.f32 %v920, %v924
    %v926 = vsub.f32 1.0, %v925
    %v927 = vmul.f32 %v924, %v926
    %v928 = vadd.f32 %v924, %v927
    %vm929 = vweird.f32 %v920
    %vm930 = vweird.f32 %v924
    %vm931 = vmor %vm929, %vm930
    %v932 = vsel %vm931, %v924, %v928
    %v933 = vand.u32 2147483647, %v920
    %vm934 = vcmp.eq.f32.partialorder %v933, 8.507059e+37
    %v935 = vand.u32 %v920, 2147483648
    %v936 = vor.u32 1.1754944e-38, %v935
    %v937 = vsel %vm934, %v936, %v932
    %v938 = vmul.f32 1.0, %v937
    %v939 = vrcp.pop %v921
    %v940 = vmul.f32 %v921, %v939
    %v941 = vsub.f32 1.0, %v940
    %v942 = vmul.f32 %v939, %v941
    %v943 = vadd.f32 %v939, %v942
    %vm944 = vweird.f32 %v921
    %vm945 = vweird.f32 %v939
    %vm946 = vmor %vm944, %vm945
    %v947 = vsel %vm946, %v939, %v943
    %v948 = vand.u32 2147483647, %v921
    %vm949 = vcmp.eq.f32.partialorder %v948, 8.507059e+37
    %v950 = vand.u32 %v921, 2147483648
    %v951 = vor.u32 1.1754944e-38, %v950
    %v952 = vsel %vm949, %v951, %v947
    %v953 = vmul.f32 1.0, %v952
    %v954 = vrcp.pop %v922
    %v955 = vmul.f32 %v922, %v954
    %v956 = vsub.f32 1.0, %v955
    %v957 = vmul.f32 %v954, %v956
    %v958 = vadd.f32 %v954, %v957
    %vm959 = vweird.f32 %v922
    %vm960 = vweird.f32 %v954
    %vm961 = vmor %vm959, %vm960
    %v962 = vsel %vm961, %v954, %v958
    %v963 = vand.u32 2147483647, %v922
    %vm964 = vcmp.eq.f32.partialorder %v963, 8.507059e+37
    %v965 = vand.u32 %v922, 2147483648
    %v966 = vor.u32 1.1754944e-38, %v965
    %v967 = vsel %vm964, %v966, %v962
    %v968 = vmul.f32 1.0, %v967
    %v969 = vrcp.pop %v923
    %v970 = vmul.f32 %v923, %v969
    %v971 = vsub.f32 1.0, %v970
    %v972 = vmul.f32 %v969, %v971
    %v973 = vadd.f32 %v969, %v972
    %vm974 = vweird.f32 %v923
    %vm975 = vweird.f32 %v969
    %vm976 = vmor %vm974, %vm975
    %v977 = vsel %vm976, %v969, %v973
    %v978 = vand.u32 2147483647, %v923
    %vm979 = vcmp.eq.f32.partialorder %v978, 8.507059e+37
    %v980 = vand.u32 %v923, 2147483648
    %v981 = vor.u32 1.1754944e-38, %v980
    %v982 = vsel %vm979, %v981, %v977
    %v983 = vmul.f32 1.0, %v982
    %v984 = vmul.f32 %v968, 2.0
    %v985 = vsub.f32 %v984, 1.0
    %v986 = vmul.f32 %v953, %v751
    %v987 = vmul.f32 %v938, %v985
    %v988 = vadd.f32 %v986, %v987
    %v989 = vtanh.pop %v988
    %v990 = vmul.f32 %v983, %v989
    %p991 = scmp.gt.s32.totalorder %s104, 2
    %s992 = scalar_select %p991, 1, 0
    %s993 = scvt.s32.f32 %s992
    %v994 = vstv %s993
    %v995 = vmul.f32 %v994, %v990
    %s996 = ssub.f32 1.0, %s993
    %v997 = vstv %s996
    %v998 = vmul.f32 %v997, %v748
    %v999 = vadd.f32 %v995, %v998
    %v1000 = vmul.f32 %v994, %v988
    %v1001 = vmul.f32 %v997, %v751
    %v1002 = vadd.f32 %v1000, %v1001
    %1003 = vst [vmem:[#allocation3 + $0x2] sm:$0x1] %v999
    %v1004 = vld [vmem:[#allocation11] sm:$0xff]
    %v1005 = vld [vmem:[#allocation11 + $0x8] sm:$0xff]
    %v1006 = vld [vmem:[#allocation11 + $0x10] sm:$0xff]
    %v1007 = vld [vmem:[#allocation11 + $0x18] sm:$0xff]
    %v1008 = vld [vmem:[#allocation11 + $0x20] sm:$0xff]
    %v1009 = vld [vmem:[#allocation11 + $0x28] sm:$0xff]
    %v1010 = vld [vmem:[#allocation11 + $0x30] sm:$0xff]
    %v1011 = vld [vmem:[#allocation11 + $0x38] sm:$0xff]
    %v1012 = vld [vmem:[#allocation11 + $0x40] sm:$0xff]
    %v1013 = vld [vmem:[#allocation11 + $0x48] sm:$0xff]
    %v1014 = vld [vmem:[#allocation11 + $0x50] sm:$0xff]
    %v1015 = vld [vmem:[#allocation11 + $0x58] sm:$0xff]
    %v1016 = vld [vmem:[#allocation11 + $0x60] sm:$0xff]
    %v1017 = vld [vmem:[#allocation11 + $0x68] sm:$0xff]
    %v1018 = vld [vmem:[#allocation11 + $0x70] sm:$0xff]
    %v1019 = vld [vmem:[#allocation11 + $0x78] sm:$0xff]
    %v1020 = vld [vmem:[#allocation11 + $0x80] sm:$0xff]
    %v1021 = vld [vmem:[#allocation11 + $0x88] sm:$0xff]
    %v1022 = vld [vmem:[#allocation11 + $0x90] sm:$0xff]
    %v1023 = vld [vmem:[#allocation11 + $0x98] sm:$0xff]
    %v1024 = vld [vmem:[#allocation11 + $0xa0] sm:$0xff]
    %v1025 = vld [vmem:[#allocation11 + $0xa8] sm:$0xff]
    %v1026 = vld [vmem:[#allocation11 + $0xb0] sm:$0xff]
    %v1027 = vld [vmem:[#allocation11 + $0xb8] sm:$0xff]
    %v1028 = vld [vmem:[#allocation11 + $0xc0] sm:$0xff]
    %v1029 = vld [vmem:[#allocation11 + $0xc8] sm:$0xff]
    %v1030 = vld [vmem:[#allocation11 + $0xd0] sm:$0xff]
    %v1031 = vld [vmem:[#allocation11 + $0xd8] sm:$0xff]
    %v1032 = vld [vmem:[#allocation11 + $0xe0] sm:$0xff]
    %v1033 = vld [vmem:[#allocation11 + $0xe8] sm:$0xff]
    %v1034 = vld [vmem:[#allocation11 + $0xf0] sm:$0xff]
    %v1035 = vld [vmem:[#allocation11 + $0xf8] sm:$0xff]
    %v1036 = vld [vmem:[#allocation11 + $0x100] sm:$0xff]
    %v1037 = vld [vmem:[#allocation11 + $0x108] sm:$0xff]
    %v1038 = vld [vmem:[#allocation11 + $0x110] sm:$0xff]
    %v1039 = vld [vmem:[#allocation11 + $0x118] sm:$0xff]
    %v1040 = vld [vmem:[#allocation11 + $0x120] sm:$0xff]
    %v1041 = vld [vmem:[#allocation11 + $0x128] sm:$0xff]
    %v1042 = vld [vmem:[#allocation11 + $0x130] sm:$0xff]
    %v1043 = vld [vmem:[#allocation11 + $0x138] sm:$0xff]
    %v1044 = vld [vmem:[#allocation11 + $0x140] sm:$0xff]
    %v1045 = vld [vmem:[#allocation11 + $0x148] sm:$0xff]
    %v1046 = vld [vmem:[#allocation11 + $0x150] sm:$0xff]
    %v1047 = vld [vmem:[#allocation11 + $0x158] sm:$0xff]
    %v1048 = vld [vmem:[#allocation11 + $0x160] sm:$0xff]
    %v1049 = vld [vmem:[#allocation11 + $0x168] sm:$0xff]
    %v1050 = vld [vmem:[#allocation11 + $0x170] sm:$0xff]
    %v1051 = vld [vmem:[#allocation11 + $0x178] sm:$0xff]
    %v1052 = vld [vmem:[#allocation11 + $0x180] sm:$0xff]
    %v1053 = vld [vmem:[#allocation11 + $0x188] sm:$0xff]
    %v1054 = vld [vmem:[#allocation11 + $0x190] sm:$0xff]
    %v1055 = vld [vmem:[#allocation11 + $0x198] sm:$0xff]
    %v1056 = vld [vmem:[#allocation11 + $0x1a0] sm:$0xff]
    %v1057 = vld [vmem:[#allocation11 + $0x1a8] sm:$0xff]
    %v1058 = vld [vmem:[#allocation11 + $0x1b0] sm:$0xff]
    %v1059 = vld [vmem:[#allocation11 + $0x1b8] sm:$0xff]
    %v1060 = vld [vmem:[#allocation11 + $0x1c0] sm:$0xff]
    %v1061 = vld [vmem:[#allocation11 + $0x1c8] sm:$0xff]
    %v1062 = vld [vmem:[#allocation11 + $0x1d0] sm:$0xff]
    %v1063 = vld [vmem:[#allocation11 + $0x1d8] sm:$0xff]
    %v1064 = vld [vmem:[#allocation11 + $0x1e0] sm:$0xff]
    %v1065 = vld [vmem:[#allocation11 + $0x1e8] sm:$0xff]
    %v1066 = vld [vmem:[#allocation11 + $0x1f0] sm:$0xff]
    %v1067 = vld [vmem:[#allocation11 + $0x1f8] sm:$0xff]
    %s1068 = scalar_lea.vmem [#allocation2], 3
    %v1069 = vld [vmem:[%s1068] ss:$8 sm:$0xf]
    %v1071 = vperm.slane %v1069, 0
    %v1072 = vperm.slane %v1069, 1
    %v1073 = vperm.slane %v1069, 2
    %v1074 = vperm.slane %v1069, 3
    %1079 = vmatpush.msra.mxu0 %v1064
    %1080 = vmatpush.msra.mxu0 %v1060
    %1081 = vmatpush.msra.mxu0 %v1056
    %1082 = vmatpush.msra.mxu0 %v1052
    %1083 = vmatpush.msra.mxu0 %v1048
    %1084 = vmatpush.msra.mxu0 %v1044
    %1085 = vmatpush.msra.mxu0 %v1040
    %1086 = vmatpush.msra.mxu0 %v1036
    %1087 = vmatpush.msra.mxu0 %v1032
    %1088 = vmatpush.msra.mxu0 %v1028
    %1089 = vmatpush.msra.mxu0 %v1024
    %1090 = vmatpush.msra.mxu0 %v1020
    %1091 = vmatpush.msra.mxu0 %v1016
    %1092 = vmatpush.msra.mxu0 %v1012
    %1093 = vmatpush.msra.mxu0 %v1008
    %1094 = vmatpush.msra.mxu0 %v1004
    %1095 = vmatmul.f32.gmra.mxu0 %v999
    %v1096 = vpop.f32.mrf.mxu0
    %v1097 = vadd.f32 %v1071, %v1096
    %1098 = vdwg.mxu0
    %1099 = vmatpush.msra.mxu0 %v1065
    %1100 = vmatpush.msra.mxu0 %v1061
    %1101 = vmatpush.msra.mxu0 %v1057
    %1102 = vmatpush.msra.mxu0 %v1053
    %1103 = vmatpush.msra.mxu0 %v1049
    %1104 = vmatpush.msra.mxu0 %v1045
    %1105 = vmatpush.msra.mxu0 %v1041
    %1106 = vmatpush.msra.mxu0 %v1037
    %1107 = vmatpush.msra.mxu0 %v1033
    %1108 = vmatpush.msra.mxu0 %v1029
    %1109 = vmatpush.msra.mxu0 %v1025
    %1110 = vmatpush.msra.mxu0 %v1021
    %1111 = vmatpush.msra.mxu0 %v1017
    %1112 = vmatpush.msra.mxu0 %v1013
    %1113 = vmatpush.msra.mxu0 %v1009
    %1114 = vmatpush.msra.mxu0 %v1005
    %1115 = vmatmul.f32.gmra.mxu0 %v999
    %v1116 = vpop.f32.mrf.mxu0
    %v1117 = vadd.f32 %v1072, %v1116
    %1118 = vdwg.mxu0
    %1119 = vmatpush.msra.mxu0 %v1066
    %1120 = vmatpush.msra.mxu0 %v1062
    %1121 = vmatpush.msra.mxu0 %v1058
    %1122 = vmatpush.msra.mxu0 %v1054
    %1123 = vmatpush.msra.mxu0 %v1050
    %1124 = vmatpush.msra.mxu0 %v1046
    %1125 = vmatpush.msra.mxu0 %v1042
    %1126 = vmatpush.msra.mxu0 %v1038
    %1127 = vmatpush.msra.mxu0 %v1034
    %1128 = vmatpush.msra.mxu0 %v1030
    %1129 = vmatpush.msra.mxu0 %v1026
    %1130 = vmatpush.msra.mxu0 %v1022
    %1131 = vmatpush.msra.mxu0 %v1018
    %1132 = vmatpush.msra.mxu0 %v1014
    %1133 = vmatpush.msra.mxu0 %v1010
    %1134 = vmatpush.msra.mxu0 %v1006
    %1135 = vmatmul.f32.gmra.mxu0 %v999
    %v1136 = vpop.f32.mrf.mxu0
    %v1137 = vadd.f32 %v1073, %v1136
    %1138 = vdwg.mxu0
    %1139 = vmatpush.msra.mxu0 %v1067
    %1140 = vmatpush.msra.mxu0 %v1063
    %1141 = vmatpush.msra.mxu0 %v1059
    %1142 = vmatpush.msra.mxu0 %v1055
    %1143 = vmatpush.msra.mxu0 %v1051
    %1144 = vmatpush.msra.mxu0 %v1047
    %1145 = vmatpush.msra.mxu0 %v1043
    %1146 = vmatpush.msra.mxu0 %v1039
    %1147 = vmatpush.msra.mxu0 %v1035
    %1148 = vmatpush.msra.mxu0 %v1031
    %1149 = vmatpush.msra.mxu0 %v1027
    %1150 = vmatpush.msra.mxu0 %v1023
    %1151 = vmatpush.msra.mxu0 %v1019
    %1152 = vmatpush.msra.mxu0 %v1015
    %1153 = vmatpush.msra.mxu0 %v1011
    %1154 = vmatpush.msra.mxu0 %v1007
    %1155 = vmatmul.f32.gmra.mxu0 %v999
    %v1156 = vpop.f32.mrf.mxu0
    %v1157 = vadd.f32 %v1074, %v1156
    %1158 = vdwg.mxu0
    %v1159 = vxor.u32 %v1097, 2147483648
    %v1160 = vxor.u32 %v1117, 2147483648
    %v1161 = vxor.u32 %v1137, 2147483648
    %v1162 = vxor.u32 %v1157, 2147483648
    %v1163 = vmul.f32 %v1159, 1.442695
    %v1164 = vpow.pop %v1163
    %v1165 = vmul.f32 %v1160, 1.442695
    %v1166 = vpow.pop %v1165
    %v1167 = vmul.f32 %v1161, 1.442695
    %v1168 = vpow.pop %v1167
    %v1169 = vmul.f32 %v1162, 1.442695
    %v1170 = vpow.pop %v1169
    %v1171 = vadd.f32 %v1164, 1.0
    %v1172 = vadd.f32 %v1166, 1.0
    %v1173 = vadd.f32 %v1168, 1.0
    %v1174 = vadd.f32 %v1170, 1.0
    %v1175 = vrcp.pop %v1171
    %v1176 = vmul.f32 %v1171, %v1175
    %v1177 = vsub.f32 1.0, %v1176
    %v1178 = vmul.f32 %v1175, %v1177
    %v1179 = vadd.f32 %v1175, %v1178
    %vm1180 = vweird.f32 %v1171
    %vm1181 = vweird.f32 %v1175
    %vm1182 = vmor %vm1180, %vm1181
    %v1183 = vsel %vm1182, %v1175, %v1179
    %v1184 = vand.u32 2147483647, %v1171
    %vm1185 = vcmp.eq.f32.partialorder %v1184, 8.507059e+37
    %v1186 = vand.u32 %v1171, 2147483648
    %v1187 = vor.u32 1.1754944e-38, %v1186
    %v1188 = vsel %vm1185, %v1187, %v1183
    %v1189 = vmul.f32 1.0, %v1188
    %v1190 = vrcp.pop %v1172
    %v1191 = vmul.f32 %v1172, %v1190
    %v1192 = vsub.f32 1.0, %v1191
    %v1193 = vmul.f32 %v1190, %v1192
    %v1194 = vadd.f32 %v1190, %v1193
    %vm1195 = vweird.f32 %v1172
    %vm1196 = vweird.f32 %v1190
    %vm1197 = vmor %vm1195, %vm1196
    %v1198 = vsel %vm1197, %v1190, %v1194
    %v1199 = vand.u32 2147483647, %v1172
    %vm1200 = vcmp.eq.f32.partialorder %v1199, 8.507059e+37
    %v1201 = vand.u32 %v1172, 2147483648
    %v1202 = vor.u32 1.1754944e-38, %v1201
    %v1203 = vsel %vm1200, %v1202, %v1198
    %v1204 = vmul.f32 1.0, %v1203
    %v1205 = vrcp.pop %v1173
    %v1206 = vmul.f32 %v1173, %v1205
    %v1207 = vsub.f32 1.0, %v1206
    %v1208 = vmul.f32 %v1205, %v1207
    %v1209 = vadd.f32 %v1205, %v1208
    %vm1210 = vweird.f32 %v1173
    %vm1211 = vweird.f32 %v1205
    %vm1212 = vmor %vm1210, %vm1211
    %v1213 = vsel %vm1212, %v1205, %v1209
    %v1214 = vand.u32 2147483647, %v1173
    %vm1215 = vcmp.eq.f32.partialorder %v1214, 8.507059e+37
    %v1216 = vand.u32 %v1173, 2147483648
    %v1217 = vor.u32 1.1754944e-38, %v1216
    %v1218 = vsel %vm1215, %v1217, %v1213
    %v1219 = vmul.f32 1.0, %v1218
    %v1220 = vrcp.pop %v1174
    %v1221 = vmul.f32 %v1174, %v1220
    %v1222 = vsub.f32 1.0, %v1221
    %v1223 = vmul.f32 %v1220, %v1222
    %v1224 = vadd.f32 %v1220, %v1223
    %vm1225 = vweird.f32 %v1174
    %vm1226 = vweird.f32 %v1220
    %vm1227 = vmor %vm1225, %vm1226
    %v1228 = vsel %vm1227, %v1220, %v1224
    %v1229 = vand.u32 2147483647, %v1174
    %vm1230 = vcmp.eq.f32.partialorder %v1229, 8.507059e+37
    %v1231 = vand.u32 %v1174, 2147483648
    %v1232 = vor.u32 1.1754944e-38, %v1231
    %v1233 = vsel %vm1230, %v1232, %v1228
    %v1234 = vmul.f32 1.0, %v1233
    %v1235 = vmul.f32 %v1219, 2.0
    %v1236 = vsub.f32 %v1235, 1.0
    %v1237 = vmul.f32 %v1204, %v1002
    %v1238 = vmul.f32 %v1189, %v1236
    %v1239 = vadd.f32 %v1237, %v1238
    %v1240 = vtanh.pop %v1239
    %v1241 = vmul.f32 %v1234, %v1240
    %p1242 = scmp.gt.s32.totalorder %s104, 3
    %s1243 = scalar_select %p1242, 1, 0
    %s1244 = scvt.s32.f32 %s1243
    %v1245 = vstv %s1244
    %v1246 = vmul.f32 %v1245, %v1241
    %s1247 = ssub.f32 1.0, %s1244
    %v1248 = vstv %s1247
    %v1249 = vmul.f32 %v1248, %v999
    %v1250 = vadd.f32 %v1246, %v1249
    %v1251 = vmul.f32 %v1245, %v1239
    %v1252 = vmul.f32 %v1248, %v1002
    %v1253 = vadd.f32 %v1251, %v1252
    %1254 = vst [vmem:[#allocation3 + $0x3] sm:$0x1] %v1250
    %v1255 = vld [vmem:[#allocation11] sm:$0xff]
    %v1256 = vld [vmem:[#allocation11 + $0x8] sm:$0xff]
    %v1257 = vld [vmem:[#allocation11 + $0x10] sm:$0xff]
    %v1258 = vld [vmem:[#allocation11 + $0x18] sm:$0xff]
    %v1259 = vld [vmem:[#allocation11 + $0x20] sm:$0xff]
    %v1260 = vld [vmem:[#allocation11 + $0x28] sm:$0xff]
    %v1261 = vld [vmem:[#allocation11 + $0x30] sm:$0xff]
    %v1262 = vld [vmem:[#allocation11 + $0x38] sm:$0xff]
    %v1263 = vld [vmem:[#allocation11 + $0x40] sm:$0xff]
    %v1264 = vld [vmem:[#allocation11 + $0x48] sm:$0xff]
    %v1265 = vld [vmem:[#allocation11 + $0x50] sm:$0xff]
    %v1266 = vld [vmem:[#allocation11 + $0x58] sm:$0xff]
    %v1267 = vld [vmem:[#allocation11 + $0x60] sm:$0xff]
    %v1268 = vld [vmem:[#allocation11 + $0x68] sm:$0xff]
    %v1269 = vld [vmem:[#allocation11 + $0x70] sm:$0xff]
    %v1270 = vld [vmem:[#allocation11 + $0x78] sm:$0xff]
    %v1271 = vld [vmem:[#allocation11 + $0x80] sm:$0xff]
    %v1272 = vld [vmem:[#allocation11 + $0x88] sm:$0xff]
    %v1273 = vld [vmem:[#allocation11 + $0x90] sm:$0xff]
    %v1274 = vld [vmem:[#allocation11 + $0x98] sm:$0xff]
    %v1275 = vld [vmem:[#allocation11 + $0xa0] sm:$0xff]
    %v1276 = vld [vmem:[#allocation11 + $0xa8] sm:$0xff]
    %v1277 = vld [vmem:[#allocation11 + $0xb0] sm:$0xff]
    %v1278 = vld [vmem:[#allocation11 + $0xb8] sm:$0xff]
    %v1279 = vld [vmem:[#allocation11 + $0xc0] sm:$0xff]
    %v1280 = vld [vmem:[#allocation11 + $0xc8] sm:$0xff]
    %v1281 = vld [vmem:[#allocation11 + $0xd0] sm:$0xff]
    %v1282 = vld [vmem:[#allocation11 + $0xd8] sm:$0xff]
    %v1283 = vld [vmem:[#allocation11 + $0xe0] sm:$0xff]
    %v1284 = vld [vmem:[#allocation11 + $0xe8] sm:$0xff]
    %v1285 = vld [vmem:[#allocation11 + $0xf0] sm:$0xff]
    %v1286 = vld [vmem:[#allocation11 + $0xf8] sm:$0xff]
    %v1287 = vld [vmem:[#allocation11 + $0x100] sm:$0xff]
    %v1288 = vld [vmem:[#allocation11 + $0x108] sm:$0xff]
    %v1289 = vld [vmem:[#allocation11 + $0x110] sm:$0xff]
    %v1290 = vld [vmem:[#allocation11 + $0x118] sm:$0xff]
    %v1291 = vld [vmem:[#allocation11 + $0x120] sm:$0xff]
    %v1292 = vld [vmem:[#allocation11 + $0x128] sm:$0xff]
    %v1293 = vld [vmem:[#allocation11 + $0x130] sm:$0xff]
    %v1294 = vld [vmem:[#allocation11 + $0x138] sm:$0xff]
    %v1295 = vld [vmem:[#allocation11 + $0x140] sm:$0xff]
    %v1296 = vld [vmem:[#allocation11 + $0x148] sm:$0xff]
    %v1297 = vld [vmem:[#allocation11 + $0x150] sm:$0xff]
    %v1298 = vld [vmem:[#allocation11 + $0x158] sm:$0xff]
    %v1299 = vld [vmem:[#allocation11 + $0x160] sm:$0xff]
    %v1300 = vld [vmem:[#allocation11 + $0x168] sm:$0xff]
    %v1301 = vld [vmem:[#allocation11 + $0x170] sm:$0xff]
    %v1302 = vld [vmem:[#allocation11 + $0x178] sm:$0xff]
    %v1303 = vld [vmem:[#allocation11 + $0x180] sm:$0xff]
    %v1304 = vld [vmem:[#allocation11 + $0x188] sm:$0xff]
    %v1305 = vld [vmem:[#allocation11 + $0x190] sm:$0xff]
    %v1306 = vld [vmem:[#allocation11 + $0x198] sm:$0xff]
    %v1307 = vld [vmem:[#allocation11 + $0x1a0] sm:$0xff]
    %v1308 = vld [vmem:[#allocation11 + $0x1a8] sm:$0xff]
    %v1309 = vld [vmem:[#allocation11 + $0x1b0] sm:$0xff]
    %v1310 = vld [vmem:[#allocation11 + $0x1b8] sm:$0xff]
    %v1311 = vld [vmem:[#allocation11 + $0x1c0] sm:$0xff]
    %v1312 = vld [vmem:[#allocation11 + $0x1c8] sm:$0xff]
    %v1313 = vld [vmem:[#allocation11 + $0x1d0] sm:$0xff]
    %v1314 = vld [vmem:[#allocation11 + $0x1d8] sm:$0xff]
    %v1315 = vld [vmem:[#allocation11 + $0x1e0] sm:$0xff]
    %v1316 = vld [vmem:[#allocation11 + $0x1e8] sm:$0xff]
    %v1317 = vld [vmem:[#allocation11 + $0x1f0] sm:$0xff]
    %v1318 = vld [vmem:[#allocation11 + $0x1f8] sm:$0xff]
    %s1319 = scalar_lea.vmem [#allocation2], 4
    %v1320 = vld [vmem:[%s1319] ss:$8 sm:$0xf]
    %v1322 = vperm.slane %v1320, 0
    %v1323 = vperm.slane %v1320, 1
    %v1324 = vperm.slane %v1320, 2
    %v1325 = vperm.slane %v1320, 3
    %1330 = vmatpush.msra.mxu0 %v1315
    %1331 = vmatpush.msra.mxu0 %v1311
    %1332 = vmatpush.msra.mxu0 %v1307
    %1333 = vmatpush.msra.mxu0 %v1303
    %1334 = vmatpush.msra.mxu0 %v1299
    %1335 = vmatpush.msra.mxu0 %v1295
    %1336 = vmatpush.msra.mxu0 %v1291
    %1337 = vmatpush.msra.mxu0 %v1287
    %1338 = vmatpush.msra.mxu0 %v1283
    %1339 = vmatpush.msra.mxu0 %v1279
    %1340 = vmatpush.msra.mxu0 %v1275
    %1341 = vmatpush.msra.mxu0 %v1271
    %1342 = vmatpush.msra.mxu0 %v1267
    %1343 = vmatpush.msra.mxu0 %v1263
    %1344 = vmatpush.msra.mxu0 %v1259
    %1345 = vmatpush.msra.mxu0 %v1255
    %1346 = vmatmul.f32.gmra.mxu0 %v1250
    %v1347 = vpop.f32.mrf.mxu0
    %v1348 = vadd.f32 %v1322, %v1347
    %1349 = vdwg.mxu0
    %1350 = vmatpush.msra.mxu0 %v1316
    %1351 = vmatpush.msra.mxu0 %v1312
    %1352 = vmatpush.msra.mxu0 %v1308
    %1353 = vmatpush.msra.mxu0 %v1304
    %1354 = vmatpush.msra.mxu0 %v1300
    %1355 = vmatpush.msra.mxu0 %v1296
    %1356 = vmatpush.msra.mxu0 %v1292
    %1357 = vmatpush.msra.mxu0 %v1288
    %1358 = vmatpush.msra.mxu0 %v1284
    %1359 = vmatpush.msra.mxu0 %v1280
    %1360 = vmatpush.msra.mxu0 %v1276
    %1361 = vmatpush.msra.mxu0 %v1272
    %1362 = vmatpush.msra.mxu0 %v1268
    %1363 = vmatpush.msra.mxu0 %v1264
    %1364 = vmatpush.msra.mxu0 %v1260
    %1365 = vmatpush.msra.mxu0 %v1256
    %1366 = vmatmul.f32.gmra.mxu0 %v1250
    %v1367 = vpop.f32.mrf.mxu0
    %v1368 = vadd.f32 %v1323, %v1367
    %1369 = vdwg.mxu0
    %1370 = vmatpush.msra.mxu0 %v1317
    %1371 = vmatpush.msra.mxu0 %v1313
    %1372 = vmatpush.msra.mxu0 %v1309
    %1373 = vmatpush.msra.mxu0 %v1305
    %1374 = vmatpush.msra.mxu0 %v1301
    %1375 = vmatpush.msra.mxu0 %v1297
    %1376 = vmatpush.msra.mxu0 %v1293
    %1377 = vmatpush.msra.mxu0 %v1289
    %1378 = vmatpush.msra.mxu0 %v1285
    %1379 = vmatpush.msra.mxu0 %v1281
    %1380 = vmatpush.msra.mxu0 %v1277
    %1381 = vmatpush.msra.mxu0 %v1273
    %1382 = vmatpush.msra.mxu0 %v1269
    %1383 = vmatpush.msra.mxu0 %v1265
    %1384 = vmatpush.msra.mxu0 %v1261
    %1385 = vmatpush.msra.mxu0 %v1257
    %1386 = vmatmul.f32.gmra.mxu0 %v1250
    %v1387 = vpop.f32.mrf.mxu0
    %v1388 = vadd.f32 %v1324, %v1387
    %1389 = vdwg.mxu0
    %1390 = vmatpush.msra.mxu0 %v1318
    %1391 = vmatpush.msra.mxu0 %v1314
    %1392 = vmatpush.msra.mxu0 %v1310
    %1393 = vmatpush.msra.mxu0 %v1306
    %1394 = vmatpush.msra.mxu0 %v1302
    %1395 = vmatpush.msra.mxu0 %v1298
    %1396 = vmatpush.msra.mxu0 %v1294
    %1397 = vmatpush.msra.mxu0 %v1290
    %1398 = vmatpush.msra.mxu0 %v1286
    %1399 = vmatpush.msra.mxu0 %v1282
    %1400 = vmatpush.msra.mxu0 %v1278
    %1401 = vmatpush.msra.mxu0 %v1274
    %1402 = vmatpush.msra.mxu0 %v1270
    %1403 = vmatpush.msra.mxu0 %v1266
    %1404 = vmatpush.msra.mxu0 %v1262
    %1405 = vmatpush.msra.mxu0 %v1258
    %1406 = vmatmul.f32.gmra.mxu0 %v1250
    %v1407 = vpop.f32.mrf.mxu0
    %v1408 = vadd.f32 %v1325, %v1407
    %1409 = vdwg.mxu0
    %v1410 = vxor.u32 %v1348, 2147483648
    %v1411 = vxor.u32 %v1368, 2147483648
    %v1412 = vxor.u32 %v1388, 2147483648
    %v1413 = vxor.u32 %v1408, 2147483648
    %v1414 = vmul.f32 %v1410, 1.442695
    %v1415 = vpow.pop %v1414
    %v1416 = vmul.f32 %v1411, 1.442695
    %v1417 = vpow.pop %v1416
    %v1418 = vmul.f32 %v1412, 1.442695
    %v1419 = vpow.pop %v1418
    %v1420 = vmul.f32 %v1413, 1.442695
    %v1421 = vpow.pop %v1420
    %v1422 = vadd.f32 %v1415, 1.0
    %v1423 = vadd.f32 %v1417, 1.0
    %v1424 = vadd.f32 %v1419, 1.0
    %v1425 = vadd.f32 %v1421, 1.0
    %v1426 = vrcp.pop %v1422
    %v1427 = vmul.f32 %v1422, %v1426
    %v1428 = vsub.f32 1.0, %v1427
    %v1429 = vmul.f32 %v1426, %v1428
    %v1430 = vadd.f32 %v1426, %v1429
    %vm1431 = vweird.f32 %v1422
    %vm1432 = vweird.f32 %v1426
    %vm1433 = vmor %vm1431, %vm1432
    %v1434 = vsel %vm1433, %v1426, %v1430
    %v1435 = vand.u32 2147483647, %v1422
    %vm1436 = vcmp.eq.f32.partialorder %v1435, 8.507059e+37
    %v1437 = vand.u32 %v1422, 2147483648
    %v1438 = vor.u32 1.1754944e-38, %v1437
    %v1439 = vsel %vm1436, %v1438, %v1434
    %v1440 = vmul.f32 1.0, %v1439
    %v1441 = vrcp.pop %v1423
    %v1442 = vmul.f32 %v1423, %v1441
    %v1443 = vsub.f32 1.0, %v1442
    %v1444 = vmul.f32 %v1441, %v1443
    %v1445 = vadd.f32 %v1441, %v1444
    %vm1446 = vweird.f32 %v1423
    %vm1447 = vweird.f32 %v1441
    %vm1448 = vmor %vm1446, %vm1447
    %v1449 = vsel %vm1448, %v1441, %v1445
    %v1450 = vand.u32 2147483647, %v1423
    %vm1451 = vcmp.eq.f32.partialorder %v1450, 8.507059e+37
    %v1452 = vand.u32 %v1423, 2147483648
    %v1453 = vor.u32 1.1754944e-38, %v1452
    %v1454 = vsel %vm1451, %v1453, %v1449
    %v1455 = vmul.f32 1.0, %v1454
    %v1456 = vrcp.pop %v1424
    %v1457 = vmul.f32 %v1424, %v1456
    %v1458 = vsub.f32 1.0, %v1457
    %v1459 = vmul.f32 %v1456, %v1458
    %v1460 = vadd.f32 %v1456, %v1459
    %vm1461 = vweird.f32 %v1424
    %vm1462 = vweird.f32 %v1456
    %vm1463 = vmor %vm1461, %vm1462
    %v1464 = vsel %vm1463, %v1456, %v1460
    %v1465 = vand.u32 2147483647, %v1424
    %vm1466 = vcmp.eq.f32.partialorder %v1465, 8.507059e+37
    %v1467 = vand.u32 %v1424, 2147483648
    %v1468 = vor.u32 1.1754944e-38, %v1467
    %v1469 = vsel %vm1466, %v1468, %v1464
    %v1470 = vmul.f32 1.0, %v1469
    %v1471 = vrcp.pop %v1425
    %v1472 = vmul.f32 %v1425, %v1471
    %v1473 = vsub.f32 1.0, %v1472
    %v1474 = vmul.f32 %v1471, %v1473
    %v1475 = vadd.f32 %v1471, %v1474
    %vm1476 = vweird.f32 %v1425
    %vm1477 = vweird.f32 %v1471
    %vm1478 = vmor %vm1476, %vm1477
    %v1479 = vsel %vm1478, %v1471, %v1475
    %v1480 = vand.u32 2147483647, %v1425
    %vm1481 = vcmp.eq.f32.partialorder %v1480, 8.507059e+37
    %v1482 = vand.u32 %v1425, 2147483648
    %v1483 = vor.u32 1.1754944e-38, %v1482
    %v1484 = vsel %vm1481, %v1483, %v1479
    %v1485 = vmul.f32 1.0, %v1484
    %v1486 = vmul.f32 %v1470, 2.0
    %v1487 = vsub.f32 %v1486, 1.0
    %v1488 = vmul.f32 %v1455, %v1253
    %v1489 = vmul.f32 %v1440, %v1487
    %v1490 = vadd.f32 %v1488, %v1489
    %v1491 = vtanh.pop %v1490
    %v1492 = vmul.f32 %v1485, %v1491
    %p1493 = scmp.gt.s32.totalorder %s104, 4
    %s1494 = scalar_select %p1493, 1, 0
    %s1495 = scvt.s32.f32 %s1494
    %v1496 = vstv %s1495
    %v1497 = vmul.f32 %v1496, %v1492
    %s1498 = ssub.f32 1.0, %s1495
    %v1499 = vstv %s1498
    %v1500 = vmul.f32 %v1499, %v1250
    %v1501 = vadd.f32 %v1497, %v1500
    %v1502 = vmul.f32 %v1496, %v1490
    %v1503 = vmul.f32 %v1499, %v1253
    %v1504 = vadd.f32 %v1502, %v1503
    %1505 = vst [vmem:[#allocation3 + $0x4] sm:$0x1] %v1501
    %v1506 = vld [vmem:[#allocation11] sm:$0xff]
    %v1507 = vld [vmem:[#allocation11 + $0x8] sm:$0xff]
    %v1508 = vld [vmem:[#allocation11 + $0x10] sm:$0xff]
    %v1509 = vld [vmem:[#allocation11 + $0x18] sm:$0xff]
    %v1510 = vld [vmem:[#allocation11 + $0x20] sm:$0xff]
    %v1511 = vld [vmem:[#allocation11 + $0x28] sm:$0xff]
    %v1512 = vld [vmem:[#allocation11 + $0x30] sm:$0xff]
    %v1513 = vld [vmem:[#allocation11 + $0x38] sm:$0xff]
    %v1514 = vld [vmem:[#allocation11 + $0x40] sm:$0xff]
    %v1515 = vld [vmem:[#allocation11 + $0x48] sm:$0xff]
    %v1516 = vld [vmem:[#allocation11 + $0x50] sm:$0xff]
    %v1517 = vld [vmem:[#allocation11 + $0x58] sm:$0xff]
    %v1518 = vld [vmem:[#allocation11 + $0x60] sm:$0xff]
    %v1519 = vld [vmem:[#allocation11 + $0x68] sm:$0xff]
    %v1520 = vld [vmem:[#allocation11 + $0x70] sm:$0xff]
    %v1521 = vld [vmem:[#allocation11 + $0x78] sm:$0xff]
    %v1522 = vld [vmem:[#allocation11 + $0x80] sm:$0xff]
    %v1523 = vld [vmem:[#allocation11 + $0x88] sm:$0xff]
    %v1524 = vld [vmem:[#allocation11 + $0x90] sm:$0xff]
    %v1525 = vld [vmem:[#allocation11 + $0x98] sm:$0xff]
    %v1526 = vld [vmem:[#allocation11 + $0xa0] sm:$0xff]
    %v1527 = vld [vmem:[#allocation11 + $0xa8] sm:$0xff]
    %v1528 = vld [vmem:[#allocation11 + $0xb0] sm:$0xff]
    %v1529 = vld [vmem:[#allocation11 + $0xb8] sm:$0xff]
    %v1530 = vld [vmem:[#allocation11 + $0xc0] sm:$0xff]
    %v1531 = vld [vmem:[#allocation11 + $0xc8] sm:$0xff]
    %v1532 = vld [vmem:[#allocation11 + $0xd0] sm:$0xff]
    %v1533 = vld [vmem:[#allocation11 + $0xd8] sm:$0xff]
    %v1534 = vld [vmem:[#allocation11 + $0xe0] sm:$0xff]
    %v1535 = vld [vmem:[#allocation11 + $0xe8] sm:$0xff]
    %v1536 = vld [vmem:[#allocation11 + $0xf0] sm:$0xff]
    %v1537 = vld [vmem:[#allocation11 + $0xf8] sm:$0xff]
    %v1538 = vld [vmem:[#allocation11 + $0x100] sm:$0xff]
    %v1539 = vld [vmem:[#allocation11 + $0x108] sm:$0xff]
    %v1540 = vld [vmem:[#allocation11 + $0x110] sm:$0xff]
    %v1541 = vld [vmem:[#allocation11 + $0x118] sm:$0xff]
    %v1542 = vld [vmem:[#allocation11 + $0x120] sm:$0xff]
    %v1543 = vld [vmem:[#allocation11 + $0x128] sm:$0xff]
    %v1544 = vld [vmem:[#allocation11 + $0x130] sm:$0xff]
    %v1545 = vld [vmem:[#allocation11 + $0x138] sm:$0xff]
    %v1546 = vld [vmem:[#allocation11 + $0x140] sm:$0xff]
    %v1547 = vld [vmem:[#allocation11 + $0x148] sm:$0xff]
    %v1548 = vld [vmem:[#allocation11 + $0x150] sm:$0xff]
    %v1549 = vld [vmem:[#allocation11 + $0x158] sm:$0xff]
    %v1550 = vld [vmem:[#allocation11 + $0x160] sm:$0xff]
    %v1551 = vld [vmem:[#allocation11 + $0x168] sm:$0xff]
    %v1552 = vld [vmem:[#allocation11 + $0x170] sm:$0xff]
    %v1553 = vld [vmem:[#allocation11 + $0x178] sm:$0xff]
    %v1554 = vld [vmem:[#allocation11 + $0x180] sm:$0xff]
    %v1555 = vld [vmem:[#allocation11 + $0x188] sm:$0xff]
    %v1556 = vld [vmem:[#allocation11 + $0x190] sm:$0xff]
    %v1557 = vld [vmem:[#allocation11 + $0x198] sm:$0xff]
    %v1558 = vld [vmem:[#allocation11 + $0x1a0] sm:$0xff]
    %v1559 = vld [vmem:[#allocation11 + $0x1a8] sm:$0xff]
    %v1560 = vld [vmem:[#allocation11 + $0x1b0] sm:$0xff]
    %v1561 = vld [vmem:[#allocation11 + $0x1b8] sm:$0xff]
    %v1562 = vld [vmem:[#allocation11 + $0x1c0] sm:$0xff]
    %v1563 = vld [vmem:[#allocation11 + $0x1c8] sm:$0xff]
    %v1564 = vld [vmem:[#allocation11 + $0x1d0] sm:$0xff]
    %v1565 = vld [vmem:[#allocation11 + $0x1d8] sm:$0xff]
    %v1566 = vld [vmem:[#allocation11 + $0x1e0] sm:$0xff]
    %v1567 = vld [vmem:[#allocation11 + $0x1e8] sm:$0xff]
    %v1568 = vld [vmem:[#allocation11 + $0x1f0] sm:$0xff]
    %v1569 = vld [vmem:[#allocation11 + $0x1f8] sm:$0xff]
    %s1570 = scalar_lea.vmem [#allocation2], 5
    %v1571 = vld [vmem:[%s1570] ss:$8 sm:$0xf]
    %v1573 = vperm.slane %v1571, 0
    %v1574 = vperm.slane %v1571, 1
    %v1575 = vperm.slane %v1571, 2
    %v1576 = vperm.slane %v1571, 3
    %1581 = vmatpush.msra.mxu0 %v1566
    %1582 = vmatpush.msra.mxu0 %v1562
    %1583 = vmatpush.msra.mxu0 %v1558
    %1584 = vmatpush.msra.mxu0 %v1554
    %1585 = vmatpush.msra.mxu0 %v1550
    %1586 = vmatpush.msra.mxu0 %v1546
    %1587 = vmatpush.msra.mxu0 %v1542
    %1588 = vmatpush.msra.mxu0 %v1538
    %1589 = vmatpush.msra.mxu0 %v1534
    %1590 = vmatpush.msra.mxu0 %v1530
    %1591 = vmatpush.msra.mxu0 %v1526
    %1592 = vmatpush.msra.mxu0 %v1522
    %1593 = vmatpush.msra.mxu0 %v1518
    %1594 = vmatpush.msra.mxu0 %v1514
    %1595 = vmatpush.msra.mxu0 %v1510
    %1596 = vmatpush.msra.mxu0 %v1506
    %1597 = vmatmul.f32.gmra.mxu0 %v1501
    %v1598 = vpop.f32.mrf.mxu0
    %v1599 = vadd.f32 %v1573, %v1598
    %1600 = vdwg.mxu0
    %1601 = vmatpush.msra.mxu0 %v1567
    %1602 = vmatpush.msra.mxu0 %v1563
    %1603 = vmatpush.msra.mxu0 %v1559
    %1604 = vmatpush.msra.mxu0 %v1555
    %1605 = vmatpush.msra.mxu0 %v1551
    %1606 = vmatpush.msra.mxu0 %v1547
    %1607 = vmatpush.msra.mxu0 %v1543
    %1608 = vmatpush.msra.mxu0 %v1539
    %1609 = vmatpush.msra.mxu0 %v1535
    %1610 = vmatpush.msra.mxu0 %v1531
    %1611 = vmatpush.msra.mxu0 %v1527
    %1612 = vmatpush.msra.mxu0 %v1523
    %1613 = vmatpush.msra.mxu0 %v1519
    %1614 = vmatpush.msra.mxu0 %v1515
    %1615 = vmatpush.msra.mxu0 %v1511
    %1616 = vmatpush.msra.mxu0 %v1507
    %1617 = vmatmul.f32.gmra.mxu0 %v1501
    %v1618 = vpop.f32.mrf.mxu0
    %v1619 = vadd.f32 %v1574, %v1618
    %1620 = vdwg.mxu0
    %1621 = vmatpush.msra.mxu0 %v1568
    %1622 = vmatpush.msra.mxu0 %v1564
    %1623 = vmatpush.msra.mxu0 %v1560
    %1624 = vmatpush.msra.mxu0 %v1556
    %1625 = vmatpush.msra.mxu0 %v1552
    %1626 = vmatpush.msra.mxu0 %v1548
    %1627 = vmatpush.msra.mxu0 %v1544
    %1628 = vmatpush.msra.mxu0 %v1540
    %1629 = vmatpush.msra.mxu0 %v1536
    %1630 = vmatpush.msra.mxu0 %v1532
    %1631 = vmatpush.msra.mxu0 %v1528
    %1632 = vmatpush.msra.mxu0 %v1524
    %1633 = vmatpush.msra.mxu0 %v1520
    %1634 = vmatpush.msra.mxu0 %v1516
    %1635 = vmatpush.msra.mxu0 %v1512
    %1636 = vmatpush.msra.mxu0 %v1508
    %1637 = vmatmul.f32.gmra.mxu0 %v1501
    %v1638 = vpop.f32.mrf.mxu0
    %v1639 = vadd.f32 %v1575, %v1638
    %1640 = vdwg.mxu0
    %1641 = vmatpush.msra.mxu0 %v1569
    %1642 = vmatpush.msra.mxu0 %v1565
    %1643 = vmatpush.msra.mxu0 %v1561
    %1644 = vmatpush.msra.mxu0 %v1557
    %1645 = vmatpush.msra.mxu0 %v1553
    %1646 = vmatpush.msra.mxu0 %v1549
    %1647 = vmatpush.msra.mxu0 %v1545
    %1648 = vmatpush.msra.mxu0 %v1541
    %1649 = vmatpush.msra.mxu0 %v1537
    %1650 = vmatpush.msra.mxu0 %v1533
    %1651 = vmatpush.msra.mxu0 %v1529
    %1652 = vmatpush.msra.mxu0 %v1525
    %1653 = vmatpush.msra.mxu0 %v1521
    %1654 = vmatpush.msra.mxu0 %v1517
    %1655 = vmatpush.msra.mxu0 %v1513
    %1656 = vmatpush.msra.mxu0 %v1509
    %1657 = vmatmul.f32.gmra.mxu0 %v1501
    %v1658 = vpop.f32.mrf.mxu0
    %v1659 = vadd.f32 %v1576, %v1658
    %1660 = vdwg.mxu0
    %v1661 = vxor.u32 %v1599, 2147483648
    %v1662 = vxor.u32 %v1619, 2147483648
    %v1663 = vxor.u32 %v1639, 2147483648
    %v1664 = vxor.u32 %v1659, 2147483648
    %v1665 = vmul.f32 %v1661, 1.442695
    %v1666 = vpow.pop %v1665
    %v1667 = vmul.f32 %v1662, 1.442695
    %v1668 = vpow.pop %v1667
    %v1669 = vmul.f32 %v1663, 1.442695
    %v1670 = vpow.pop %v1669
    %v1671 = vmul.f32 %v1664, 1.442695
    %v1672 = vpow.pop %v1671
    %v1673 = vadd.f32 %v1666, 1.0
    %v1674 = vadd.f32 %v1668, 1.0
    %v1675 = vadd.f32 %v1670, 1.0
    %v1676 = vadd.f32 %v1672, 1.0
    %v1677 = vrcp.pop %v1673
    %v1678 = vmul.f32 %v1673, %v1677
    %v1679 = vsub.f32 1.0, %v1678
    %v1680 = vmul.f32 %v1677, %v1679
    %v1681 = vadd.f32 %v1677, %v1680
    %vm1682 = vweird.f32 %v1673
    %vm1683 = vweird.f32 %v1677
    %vm1684 = vmor %vm1682, %vm1683
    %v1685 = vsel %vm1684, %v1677, %v1681
    %v1686 = vand.u32 2147483647, %v1673
    %vm1687 = vcmp.eq.f32.partialorder %v1686, 8.507059e+37
    %v1688 = vand.u32 %v1673, 2147483648
    %v1689 = vor.u32 1.1754944e-38, %v1688
    %v1690 = vsel %vm1687, %v1689, %v1685
    %v1691 = vmul.f32 1.0, %v1690
    %v1692 = vrcp.pop %v1674
    %v1693 = vmul.f32 %v1674, %v1692
    %v1694 = vsub.f32 1.0, %v1693
    %v1695 = vmul.f32 %v1692, %v1694
    %v1696 = vadd.f32 %v1692, %v1695
    %vm1697 = vweird.f32 %v1674
    %vm1698 = vweird.f32 %v1692
    %vm1699 = vmor %vm1697, %vm1698
    %v1700 = vsel %vm1699, %v1692, %v1696
    %v1701 = vand.u32 2147483647, %v1674
    %vm1702 = vcmp.eq.f32.partialorder %v1701, 8.507059e+37
    %v1703 = vand.u32 %v1674, 2147483648
    %v1704 = vor.u32 1.1754944e-38, %v1703
    %v1705 = vsel %vm1702, %v1704, %v1700
    %v1706 = vmul.f32 1.0, %v1705
    %v1707 = vrcp.pop %v1675
    %v1708 = vmul.f32 %v1675, %v1707
    %v1709 = vsub.f32 1.0, %v1708
    %v1710 = vmul.f32 %v1707, %v1709
    %v1711 = vadd.f32 %v1707, %v1710
    %vm1712 = vweird.f32 %v1675
    %vm1713 = vweird.f32 %v1707
    %vm1714 = vmor %vm1712, %vm1713
    %v1715 = vsel %vm1714, %v1707, %v1711
    %v1716 = vand.u32 2147483647, %v1675
    %vm1717 = vcmp.eq.f32.partialorder %v1716, 8.507059e+37
    %v1718 = vand.u32 %v1675, 2147483648
    %v1719 = vor.u32 1.1754944e-38, %v1718
    %v1720 = vsel %vm1717, %v1719, %v1715
    %v1721 = vmul.f32 1.0, %v1720
    %v1722 = vrcp.pop %v1676
    %v1723 = vmul.f32 %v1676, %v1722
    %v1724 = vsub.f32 1.0, %v1723
    %v1725 = vmul.f32 %v1722, %v1724
    %v1726 = vadd.f32 %v1722, %v1725
    %vm1727 = vweird.f32 %v1676
    %vm1728 = vweird.f32 %v1722
    %vm1729 = vmor %vm1727, %vm1728
    %v1730 = vsel %vm1729, %v1722, %v1726
    %v1731 = vand.u32 2147483647, %v1676
    %vm1732 = vcmp.eq.f32.partialorder %v1731, 8.507059e+37
    %v1733 = vand.u32 %v1676, 2147483648
    %v1734 = vor.u32 1.1754944e-38, %v1733
    %v1735 = vsel %vm1732, %v1734, %v1730
    %v1736 = vmul.f32 1.0, %v1735
    %v1737 = vmul.f32 %v1721, 2.0
    %v1738 = vsub.f32 %v1737, 1.0
    %v1739 = vmul.f32 %v1706, %v1504
    %v1740 = vmul.f32 %v1691, %v1738
    %v1741 = vadd.f32 %v1739, %v1740
    %v1742 = vtanh.pop %v1741
    %v1743 = vmul.f32 %v1736, %v1742
    %p1744 = scmp.gt.s32.totalorder %s104, 5
    %s1745 = scalar_select %p1744, 1, 0
    %s1746 = scvt.s32.f32 %s1745
    %v1747 = vstv %s1746
    %v1748 = vmul.f32 %v1747, %v1743
    %s1749 = ssub.f32 1.0, %s1746
    %v1750 = vstv %s1749
    %v1751 = vmul.f32 %v1750, %v1501
    %v1752 = vadd.f32 %v1748, %v1751
    %v1753 = vmul.f32 %v1747, %v1741
    %v1754 = vmul.f32 %v1750, %v1504
    %v1755 = vadd.f32 %v1753, %v1754
    %1756 = vst [vmem:[#allocation3 + $0x5] sm:$0x1] %v1752
    %v1757 = vld [vmem:[#allocation11] sm:$0xff]
    %v1758 = vld [vmem:[#allocation11 + $0x8] sm:$0xff]
    %v1759 = vld [vmem:[#allocation11 + $0x10] sm:$0xff]
    %v1760 = vld [vmem:[#allocation11 + $0x18] sm:$0xff]
    %v1761 = vld [vmem:[#allocation11 + $0x20] sm:$0xff]
    %v1762 = vld [vmem:[#allocation11 + $0x28] sm:$0xff]
    %v1763 = vld [vmem:[#allocation11 + $0x30] sm:$0xff]
    %v1764 = vld [vmem:[#allocation11 + $0x38] sm:$0xff]
    %v1765 = vld [vmem:[#allocation11 + $0x40] sm:$0xff]
    %v1766 = vld [vmem:[#allocation11 + $0x48] sm:$0xff]
    %v1767 = vld [vmem:[#allocation11 + $0x50] sm:$0xff]
    %v1768 = vld [vmem:[#allocation11 + $0x58] sm:$0xff]
    %v1769 = vld [vmem:[#allocation11 + $0x60] sm:$0xff]
    %v1770 = vld [vmem:[#allocation11 + $0x68] sm:$0xff]
    %v1771 = vld [vmem:[#allocation11 + $0x70] sm:$0xff]
    %v1772 = vld [vmem:[#allocation11 + $0x78] sm:$0xff]
    %v1773 = vld [vmem:[#allocation11 + $0x80] sm:$0xff]
    %v1774 = vld [vmem:[#allocation11 + $0x88] sm:$0xff]
    %v1775 = vld [vmem:[#allocation11 + $0x90] sm:$0xff]
    %v1776 = vld [vmem:[#allocation11 + $0x98] sm:$0xff]
    %v1777 = vld [vmem:[#allocation11 + $0xa0] sm:$0xff]
    %v1778 = vld [vmem:[#allocation11 + $0xa8] sm:$0xff]
    %v1779 = vld [vmem:[#allocation11 + $0xb0] sm:$0xff]
    %v1780 = vld [vmem:[#allocation11 + $0xb8] sm:$0xff]
    %v1781 = vld [vmem:[#allocation11 + $0xc0] sm:$0xff]
    %v1782 = vld [vmem:[#allocation11 + $0xc8] sm:$0xff]
    %v1783 = vld [vmem:[#allocation11 + $0xd0] sm:$0xff]
    %v1784 = vld [vmem:[#allocation11 + $0xd8] sm:$0xff]
    %v1785 = vld [vmem:[#allocation11 + $0xe0] sm:$0xff]
    %v1786 = vld [vmem:[#allocation11 + $0xe8] sm:$0xff]
    %v1787 = vld [vmem:[#allocation11 + $0xf0] sm:$0xff]
    %v1788 = vld [vmem:[#allocation11 + $0xf8] sm:$0xff]
    %v1789 = vld [vmem:[#allocation11 + $0x100] sm:$0xff]
    %v1790 = vld [vmem:[#allocation11 + $0x108] sm:$0xff]
    %v1791 = vld [vmem:[#allocation11 + $0x110] sm:$0xff]
    %v1792 = vld [vmem:[#allocation11 + $0x118] sm:$0xff]
    %v1793 = vld [vmem:[#allocation11 + $0x120] sm:$0xff]
    %v1794 = vld [vmem:[#allocation11 + $0x128] sm:$0xff]
    %v1795 = vld [vmem:[#allocation11 + $0x130] sm:$0xff]
    %v1796 = vld [vmem:[#allocation11 + $0x138] sm:$0xff]
    %v1797 = vld [vmem:[#allocation11 + $0x140] sm:$0xff]
    %v1798 = vld [vmem:[#allocation11 + $0x148] sm:$0xff]
    %v1799 = vld [vmem:[#allocation11 + $0x150] sm:$0xff]
    %v1800 = vld [vmem:[#allocation11 + $0x158] sm:$0xff]
    %v1801 = vld [vmem:[#allocation11 + $0x160] sm:$0xff]
    %v1802 = vld [vmem:[#allocation11 + $0x168] sm:$0xff]
    %v1803 = vld [vmem:[#allocation11 + $0x170] sm:$0xff]
    %v1804 = vld [vmem:[#allocation11 + $0x178] sm:$0xff]
    %v1805 = vld [vmem:[#allocation11 + $0x180] sm:$0xff]
    %v1806 = vld [vmem:[#allocation11 + $0x188] sm:$0xff]
    %v1807 = vld [vmem:[#allocation11 + $0x190] sm:$0xff]
    %v1808 = vld [vmem:[#allocation11 + $0x198] sm:$0xff]
    %v1809 = vld [vmem:[#allocation11 + $0x1a0] sm:$0xff]
    %v1810 = vld [vmem:[#allocation11 + $0x1a8] sm:$0xff]
    %v1811 = vld [vmem:[#allocation11 + $0x1b0] sm:$0xff]
    %v1812 = vld [vmem:[#allocation11 + $0x1b8] sm:$0xff]
    %v1813 = vld [vmem:[#allocation11 + $0x1c0] sm:$0xff]
    %v1814 = vld [vmem:[#allocation11 + $0x1c8] sm:$0xff]
    %v1815 = vld [vmem:[#allocation11 + $0x1d0] sm:$0xff]
    %v1816 = vld [vmem:[#allocation11 + $0x1d8] sm:$0xff]
    %v1817 = vld [vmem:[#allocation11 + $0x1e0] sm:$0xff]
    %v1818 = vld [vmem:[#allocation11 + $0x1e8] sm:$0xff]
    %v1819 = vld [vmem:[#allocation11 + $0x1f0] sm:$0xff]
    %v1820 = vld [vmem:[#allocation11 + $0x1f8] sm:$0xff]
    %s1821 = scalar_lea.vmem [#allocation2], 6
    %v1822 = vld [vmem:[%s1821] ss:$8 sm:$0xf]
    %v1824 = vperm.slane %v1822, 0
    %v1825 = vperm.slane %v1822, 1
    %v1826 = vperm.slane %v1822, 2
    %v1827 = vperm.slane %v1822, 3
    %1832 = vmatpush.msra.mxu0 %v1817
    %1833 = vmatpush.msra.mxu0 %v1813
    %1834 = vmatpush.msra.mxu0 %v1809
    %1835 = vmatpush.msra.mxu0 %v1805
    %1836 = vmatpush.msra.mxu0 %v1801
    %1837 = vmatpush.msra.mxu0 %v1797
    %1838 = vmatpush.msra.mxu0 %v1793
    %1839 = vmatpush.msra.mxu0 %v1789
    %1840 = vmatpush.msra.mxu0 %v1785
    %1841 = vmatpush.msra.mxu0 %v1781
    %1842 = vmatpush.msra.mxu0 %v1777
    %1843 = vmatpush.msra.mxu0 %v1773
    %1844 = vmatpush.msra.mxu0 %v1769
    %1845 = vmatpush.msra.mxu0 %v1765
    %1846 = vmatpush.msra.mxu0 %v1761
    %1847 = vmatpush.msra.mxu0 %v1757
    %1848 = vmatmul.f32.gmra.mxu0 %v1752
    %v1849 = vpop.f32.mrf.mxu0
    %v1850 = vadd.f32 %v1824, %v1849
    %1851 = vdwg.mxu0
    %1852 = vmatpush.msra.mxu0 %v1818
    %1853 = vmatpush.msra.mxu0 %v1814
    %1854 = vmatpush.msra.mxu0 %v1810
    %1855 = vmatpush.msra.mxu0 %v1806
    %1856 = vmatpush.msra.mxu0 %v1802
    %1857 = vmatpush.msra.mxu0 %v1798
    %1858 = vmatpush.msra.mxu0 %v1794
    %1859 = vmatpush.msra.mxu0 %v1790
    %1860 = vmatpush.msra.mxu0 %v1786
    %1861 = vmatpush.msra.mxu0 %v1782
    %1862 = vmatpush.msra.mxu0 %v1778
    %1863 = vmatpush.msra.mxu0 %v1774
    %1864 = vmatpush.msra.mxu0 %v1770
    %1865 = vmatpush.msra.mxu0 %v1766
    %1866 = vmatpush.msra.mxu0 %v1762
    %1867 = vmatpush.msra.mxu0 %v1758
    %1868 = vmatmul.f32.gmra.mxu0 %v1752
    %v1869 = vpop.f32.mrf.mxu0
    %v1870 = vadd.f32 %v1825, %v1869
    %1871 = vdwg.mxu0
    %1872 = vmatpush.msra.mxu0 %v1819
    %1873 = vmatpush.msra.mxu0 %v1815
    %1874 = vmatpush.msra.mxu0 %v1811
    %1875 = vmatpush.msra.mxu0 %v1807
    %1876 = vmatpush.msra.mxu0 %v1803
    %1877 = vmatpush.msra.mxu0 %v1799
    %1878 = vmatpush.msra.mxu0 %v1795
    %1879 = vmatpush.msra.mxu0 %v1791
    %1880 = vmatpush.msra.mxu0 %v1787
    %1881 = vmatpush.msra.mxu0 %v1783
    %1882 = vmatpush.msra.mxu0 %v1779
    %1883 = vmatpush.msra.mxu0 %v1775
    %1884 = vmatpush.msra.mxu0 %v1771
    %1885 = vmatpush.msra.mxu0 %v1767
    %1886 = vmatpush.msra.mxu0 %v1763
    %1887 = vmatpush.msra.mxu0 %v1759
    %1888 = vmatmul.f32.gmra.mxu0 %v1752
    %v1889 = vpop.f32.mrf.mxu0
    %v1890 = vadd.f32 %v1826, %v1889
    %1891 = vdwg.mxu0
    %1892 = vmatpush.msra.mxu0 %v1820
    %1893 = vmatpush.msra.mxu0 %v1816
    %1894 = vmatpush.msra.mxu0 %v1812
    %1895 = vmatpush.msra.mxu0 %v1808
    %1896 = vmatpush.msra.mxu0 %v1804
    %1897 = vmatpush.msra.mxu0 %v1800
    %1898 = vmatpush.msra.mxu0 %v1796
    %1899 = vmatpush.msra.mxu0 %v1792
    %1900 = vmatpush.msra.mxu0 %v1788
    %1901 = vmatpush.msra.mxu0 %v1784
    %1902 = vmatpush.msra.mxu0 %v1780
    %1903 = vmatpush.msra.mxu0 %v1776
    %1904 = vmatpush.msra.mxu0 %v1772
    %1905 = vmatpush.msra.mxu0 %v1768
    %1906 = vmatpush.msra.mxu0 %v1764
    %1907 = vmatpush.msra.mxu0 %v1760
    %1908 = vmatmul.f32.gmra.mxu0 %v1752
    %v1909 = vpop.f32.mrf.mxu0
    %v1910 = vadd.f32 %v1827, %v1909
    %1911 = vdwg.mxu0
    %v1912 = vxor.u32 %v1850, 2147483648
    %v1913 = vxor.u32 %v1870, 2147483648
    %v1914 = vxor.u32 %v1890, 2147483648
    %v1915 = vxor.u32 %v1910, 2147483648
    %v1916 = vmul.f32 %v1912, 1.442695
    %v1917 = vpow.pop %v1916
    %v1918 = vmul.f32 %v1913, 1.442695
    %v1919 = vpow.pop %v1918
    %v1920 = vmul.f32 %v1914, 1.442695
    %v1921 = vpow.pop %v1920
    %v1922 = vmul.f32 %v1915, 1.442695
    %v1923 = vpow.pop %v1922
    %v1924 = vadd.f32 %v1917, 1.0
    %v1925 = vadd.f32 %v1919, 1.0
    %v1926 = vadd.f32 %v1921, 1.0
    %v1927 = vadd.f32 %v1923, 1.0
    %v1928 = vrcp.pop %v1924
    %v1929 = vmul.f32 %v1924, %v1928
    %v1930 = vsub.f32 1.0, %v1929
    %v1931 = vmul.f32 %v1928, %v1930
    %v1932 = vadd.f32 %v1928, %v1931
    %vm1933 = vweird.f32 %v1924
    %vm1934 = vweird.f32 %v1928
    %vm1935 = vmor %vm1933, %vm1934
    %v1936 = vsel %vm1935, %v1928, %v1932
    %v1937 = vand.u32 2147483647, %v1924
    %vm1938 = vcmp.eq.f32.partialorder %v1937, 8.507059e+37
    %v1939 = vand.u32 %v1924, 2147483648
    %v1940 = vor.u32 1.1754944e-38, %v1939
    %v1941 = vsel %vm1938, %v1940, %v1936
    %v1942 = vmul.f32 1.0, %v1941
    %v1943 = vrcp.pop %v1925
    %v1944 = vmul.f32 %v1925, %v1943
    %v1945 = vsub.f32 1.0, %v1944
    %v1946 = vmul.f32 %v1943, %v1945
    %v1947 = vadd.f32 %v1943, %v1946
    %vm1948 = vweird.f32 %v1925
    %vm1949 = vweird.f32 %v1943
    %vm1950 = vmor %vm1948, %vm1949
    %v1951 = vsel %vm1950, %v1943, %v1947
    %v1952 = vand.u32 2147483647, %v1925
    %vm1953 = vcmp.eq.f32.partialorder %v1952, 8.507059e+37
    %v1954 = vand.u32 %v1925, 2147483648
    %v1955 = vor.u32 1.1754944e-38, %v1954
    %v1956 = vsel %vm1953, %v1955, %v1951
    %v1957 = vmul.f32 1.0, %v1956
    %v1958 = vrcp.pop %v1926
    %v1959 = vmul.f32 %v1926, %v1958
    %v1960 = vsub.f32 1.0, %v1959
    %v1961 = vmul.f32 %v1958, %v1960
    %v1962 = vadd.f32 %v1958, %v1961
    %vm1963 = vweird.f32 %v1926
    %vm1964 = vweird.f32 %v1958
    %vm1965 = vmor %vm1963, %vm1964
    %v1966 = vsel %vm1965, %v1958, %v1962
    %v1967 = vand.u32 2147483647, %v1926
    %vm1968 = vcmp.eq.f32.partialorder %v1967, 8.507059e+37
    %v1969 = vand.u32 %v1926, 2147483648
    %v1970 = vor.u32 1.1754944e-38, %v1969
    %v1971 = vsel %vm1968, %v1970, %v1966
    %v1972 = vmul.f32 1.0, %v1971
    %v1973 = vrcp.pop %v1927
    %v1974 = vmul.f32 %v1927, %v1973
    %v1975 = vsub.f32 1.0, %v1974
    %v1976 = vmul.f32 %v1973, %v1975
    %v1977 = vadd.f32 %v1973, %v1976
    %vm1978 = vweird.f32 %v1927
    %vm1979 = vweird.f32 %v1973
    %vm1980 = vmor %vm1978, %vm1979
    %v1981 = vsel %vm1980, %v1973, %v1977
    %v1982 = vand.u32 2147483647, %v1927
    %vm1983 = vcmp.eq.f32.partialorder %v1982, 8.507059e+37
    %v1984 = vand.u32 %v1927, 2147483648
    %v1985 = vor.u32 1.1754944e-38, %v1984
    %v1986 = vsel %vm1983, %v1985, %v1981
    %v1987 = vmul.f32 1.0, %v1986
    %v1988 = vmul.f32 %v1972, 2.0
    %v1989 = vsub.f32 %v1988, 1.0
    %v1990 = vmul.f32 %v1957, %v1755
    %v1991 = vmul.f32 %v1942, %v1989
    %v1992 = vadd.f32 %v1990, %v1991
    %v1993 = vtanh.pop %v1992
    %v1994 = vmul.f32 %v1987, %v1993
    %p1995 = scmp.gt.s32.totalorder %s104, 6
    %s1996 = scalar_select %p1995, 1, 0
    %s1997 = scvt.s32.f32 %s1996
    %v1998 = vstv %s1997
    %v1999 = vmul.f32 %v1998, %v1994
    %s2000 = ssub.f32 1.0, %s1997
    %v2001 = vstv %s2000
    %v2002 = vmul.f32 %v2001, %v1752
    %v2003 = vadd.f32 %v1999, %v2002
    %v2004 = vmul.f32 %v1998, %v1992
    %v2005 = vmul.f32 %v2001, %v1755
    %v2006 = vadd.f32 %v2004, %v2005
    %2007 = vst [vmem:[#allocation3 + $0x6] sm:$0x1] %v2003
    %v2008 = vld [vmem:[#allocation11] sm:$0xff]
    %v2009 = vld [vmem:[#allocation11 + $0x8] sm:$0xff]
    %v2010 = vld [vmem:[#allocation11 + $0x10] sm:$0xff]
    %v2011 = vld [vmem:[#allocation11 + $0x18] sm:$0xff]
    %v2012 = vld [vmem:[#allocation11 + $0x20] sm:$0xff]
    %v2013 = vld [vmem:[#allocation11 + $0x28] sm:$0xff]
    %v2014 = vld [vmem:[#allocation11 + $0x30] sm:$0xff]
    %v2015 = vld [vmem:[#allocation11 + $0x38] sm:$0xff]
    %v2016 = vld [vmem:[#allocation11 + $0x40] sm:$0xff]
    %v2017 = vld [vmem:[#allocation11 + $0x48] sm:$0xff]
    %v2018 = vld [vmem:[#allocation11 + $0x50] sm:$0xff]
    %v2019 = vld [vmem:[#allocation11 + $0x58] sm:$0xff]
    %v2020 = vld [vmem:[#allocation11 + $0x60] sm:$0xff]
    %v2021 = vld [vmem:[#allocation11 + $0x68] sm:$0xff]
    %v2022 = vld [vmem:[#allocation11 + $0x70] sm:$0xff]
    %v2023 = vld [vmem:[#allocation11 + $0x78] sm:$0xff]
    %v2024 = vld [vmem:[#allocation11 + $0x80] sm:$0xff]
    %v2025 = vld [vmem:[#allocation11 + $0x88] sm:$0xff]
    %v2026 = vld [vmem:[#allocation11 + $0x90] sm:$0xff]
    %v2027 = vld [vmem:[#allocation11 + $0x98] sm:$0xff]
    %v2028 = vld [vmem:[#allocation11 + $0xa0] sm:$0xff]
    %v2029 = vld [vmem:[#allocation11 + $0xa8] sm:$0xff]
    %v2030 = vld [vmem:[#allocation11 + $0xb0] sm:$0xff]
    %v2031 = vld [vmem:[#allocation11 + $0xb8] sm:$0xff]
    %v2032 = vld [vmem:[#allocation11 + $0xc0] sm:$0xff]
    %v2033 = vld [vmem:[#allocation11 + $0xc8] sm:$0xff]
    %v2034 = vld [vmem:[#allocation11 + $0xd0] sm:$0xff]
    %v2035 = vld [vmem:[#allocation11 + $0xd8] sm:$0xff]
    %v2036 = vld [vmem:[#allocation11 + $0xe0] sm:$0xff]
    %v2037 = vld [vmem:[#allocation11 + $0xe8] sm:$0xff]
    %v2038 = vld [vmem:[#allocation11 + $0xf0] sm:$0xff]
    %v2039 = vld [vmem:[#allocation11 + $0xf8] sm:$0xff]
    %v2040 = vld [vmem:[#allocation11 + $0x100] sm:$0xff]
    %v2041 = vld [vmem:[#allocation11 + $0x108] sm:$0xff]
    %v2042 = vld [vmem:[#allocation11 + $0x110] sm:$0xff]
    %v2043 = vld [vmem:[#allocation11 + $0x118] sm:$0xff]
    %v2044 = vld [vmem:[#allocation11 + $0x120] sm:$0xff]
    %v2045 = vld [vmem:[#allocation11 + $0x128] sm:$0xff]
    %v2046 = vld [vmem:[#allocation11 + $0x130] sm:$0xff]
    %v2047 = vld [vmem:[#allocation11 + $0x138] sm:$0xff]
    %v2048 = vld [vmem:[#allocation11 + $0x140] sm:$0xff]
    %v2049 = vld [vmem:[#allocation11 + $0x148] sm:$0xff]
    %v2050 = vld [vmem:[#allocation11 + $0x150] sm:$0xff]
    %v2051 = vld [vmem:[#allocation11 + $0x158] sm:$0xff]
    %v2052 = vld [vmem:[#allocation11 + $0x160] sm:$0xff]
    %v2053 = vld [vmem:[#allocation11 + $0x168] sm:$0xff]
    %v2054 = vld [vmem:[#allocation11 + $0x170] sm:$0xff]
    %v2055 = vld [vmem:[#allocation11 + $0x178] sm:$0xff]
    %v2056 = vld [vmem:[#allocation11 + $0x180] sm:$0xff]
    %v2057 = vld [vmem:[#allocation11 + $0x188] sm:$0xff]
    %v2058 = vld [vmem:[#allocation11 + $0x190] sm:$0xff]
    %v2059 = vld [vmem:[#allocation11 + $0x198] sm:$0xff]
    %v2060 = vld [vmem:[#allocation11 + $0x1a0] sm:$0xff]
    %v2061 = vld [vmem:[#allocation11 + $0x1a8] sm:$0xff]
    %v2062 = vld [vmem:[#allocation11 + $0x1b0] sm:$0xff]
    %v2063 = vld [vmem:[#allocation11 + $0x1b8] sm:$0xff]
    %v2064 = vld [vmem:[#allocation11 + $0x1c0] sm:$0xff]
    %v2065 = vld [vmem:[#allocation11 + $0x1c8] sm:$0xff]
    %v2066 = vld [vmem:[#allocation11 + $0x1d0] sm:$0xff]
    %v2067 = vld [vmem:[#allocation11 + $0x1d8] sm:$0xff]
    %v2068 = vld [vmem:[#allocation11 + $0x1e0] sm:$0xff]
    %v2069 = vld [vmem:[#allocation11 + $0x1e8] sm:$0xff]
    %v2070 = vld [vmem:[#allocation11 + $0x1f0] sm:$0xff]
    %v2071 = vld [vmem:[#allocation11 + $0x1f8] sm:$0xff]
    %s2072 = scalar_lea.vmem [#allocation2], 7
    %v2073 = vld [vmem:[%s2072] ss:$8 sm:$0xf]
    %v2075 = vperm.slane %v2073, 0
    %v2076 = vperm.slane %v2073, 1
    %v2077 = vperm.slane %v2073, 2
    %v2078 = vperm.slane %v2073, 3
    %2083 = vmatpush.msra.mxu0 %v2068
    %2084 = vmatpush.msra.mxu0 %v2064
    %2085 = vmatpush.msra.mxu0 %v2060
    %2086 = vmatpush.msra.mxu0 %v2056
    %2087 = vmatpush.msra.mxu0 %v2052
    %2088 = vmatpush.msra.mxu0 %v2048
    %2089 = vmatpush.msra.mxu0 %v2044
    %2090 = vmatpush.msra.mxu0 %v2040
    %2091 = vmatpush.msra.mxu0 %v2036
    %2092 = vmatpush.msra.mxu0 %v2032
    %2093 = vmatpush.msra.mxu0 %v2028
    %2094 = vmatpush.msra.mxu0 %v2024
    %2095 = vmatpush.msra.mxu0 %v2020
    %2096 = vmatpush.msra.mxu0 %v2016
    %2097 = vmatpush.msra.mxu0 %v2012
    %2098 = vmatpush.msra.mxu0 %v2008
    %2099 = vmatmul.f32.gmra.mxu0 %v2003
    %v2100 = vpop.f32.mrf.mxu0
    %v2101 = vadd.f32 %v2075, %v2100
    %2102 = vdwg.mxu0
    %2103 = vmatpush.msra.mxu0 %v2069
    %2104 = vmatpush.msra.mxu0 %v2065
    %2105 = vmatpush.msra.mxu0 %v2061
    %2106 = vmatpush.msra.mxu0 %v2057
    %2107 = vmatpush.msra.mxu0 %v2053
    %2108 = vmatpush.msra.mxu0 %v2049
    %2109 = vmatpush.msra.mxu0 %v2045
    %2110 = vmatpush.msra.mxu0 %v2041
    %2111 = vmatpush.msra.mxu0 %v2037
    %2112 = vmatpush.msra.mxu0 %v2033
    %2113 = vmatpush.msra.mxu0 %v2029
    %2114 = vmatpush.msra.mxu0 %v2025
    %2115 = vmatpush.msra.mxu0 %v2021
    %2116 = vmatpush.msra.mxu0 %v2017
    %2117 = vmatpush.msra.mxu0 %v2013
    %2118 = vmatpush.msra.mxu0 %v2009
    %2119 = vmatmul.f32.gmra.mxu0 %v2003
    %v2120 = vpop.f32.mrf.mxu0
    %v2121 = vadd.f32 %v2076, %v2120
    %2122 = vdwg.mxu0
    %2123 = vmatpush.msra.mxu0 %v2070
    %2124 = vmatpush.msra.mxu0 %v2066
    %2125 = vmatpush.msra.mxu0 %v2062
    %2126 = vmatpush.msra.mxu0 %v2058
    %2127 = vmatpush.msra.mxu0 %v2054
    %2128 = vmatpush.msra.mxu0 %v2050
    %2129 = vmatpush.msra.mxu0 %v2046
    %2130 = vmatpush.msra.mxu0 %v2042
    %2131 = vmatpush.msra.mxu0 %v2038
    %2132 = vmatpush.msra.mxu0 %v2034
    %2133 = vmatpush.msra.mxu0 %v2030
    %2134 = vmatpush.msra.mxu0 %v2026
    %2135 = vmatpush.msra.mxu0 %v2022
    %2136 = vmatpush.msra.mxu0 %v2018
    %2137 = vmatpush.msra.mxu0 %v2014
    %2138 = vmatpush.msra.mxu0 %v2010
    %2139 = vmatmul.f32.gmra.mxu0 %v2003
    %v2140 = vpop.f32.mrf.mxu0
    %v2141 = vadd.f32 %v2077, %v2140
    %2142 = vdwg.mxu0
    %2143 = vmatpush.msra.mxu0 %v2071
    %2144 = vmatpush.msra.mxu0 %v2067
    %2145 = vmatpush.msra.mxu0 %v2063
    %2146 = vmatpush.msra.mxu0 %v2059
    %2147 = vmatpush.msra.mxu0 %v2055
    %2148 = vmatpush.msra.mxu0 %v2051
    %2149 = vmatpush.msra.mxu0 %v2047
    %2150 = vmatpush.msra.mxu0 %v2043
    %2151 = vmatpush.msra.mxu0 %v2039
    %2152 = vmatpush.msra.mxu0 %v2035
    %2153 = vmatpush.msra.mxu0 %v2031
    %2154 = vmatpush.msra.mxu0 %v2027
    %2155 = vmatpush.msra.mxu0 %v2023
    %2156 = vmatpush.msra.mxu0 %v2019
    %2157 = vmatpush.msra.mxu0 %v2015
    %2158 = vmatpush.msra.mxu0 %v2011
    %2159 = vmatmul.f32.gmra.mxu0 %v2003
    %v2160 = vpop.f32.mrf.mxu0
    %v2161 = vadd.f32 %v2078, %v2160
    %2162 = vdwg.mxu0
    %v2163 = vxor.u32 %v2101, 2147483648
    %v2164 = vxor.u32 %v2121, 2147483648
    %v2165 = vxor.u32 %v2141, 2147483648
    %v2166 = vxor.u32 %v2161, 2147483648
    %v2167 = vmul.f32 %v2163, 1.442695
    %v2168 = vpow.pop %v2167
    %v2169 = vmul.f32 %v2164, 1.442695
    %v2170 = vpow.pop %v2169
    %v2171 = vmul.f32 %v2165, 1.442695
    %v2172 = vpow.pop %v2171
    %v2173 = vmul.f32 %v2166, 1.442695
    %v2174 = vpow.pop %v2173
    %v2175 = vadd.f32 %v2168, 1.0
    %v2176 = vadd.f32 %v2170, 1.0
    %v2177 = vadd.f32 %v2172, 1.0
    %v2178 = vadd.f32 %v2174, 1.0
    %v2179 = vrcp.pop %v2175
    %v2180 = vmul.f32 %v2175, %v2179
    %v2181 = vsub.f32 1.0, %v2180
    %v2182 = vmul.f32 %v2179, %v2181
    %v2183 = vadd.f32 %v2179, %v2182
    %vm2184 = vweird.f32 %v2175
    %vm2185 = vweird.f32 %v2179
    %vm2186 = vmor %vm2184, %vm2185
    %v2187 = vsel %vm2186, %v2179, %v2183
    %v2188 = vand.u32 2147483647, %v2175
    %vm2189 = vcmp.eq.f32.partialorder %v2188, 8.507059e+37
    %v2190 = vand.u32 %v2175, 2147483648
    %v2191 = vor.u32 1.1754944e-38, %v2190
    %v2192 = vsel %vm2189, %v2191, %v2187
    %v2193 = vmul.f32 1.0, %v2192
    %v2194 = vrcp.pop %v2176
    %v2195 = vmul.f32 %v2176, %v2194
    %v2196 = vsub.f32 1.0, %v2195
    %v2197 = vmul.f32 %v2194, %v2196
    %v2198 = vadd.f32 %v2194, %v2197
    %vm2199 = vweird.f32 %v2176
    %vm2200 = vweird.f32 %v2194
    %vm2201 = vmor %vm2199, %vm2200
    %v2202 = vsel %vm2201, %v2194, %v2198
    %v2203 = vand.u32 2147483647, %v2176
    %vm2204 = vcmp.eq.f32.partialorder %v2203, 8.507059e+37
    %v2205 = vand.u32 %v2176, 2147483648
    %v2206 = vor.u32 1.1754944e-38, %v2205
    %v2207 = vsel %vm2204, %v2206, %v2202
    %v2208 = vmul.f32 1.0, %v2207
    %v2209 = vrcp.pop %v2177
    %v2210 = vmul.f32 %v2177, %v2209
    %v2211 = vsub.f32 1.0, %v2210
    %v2212 = vmul.f32 %v2209, %v2211
    %v2213 = vadd.f32 %v2209, %v2212
    %vm2214 = vweird.f32 %v2177
    %vm2215 = vweird.f32 %v2209
    %vm2216 = vmor %vm2214, %vm2215
    %v2217 = vsel %vm2216, %v2209, %v2213
    %v2218 = vand.u32 2147483647, %v2177
    %vm2219 = vcmp.eq.f32.partialorder %v2218, 8.507059e+37
    %v2220 = vand.u32 %v2177, 2147483648
    %v2221 = vor.u32 1.1754944e-38, %v2220
    %v2222 = vsel %vm2219, %v2221, %v2217
    %v2223 = vmul.f32 1.0, %v2222
    %v2224 = vrcp.pop %v2178
    %v2225 = vmul.f32 %v2178, %v2224
    %v2226 = vsub.f32 1.0, %v2225
    %v2227 = vmul.f32 %v2224, %v2226
    %v2228 = vadd.f32 %v2224, %v2227
    %vm2229 = vweird.f32 %v2178
    %vm2230 = vweird.f32 %v2224
    %vm2231 = vmor %vm2229, %vm2230
    %v2232 = vsel %vm2231, %v2224, %v2228
    %v2233 = vand.u32 2147483647, %v2178
    %vm2234 = vcmp.eq.f32.partialorder %v2233, 8.507059e+37
    %v2235 = vand.u32 %v2178, 2147483648
    %v2236 = vor.u32 1.1754944e-38, %v2235
    %v2237 = vsel %vm2234, %v2236, %v2232
    %v2238 = vmul.f32 1.0, %v2237
    %v2239 = vmul.f32 %v2223, 2.0
    %v2240 = vsub.f32 %v2239, 1.0
    %v2241 = vmul.f32 %v2208, %v2006
    %v2242 = vmul.f32 %v2193, %v2240
    %v2243 = vadd.f32 %v2241, %v2242
    %v2244 = vtanh.pop %v2243
    %v2245 = vmul.f32 %v2238, %v2244
    %p2246 = scmp.gt.s32.totalorder %s104, 7
    %s2247 = scalar_select %p2246, 1, 0
    %s2248 = scvt.s32.f32 %s2247
    %v2249 = vstv %s2248
    %v2250 = vmul.f32 %v2249, %v2245
    %s2251 = ssub.f32 1.0, %s2248
    %v2252 = vstv %s2251
    %v2253 = vmul.f32 %v2252, %v2003
    %v2254 = vadd.f32 %v2250, %v2253
    %v2255 = vmul.f32 %v2249, %v2243
    %v2256 = vmul.f32 %v2252, %v2006
    %v2257 = vadd.f32 %v2255, %v2256
    %2258 = vst [vmem:[#allocation3 + $0x7] sm:$0x1] %v2254
    %2259 = vst [vmem:[#allocation16] sm:$0x1] %v2254
    %2260 = vst [vmem:[#allocation18] sm:$0x1] %v2257
    %v2261 = vld [vmem:[#allocation3] sm:$0xff]
    %v2262 = vld [vmem:[#allocation14] sm:$0xff]
    %v2263 = vld [vmem:[#allocation14 + $0x8] sm:$0xff]
    %v2264 = vld [vmem:[#allocation14 + $0x10] sm:$0xff]
    %v2265 = vld [vmem:[#allocation14 + $0x18] sm:$0xff]
    %v2266 = vld [vmem:[#allocation14 + $0x20] sm:$0xff]
    %v2267 = vld [vmem:[#allocation14 + $0x28] sm:$0xff]
    %v2268 = vld [vmem:[#allocation14 + $0x30] sm:$0xff]
    %v2269 = vld [vmem:[#allocation14 + $0x38] sm:$0xff]
    %v2270 = vld [vmem:[#allocation14 + $0x40] sm:$0xff]
    %v2271 = vld [vmem:[#allocation14 + $0x48] sm:$0xff]
    %v2272 = vld [vmem:[#allocation14 + $0x50] sm:$0xff]
    %v2273 = vld [vmem:[#allocation14 + $0x58] sm:$0xff]
    %v2274 = vld [vmem:[#allocation14 + $0x60] sm:$0xff]
    %v2275 = vld [vmem:[#allocation14 + $0x68] sm:$0xff]
    %v2276 = vld [vmem:[#allocation14 + $0x70] sm:$0xff]
    %v2277 = vld [vmem:[#allocation14 + $0x78] sm:$0xff]
    %v2279 = vperm.slane %v106, 0
    %2281 = vmatpush.msra.mxu0 %v2277
    %2282 = vmatpush.msra.mxu0 %v2276
    %2283 = vmatpush.msra.mxu0 %v2275
    %2284 = vmatpush.msra.mxu0 %v2274
    %2285 = vmatpush.msra.mxu0 %v2273
    %2286 = vmatpush.msra.mxu0 %v2272
    %2287 = vmatpush.msra.mxu0 %v2271
    %2288 = vmatpush.msra.mxu0 %v2270
    %2289 = vmatpush.msra.mxu0 %v2269
    %2290 = vmatpush.msra.mxu0 %v2268
    %2291 = vmatpush.msra.mxu0 %v2267
    %2292 = vmatpush.msra.mxu0 %v2266
    %2293 = vmatpush.msra.mxu0 %v2265
    %2294 = vmatpush.msra.mxu0 %v2264
    %2295 = vmatpush.msra.mxu0 %v2263
    %2296 = vmatpush.msra.mxu0 %v2262
    %2297 = vmatmul.f32.gmra.mxu0 %v2261
    %v2298 = vpop.f32.mrf.mxu0
    %v2299 = vadd.f32 %v2279, %v2298
    %2300 = vdwg.mxu0
    %2301 = vmax.xlane.f32.xlu0 %v2299
    %v2302 = vpop.xlane.xlu0 %2301
    %v2303 = vsub.f32 %v2299, %v2302
    %v2304 = vmul.f32 %v2303, 1.442695
    %v2305 = vpow.pop %v2304
    %2306 = vadd.xlane.f32.xlu0 %v2305
    %v2307 = vpop.xlane.xlu0 %2306
    %v2308 = vlog2.pop %v2307
    %v2309 = vmul.f32 %v2308, 0.6931472
    %v2310 = vadd.f32 %v2302, %v2309
    %v2311 = vsub.f32 %v2299, %v2310
    %2312 = vst [vmem:[#allocation15] sm:$0xff] %v2311
    // Predicated region
    $region46: #{tpu_custom_call.1} parent=1 // pred_check
      _
    $region47: #{tpu_custom_call.1} parent=1 // pred_check_branch
      %2314 = sbr.rel (0) target = $region49
    $region48: #{tpu_custom_call.1} parent=1 // pred_region
      %2316 = vsyncadd [#allocation8], 0
      %s2318 = sshll.u32 [#allocation15], 4
      %s2319 = int_to_ptr.vmem [resolvable:$true] %s2318
      %s2320 = sshll.u32 %s7, 4
      %s2321 = int_to_ptr.hbm [resolvable:$true] %s2320
      %2323 = dma.vmem_to_hbm [thread:$0]  %s2319, 128, %s2321, [#allocation8]
    $region49: #{tpu_custom_call.1} parent=1 // pred_fallthru
      _
    // Predicated region
    $region50: #{tpu_custom_call.1} parent=1 // pred_check
      _
    $region51: #{tpu_custom_call.1} parent=1 // pred_check_branch
      %2325 = sbr.rel (0) target = $region53
    $region52: #{tpu_custom_call.1} parent=1 // pred_region
      %2327 = vsyncadd [#allocation17], 0
      %s2329 = sshll.u32 [#allocation16], 4
      %s2330 = int_to_ptr.vmem [resolvable:$true] %s2329
      %s2331 = sshll.u32 %s8, 4
      %s2332 = int_to_ptr.hbm [resolvable:$true] %s2331
      %2334 = dma.vmem_to_hbm [thread:$0]  %s2330, 16, %s2332, [#allocation17]
    $region53: #{tpu_custom_call.1} parent=1 // pred_fallthru
      _
    // Predicated region
    $region54: #{tpu_custom_call.1} parent=1 // pred_check
      _
    $region55: #{tpu_custom_call.1} parent=1 // pred_check_branch
      %2336 = sbr.rel (0) target = $region57
    $region56: #{tpu_custom_call.1} parent=1 // pred_region
      %2338 = vsyncadd [#allocation17], 0
      %s2340 = sshll.u32 [#allocation18], 4
      %s2341 = int_to_ptr.vmem [resolvable:$true] %s2340
      %s2342 = sshll.u32 %s9, 4
      %s2343 = int_to_ptr.hbm [resolvable:$true] %s2342
      %2345 = dma.vmem_to_hbm [thread:$0]  %s2341, 16, %s2343, [#allocation17]
    $region57: #{tpu_custom_call.1} parent=1 // pred_fallthru
      _
    // Predicated region
    $region58: #{tpu_custom_call.1} parent=1 // pred_check
      _
    $region59: #{tpu_custom_call.1} parent=1 // pred_check_branch
      %2347 = sbr.rel (0) target = $region61
    $region60: #{tpu_custom_call.1} parent=1 // pred_region
      %2349 = dma.done [#allocation8], 128
    $region61: #{tpu_custom_call.1} parent=1 // pred_fallthru
      _
    // Predicated region
    $region62: #{tpu_custom_call.1} parent=1 // pred_check
      _
    $region63: #{tpu_custom_call.1} parent=1 // pred_check_branch
      %2351 = sbr.rel (0) target = $region65
    $region64: #{tpu_custom_call.1} parent=1 // pred_region
      %2353 = dma.done [#allocation17], 16
    $region65: #{tpu_custom_call.1} parent=1 // pred_fallthru
      _
    // Predicated region
    $region66: #{tpu_custom_call.1} parent=1 // pred_check
      _
    $region67: #{tpu_custom_call.1} parent=1 // pred_check_branch
      %2355 = sbr.rel (0) target = $region69
    $region68: #{tpu_custom_call.1} parent=1 // pred_region
      %2357 = dma.done [#allocation17], 16
    $region69: #{tpu_custom_call.1} parent=1 // pred_fallthru
      _
    %2358 = vsyncpa [#allocation7], 1
    %2359 = vsyncpa [#allocation10], 1
    %2360 = vsyncpa [#allocation13], 1
    %2361 = vsyncpa [#allocation8], 1
    %2362 = vsyncpa [#allocation17], 1

</llo_original>
